<compile_context>
chip_gen: v7x
topology: tpu7x:2x2x1
jax: 0.10.0
libtpu: 0.0.40
codegen_flags: <defaults>
</compile_context>

<pallas_src>
import math
import numpy as np
import jax
import jax.numpy as jnp
from jax.experimental import pallas as pl
from jax.experimental.pallas import tpu as pltpu

MLP_ALIGNMENT = 16


# -----------------------------------------------------------------------------
# HashEmbedderNative equivalent (plain JAX).
# TODO(synk): the per-point hash-table gather needs data-dependent indices into a
# large HBM table; no clean BlockSpec/gather equivalent on TPU Pallas, so the
# embedder stays in plain JAX (XLA gather) and only the fused MLP is a Pallas kernel.
# -----------------------------------------------------------------------------
def grid_scale(level, per_level_scale, base_resolution):
    return (np.power(np.float32(2.0),
                     np.float32(level) * np.log2(np.float32(per_level_scale)))
            * np.float32(base_resolution) - np.float32(1.0))


def grid_resolution(scale):
    return int(np.int32(np.ceil(np.float32(scale))) + 1)


def make_hashgrid(key, n_levels, n_features_per_level, log2_hashmap_size,
                  base_resolution, per_level_scale):
    offsets, lengths, scales, resolutions = [], [], [], []
    offset = 0
    for lvl in range(n_levels):
        s = grid_scale(lvl, per_level_scale, base_resolution)
        res = grid_resolution(s)
        length = res ** 3
        length = (length + 8 - 1) // 8 * 8
        length = min(length, 1 << log2_hashmap_size)
        offsets.append(offset)
        lengths.append(length)
        scales.append(float(s))
        resolutions.append(res)
        offset += length
    table = jax.random.uniform(key, (offset, n_features_per_level), jnp.float32,
                               minval=-1e-4, maxval=1e-4)   # tcnn-style init U(-1e-4, 1e-4)
    return table, offsets, lengths, scales, resolutions


_PRIMES = (1, 2654435761, 805459861)


def _coherent_prime_hash(coords_u32):
    out = coords_u32[..., 0] * jnp.uint32(_PRIMES[0])
    out = out ^ (coords_u32[..., 1] * jnp.uint32(_PRIMES[1]))
    out = out ^ (coords_u32[..., 2] * jnp.uint32(_PRIMES[2]))
    return out


def _level_indices(corners_i32, hashmap_size, resolution):
    """Mirror of HashEmbedderNative.hash_it (dense index with early break, else hash)."""
    corners_u32 = corners_i32.astype(jnp.uint32)
    stride = 1
    out = jnp.zeros(corners_u32.shape[:-1], jnp.uint32)
    for d in range(3):
        out = out + corners_u32[..., d] * jnp.uint32(stride)
        stride *= resolution
        if stride > hashmap_size:
            break
    if hashmap_size < stride:
        out = _coherent_prime_hash(corners_u32)
    return (out % jnp.uint32(hashmap_size)).astype(jnp.int32)


# Corner order matches the torch module: dim 0 is the most-significant bit.
_CORNER_BITS = np.array([[(k >> 2) & 1, (k >> 1) & 1, k & 1] for k in range(8)],
                        dtype=np.int32)


def hash_encode(coords, table, level_offsets, level_lengths, scales, resolutions,
                n_features_per_level):
    """coords: [N, 3] float32 in [0, 1] -> [N, n_levels * F] float32."""
    bits_i = jnp.asarray(_CORNER_BITS)                      # (8, 3) int32
    bits_f = jnp.asarray(_CORNER_BITS, jnp.float32)         # (8, 3)
    feats = []
    for lvl in range(len(resolutions)):
        pos = coords.astype(jnp.float32) * np.float32(scales[lvl]) + 0.5
        idx0 = jnp.floor(pos).astype(jnp.int32)
        frac = pos - idx0.astype(jnp.float32)                # (N, 3)
        corners = idx0[:, None, :] + bits_i[None, :, :]      # (N, 8, 3)
        # trilinear weights, same ordering as trilinear_interp_weights
        w = jnp.prod(bits_f[None] * frac[:, None, :]
                     + (1.0 - bits_f[None]) * (1.0 - frac[:, None, :]),
                     axis=-1)                                 # (N, 8)
        hidx = _level_indices(corners, level_lengths[lvl], resolutions[lvl])  # (N, 8)
        emb = table[level_offsets[lvl] + hidx]                # (N, 8, F) gather
        feats.append(jnp.sum(w[..., None] * emb, axis=1))     # (N, F)
    return jnp.concatenate(feats, axis=-1)


# -----------------------------------------------------------------------------
# FullyFusedMLP: enc(64) -> 64 -> 64 -> 64 -> 16 (MLP_ALIGNMENT-padded), no bias,
# ReLU hidden, linear output. Whole chain fused per row tile; bf16 operands with
# f32 MXU accumulation.
# -----------------------------------------------------------------------------
def fused_mlp_kernel(enc_ref, w0_ref, w1_ref, w2_ref, wo_ref, out_ref):
    h = jnp.dot(enc_ref[...], w0_ref[...], preferred_element_type=jnp.float32)
    h = jnp.maximum(h, 0.0).astype(jnp.bfloat16)
    h = jnp.dot(h, w1_ref[...], preferred_element_type=jnp.float32)
    h = jnp.maximum(h, 0.0).astype(jnp.bfloat16)
    h = jnp.dot(h, w2_ref[...], preferred_element_type=jnp.float32)
    h = jnp.maximum(h, 0.0).astype(jnp.bfloat16)
    out_ref[...] = jnp.dot(h, wo_ref[...], preferred_element_type=jnp.float32)


def fused_mlp(enc, w0, w1, w2, wo, *, tile_n=1024):
    n, dim_in = enc.shape
    dim_h = w0.shape[1]
    dim_o = wo.shape[1]
    n_tiles = int(pl.cdiv(n, tile_n))
    n_padded = n_tiles * tile_n

    enc_b = enc.astype(jnp.bfloat16)
    if n_padded != n:
        enc_b = jnp.pad(enc_b, ((0, n_padded - n), (0, 0)))
    w0_b = w0.astype(jnp.bfloat16)
    w1_b = w1.astype(jnp.bfloat16)
    w2_b = w2.astype(jnp.bfloat16)
    wo_b = wo.astype(jnp.bfloat16)

    out = pl.pallas_call(
        fused_mlp_kernel,
        out_shape=jax.ShapeDtypeStruct((n_padded, dim_o), jnp.float32),
        grid_spec=pltpu.PrefetchScalarGridSpec(
            num_scalar_prefetch=0,
            grid=(n_tiles,),
            in_specs=[
                pl.BlockSpec((tile_n, dim_in), lambda i: (i, 0)),
                # Weight index maps are constant -> fetched once across the whole grid.
                pl.BlockSpec((dim_in, dim_h), lambda i: (0, 0)),
                pl.BlockSpec((dim_h, dim_h), lambda i: (0, 0)),
                pl.BlockSpec((dim_h, dim_h), lambda i: (0, 0)),
                pl.BlockSpec((dim_h, dim_o), lambda i: (0, 0)),
            ],
            out_specs=pl.BlockSpec((tile_n, dim_o), lambda i: (i, 0)),
        ),
        compiler_params=pltpu.CompilerParams(
            dimension_semantics=("parallel",)),
    )(enc_b, w0_b, w1_b, w2_b, wo_b)
    return out[:n]


def inr_forward(x, table, level_offsets, level_lengths, scales, resolutions,
                n_features_per_level, n_pad_enc, w0, w1, w2, wo, n_output_dims,
                tile_n=1024):
    enc = hash_encode(x, table, level_offsets, level_lengths, scales, resolutions,
                      n_features_per_level)
    if n_pad_enc:
        enc = jnp.pad(enc, ((0, 0), (0, n_pad_enc)))   # F.pad to MLP_ALIGNMENT input width
    out = fused_mlp(enc, w0, w1, w2, wo, tile_n=tile_n)
    return out[:, :n_output_dims]


if __name__ == "__main__":
    # INR_Base defaults; log2_hashmap_size shrunk (19 -> 12) so the synthetic demo
    # table stays tiny. The kernel itself is size-agnostic.
    n_input_dims, n_output_dims = 3, 1
    n_levels, n_features_per_level = 16, 4
    log2_hashmap_size = 12
    base_resolution, per_level_scale = 16, 2.0
    n_neurons, n_hidden_layers = 64, 3

    n_enc_out = n_levels * n_features_per_level                                   # 64
    n_enc_pad = (n_enc_out + MLP_ALIGNMENT - 1) // MLP_ALIGNMENT * MLP_ALIGNMENT  # 64
    n_pad_enc = n_enc_pad - n_enc_out                                             # 0
    n_out_pad = (n_output_dims + MLP_ALIGNMENT - 1) // MLP_ALIGNMENT * MLP_ALIGNMENT  # 16

    root = jax.random.PRNGKey(0)
    k_tab, k_x, k0, k1, k2, k3 = jax.random.split(root, 6)

    table, level_offsets, level_lengths, scales, resolutions = make_hashgrid(
        k_tab, n_levels, n_features_per_level, log2_hashmap_size,
        base_resolution, per_level_scale)

    def linear_init(key, fan_in, fan_out):
        lim = 1.0 / math.sqrt(fan_in)
        return jax.random.uniform(key, (fan_in, fan_out), jnp.float32, -lim, lim)

    w0 = linear_init(k0, n_enc_pad, n_neurons)
    w1 = linear_init(k1, n_neurons, n_neurons)
    w2 = linear_init(k2, n_neurons, n_neurons)
    wo = linear_init(k3, n_neurons, n_out_pad)    # module's last layer is padded to 16

    tile_n = 1024
    n_points = 4096                               # grid = 4 steps (>= 2 for v7x's two TCs)
    x = jax.random.uniform(k_x, (n_points, n_input_dims), jnp.float32)

    fwd = jax.jit(lambda xx, tt, a, b, c, d: inr_forward(
        xx, tt, level_offsets, level_lengths, scales, resolutions,
        n_features_per_level, n_pad_enc, a, b, c, d, n_output_dims, tile_n=tile_n))
    out = jax.block_until_ready(fwd(x, table, w0, w1, w2, wo))
    assert out.shape == (n_points, n_output_dims)

    # Correctness check of the Pallas MLP against a plain-JAX reference that mirrors
    # the kernel's numerics (bf16 operands, f32 accumulation) on the same features.
    enc = hash_encode(x, table, level_offsets, level_lengths, scales, resolutions,
                      n_features_per_level)
    pallas_out = fused_mlp(enc, w0, w1, w2, wo, tile_n=tile_n)[:, :n_output_dims]

    def up(a):
        return a.astype(jnp.bfloat16).astype(jnp.float32)

    hp = jax.lax.Precision.HIGHEST
    hh = jnp.maximum(jnp.dot(up(enc), up(w0), precision=hp), 0.0)
    hh = jnp.maximum(jnp.dot(up(hh), up(w1), precision=hp), 0.0)
    hh = jnp.maximum(jnp.dot(up(hh), up(w2), precision=hp), 0.0)
    ref = jnp.dot(up(hh), up(wo), precision=hp)[:, :n_output_dims]

    np.testing.assert_allclose(np.asarray(pallas_out), np.asarray(ref),
                               rtol=1e-3, atol=1e-7)

    print("KERNEL_OK")
</pallas_src>

<mosaic_0001>
module attributes {stable_mosaic.version = 11 : i64} {
  func.func private @main(%arg0: i32) attributes {dimension_semantics = [#tpu.dimension_semantics<core_parallel>], iteration_bounds = array<i64: 2>, tpu.core_type = #tpu.core_type<sc_scalar_subcore>, window_params = []} {
    return
  }
}

module attributes {stable_mosaic.version = 11 : i64} {
  func.func private @main(%arg0: i32) attributes {dimension_semantics = [#tpu.dimension_semantics<core_parallel>], iteration_bounds = array<i64: 2>, tpu.core_type = #tpu.core_type<sc_scalar_subcore>, window_params = []} {
    return
  }
}

module attributes {stable_mosaic.version = 11 : i64} {
  func.func @fused_mlp_kernel(%arg0: i32, %arg1: memref<1024x64xbf16, #tpu.memory_space<vmem>>, %arg2: memref<64x64xbf16, #tpu.memory_space<vmem>>, %arg3: memref<64x64xbf16, #tpu.memory_space<vmem>>, %arg4: memref<64x64xbf16, #tpu.memory_space<vmem>>, %arg5: memref<64x16xbf16, #tpu.memory_space<vmem>>, %arg6: memref<1024x16xf32, #tpu.memory_space<vmem>>) attributes {dimension_semantics = [#tpu.dimension_semantics<parallel>], iteration_bounds = array<i64: 4>, scalar_prefetch = 0 : i64, scratch_operands = 0 : i64, tpu.core_type = #tpu.core_type<tc>, window_params = [{transform_indices = @transform_0, window_bounds = array<i64: 1024, 64>}, {pipeline_mode = #tpu.pipeline_mode<synchronous>, transform_indices = @transform_1, window_bounds = array<i64: 64, 64>}, {pipeline_mode = #tpu.pipeline_mode<synchronous>, transform_indices = @transform_2, window_bounds = array<i64: 64, 64>}, {pipeline_mode = #tpu.pipeline_mode<synchronous>, transform_indices = @transform_3, window_bounds = array<i64: 64, 64>}, {pipeline_mode = #tpu.pipeline_mode<synchronous>, transform_indices = @transform_4, window_bounds = array<i64: 64, 16>}, {transform_indices = @transform_5, window_bounds = array<i64: 1024, 16>}]} {
    %c0 = arith.constant 0 : index
    %c0_0 = arith.constant 0 : index
    %0 = vector.load %arg1[%c0, %c0_0] : memref<1024x64xbf16, #tpu.memory_space<vmem>>, vector<1024x64xbf16>
    %c0_1 = arith.constant 0 : index
    %c0_2 = arith.constant 0 : index
    %1 = vector.load %arg2[%c0_1, %c0_2] : memref<64x64xbf16, #tpu.memory_space<vmem>>, vector<64x64xbf16>
    %cst = arith.constant dense<0.000000e+00> : vector<1024x64xf32>
    %2 = tpu.matmul %0, %1, %cst {dimension_numbers = #tpu.dot_dimension_numbers<[1], [0], [0], [1], [0, 0, 1, 1], [], []>} : vector<1024x64xbf16>, vector<64x64xbf16>, vector<1024x64xf32> -> vector<1024x64xf32>
    %cst_3 = arith.constant 0.000000e+00 : f32
    %3 = vector.broadcast %cst_3 : f32 to vector<1024x64xf32>
    %4 = arith.maximumf %2, %3 : vector<1024x64xf32>
    %5 = arith.truncf %4 : vector<1024x64xf32> to vector<1024x64xbf16>
    %c0_4 = arith.constant 0 : index
    %c0_5 = arith.constant 0 : index
    %6 = vector.load %arg3[%c0_4, %c0_5] : memref<64x64xbf16, #tpu.memory_space<vmem>>, vector<64x64xbf16>
    %cst_6 = arith.constant dense<0.000000e+00> : vector<1024x64xf32>
    %7 = tpu.matmul %5, %6, %cst_6 {dimension_numbers = #tpu.dot_dimension_numbers<[1], [0], [0], [1], [0, 0, 1, 1], [], []>} : vector<1024x64xbf16>, vector<64x64xbf16>, vector<1024x64xf32> -> vector<1024x64xf32>
    %cst_7 = arith.constant 0.000000e+00 : f32
    %8 = vector.broadcast %cst_7 : f32 to vector<1024x64xf32>
    %9 = arith.maximumf %7, %8 : vector<1024x64xf32>
    %10 = arith.truncf %9 : vector<1024x64xf32> to vector<1024x64xbf16>
    %c0_8 = arith.constant 0 : index
    %c0_9 = arith.constant 0 : index
    %11 = vector.load %arg4[%c0_8, %c0_9] : memref<64x64xbf16, #tpu.memory_space<vmem>>, vector<64x64xbf16>
    %cst_10 = arith.constant dense<0.000000e+00> : vector<1024x64xf32>
    %12 = tpu.matmul %10, %11, %cst_10 {dimension_numbers = #tpu.dot_dimension_numbers<[1], [0], [0], [1], [0, 0, 1, 1], [], []>} : vector<1024x64xbf16>, vector<64x64xbf16>, vector<1024x64xf32> -> vector<1024x64xf32>
    %cst_11 = arith.constant 0.000000e+00 : f32
    %13 = vector.broadcast %cst_11 : f32 to vector<1024x64xf32>
    %14 = arith.maximumf %12, %13 : vector<1024x64xf32>
    %15 = arith.truncf %14 : vector<1024x64xf32> to vector<1024x64xbf16>
    %c0_12 = arith.constant 0 : index
    %c0_13 = arith.constant 0 : index
    %16 = vector.load %arg5[%c0_12, %c0_13] : memref<64x16xbf16, #tpu.memory_space<vmem>>, vector<64x16xbf16>
    %cst_14 = arith.constant dense<0.000000e+00> : vector<1024x16xf32>
    %17 = tpu.matmul %15, %16, %cst_14 {dimension_numbers = #tpu.dot_dimension_numbers<[1], [0], [0], [1], [0, 0, 1, 1], [], []>} : vector<1024x64xbf16>, vector<64x16xbf16>, vector<1024x16xf32> -> vector<1024x16xf32>
    %c0_15 = arith.constant 0 : index
    %c0_16 = arith.constant 0 : index
    %18 = vector.load %arg6[%c0_15, %c0_16] : memref<1024x16xf32, #tpu.memory_space<vmem>>, vector<1024x16xf32>
    tpu.vector_store %arg6[%c0_15, %c0_16], %17 {strides = array<i32>} : memref<1024x16xf32, #tpu.memory_space<vmem>>, vector<1024x16xf32>,
    return
  }
  func.func @transform_0(%arg0: i32) -> (i32, i32) {
    %c0_i32 = arith.constant 0 : i32
    %c0_i32_0 = arith.constant 0 : i32
    return %arg0, %c0_i32 : i32, i32
  }
  func.func @transform_1(%arg0: i32) -> (i32, i32) {
    %c0_i32 = arith.constant 0 : i32
    %c0_i32_0 = arith.constant 0 : i32
    %c0_i32_1 = arith.constant 0 : i32
    return %c0_i32, %c0_i32_0 : i32, i32
  }
  func.func @transform_2(%arg0: i32) -> (i32, i32) {
    %c0_i32 = arith.constant 0 : i32
    %c0_i32_0 = arith.constant 0 : i32
    %c0_i32_1 = arith.constant 0 : i32
    return %c0_i32, %c0_i32_0 : i32, i32
  }
  func.func @transform_3(%arg0: i32) -> (i32, i32) {
    %c0_i32 = arith.constant 0 : i32
    %c0_i32_0 = arith.constant 0 : i32
    %c0_i32_1 = arith.constant 0 : i32
    return %c0_i32, %c0_i32_0 : i32, i32
  }
  func.func @transform_4(%arg0: i32) -> (i32, i32) {
    %c0_i32 = arith.constant 0 : i32
    %c0_i32_0 = arith.constant 0 : i32
    %c0_i32_1 = arith.constant 0 : i32
    return %c0_i32, %c0_i32_0 : i32, i32
  }
  func.func @transform_5(%arg0: i32) -> (i32, i32) {
    %c0_i32 = arith.constant 0 : i32
    %c0_i32_0 = arith.constant 0 : i32
    return %arg0, %c0_i32 : i32, i32
  }
}

</mosaic_0001>

<llo_original>
// kernel: _lambda_.1
$region0: #{_lambda_.1}
  #allocation0 [shape = 'u32[]', space=smem, size = 0x4, offset = 0x4, fixed_abs, tag = 'smem constant byte address 0x4 - core index']
  #allocation1 [shape = 'u32[144,128]{1,0:T(1,128)}', space=vmem, size = 0x12000, scoped, tag = 'internal scratch']
  %s0 = inlined_call_operand.vmem [shape: bf16[4096,64], index: 0, kind: input, shape index: {}]
  %s1 = inlined_call_operand.vmem [shape: bf16[64,64], index: 1, kind: input, shape index: {}]
  %s2 = inlined_call_operand.vmem [shape: bf16[64,64], index: 2, kind: input, shape index: {}]
  %s3 = inlined_call_operand.vmem [shape: bf16[64,64], index: 3, kind: input, shape index: {}]
  %s4 = inlined_call_operand.vmem [shape: bf16[64,16], index: 4, kind: input, shape index: {}]
  %s5 = inlined_call_operand.vmem [shape: f32[4096,16], index: 5, kind: output, shape index: {}]
  %s6 = sld [smem:[#allocation0]]
  $region53: #{_lambda_.1} parent=0
    _
  %s8 = ssub.s32 1, %s6
  %s9 = scalar_select 0, %s8, %s6
  loop: start=0, step=1, limit=6
  $region2: #{_lambda_.1} parent=0 // loop_pre_header
    _
  $region3: #{_lambda_.1} parent=0 // loop_header
    %s11 = sphi 0, %s15
    %p12 = scmp.ge.s32.totalorder %s11, 6
    %s21 = sphi 0, %s23
    %s24 = sphi 0, %s21
    %s25 = sphi 0, %s24
    %s41 = sphi 0, %s25
    %s45 = sphi 0, %s45
    %s47 = sphi 0, %s45
    %s48 = sphi 0, %s47
    %s62 = sphi 0, %s48
    %s66 = sphi 0, %s66
    %s68 = sphi 0, %s66
    %s69 = sphi 0, %s68
    %s83 = sphi 0, %s69
    %s87 = sphi 0, %s87
    %s89 = sphi 0, %s87
    %s90 = sphi 0, %s89
    %s104 = sphi 0, %s90
    %s108 = sphi 0, %s108
    %s110 = sphi 0, %s108
    %s111 = sphi 0, %s110
    %s125 = sphi 0, %s111
    %s131 = sphi 0, %s133
    %s134 = sphi 0, %s131
    %s135 = sphi 0, %s134
    %s151 = sphi 0, %s135
  $region4: #{_lambda_.1} parent=0 // loop_header_branch
    %14 = sbr.rel (%p12) target = $region8
  $region5: #{_lambda_.1} parent=0 // loop_body
    %s16 = ssub.s32 %s11, 1
    %s17 = ssub.s32 %s11, 2
    %s18 = sadd.s32 %s11, 1
    %s19 = ssub.s32 %s11, %s18
    %p20 = scmp.eq.s32.totalorder %s19, 0
    %s22 = sadd.s32 %s21, 1
    %s23 = scalar_select %p20, %s21, %s22
    %p26 = pneg %p20
    %p27 = scmp.eq.s32.totalorder %s11, 3
    %p28 = por %p26, %p27
    %p29 = scmp.ne.s32.totalorder %s21, %s24
    %p30 = scmp.eq.s32.totalorder %s11, 0
    %p31 = por %p29, %p30
    %p32 = scmp.ne.s32.totalorder %s21, %s24
    %p33 = scmp.eq.s32.totalorder %s16, 3
    %p34 = por %p32, %p33
    %p35 = scmp.ne.s32.totalorder %s24, %s25
    %p36 = scmp.eq.s32.totalorder %s16, 0
    %p37 = por %p35, %p36
    %p38 = scmp.ne.s32.totalorder %s24, %s25
    %p39 = scmp.eq.s32.totalorder %s17, 3
    %p40 = por %p38, %p39
    %p42 = scmp.ne.s32.totalorder %s25, %s41
    %p43 = scmp.eq.s32.totalorder %s17, 0
    %p44 = por %p42, %p43
    %s46 = sadd.s32 %s45, 1
    %p49 = scmp.eq.s32.totalorder %s11, 3
    %p50 = scmp.ne.s32.totalorder %s45, %s47
    %p51 = scmp.eq.s32.totalorder %s11, 0
    %p52 = por %p50, %p51
    %p53 = scmp.ne.s32.totalorder %s45, %s47
    %p54 = scmp.eq.s32.totalorder %s16, 3
    %p55 = por %p53, %p54
    %p56 = scmp.ne.s32.totalorder %s47, %s48
    %p57 = scmp.eq.s32.totalorder %s16, 0
    %p58 = por %p56, %p57
    %p59 = scmp.ne.s32.totalorder %s47, %s48
    %p60 = scmp.eq.s32.totalorder %s17, 3
    %p61 = por %p59, %p60
    %p63 = scmp.ne.s32.totalorder %s48, %s62
    %p64 = scmp.eq.s32.totalorder %s17, 0
    %p65 = por %p63, %p64
    %s67 = sadd.s32 %s66, 1
    %p70 = scmp.eq.s32.totalorder %s11, 3
    %p71 = scmp.ne.s32.totalorder %s66, %s68
    %p72 = scmp.eq.s32.totalorder %s11, 0
    %p73 = por %p71, %p72
    %p74 = scmp.ne.s32.totalorder %s66, %s68
    %p75 = scmp.eq.s32.totalorder %s16, 3
    %p76 = por %p74, %p75
    %p77 = scmp.ne.s32.totalorder %s68, %s69
    %p78 = scmp.eq.s32.totalorder %s16, 0
    %p79 = por %p77, %p78
    %p80 = scmp.ne.s32.totalorder %s68, %s69
    %p81 = scmp.eq.s32.totalorder %s17, 3
    %p82 = por %p80, %p81
    %p84 = scmp.ne.s32.totalorder %s69, %s83
    %p85 = scmp.eq.s32.totalorder %s17, 0
    %p86 = por %p84, %p85
    %s88 = sadd.s32 %s87, 1
    %p91 = scmp.eq.s32.totalorder %s11, 3
    %p92 = scmp.ne.s32.totalorder %s87, %s89
    %p93 = scmp.eq.s32.totalorder %s11, 0
    %p94 = por %p92, %p93
    %p95 = scmp.ne.s32.totalorder %s87, %s89
    %p96 = scmp.eq.s32.totalorder %s16, 3
    %p97 = por %p95, %p96
    %p98 = scmp.ne.s32.totalorder %s89, %s90
    %p99 = scmp.eq.s32.totalorder %s16, 0
    %p100 = por %p98, %p99
    %p101 = scmp.ne.s32.totalorder %s89, %s90
    %p102 = scmp.eq.s32.totalorder %s17, 3
    %p103 = por %p101, %p102
    %p105 = scmp.ne.s32.totalorder %s90, %s104
    %p106 = scmp.eq.s32.totalorder %s17, 0
    %p107 = por %p105, %p106
    %s109 = sadd.s32 %s108, 1
    %p112 = scmp.eq.s32.totalorder %s11, 3
    %p113 = scmp.ne.s32.totalorder %s108, %s110
    %p114 = scmp.eq.s32.totalorder %s11, 0
    %p115 = por %p113, %p114
    %p116 = scmp.ne.s32.totalorder %s108, %s110
    %p117 = scmp.eq.s32.totalorder %s16, 3
    %p118 = por %p116, %p117
    %p119 = scmp.ne.s32.totalorder %s110, %s111
    %p120 = scmp.eq.s32.totalorder %s16, 0
    %p121 = por %p119, %p120
    %p122 = scmp.ne.s32.totalorder %s110, %s111
    %p123 = scmp.eq.s32.totalorder %s17, 3
    %p124 = por %p122, %p123
    %p126 = scmp.ne.s32.totalorder %s111, %s125
    %p127 = scmp.eq.s32.totalorder %s17, 0
    %p128 = por %p126, %p127
    %s129 = ssub.s32 %s11, %s18
    %p130 = scmp.eq.s32.totalorder %s129, 0
    %s132 = sadd.s32 %s131, 1
    %s133 = scalar_select %p130, %s131, %s132
    %p136 = pneg %p130
    %p137 = scmp.eq.s32.totalorder %s11, 3
    %p138 = por %p136, %p137
    %p139 = scmp.ne.s32.totalorder %s131, %s134
    %p140 = scmp.eq.s32.totalorder %s11, 0
    %p141 = por %p139, %p140
    %p142 = scmp.ne.s32.totalorder %s131, %s134
    %p143 = scmp.eq.s32.totalorder %s16, 3
    %p144 = por %p142, %p143
    %p145 = scmp.ne.s32.totalorder %s134, %s135
    %p146 = scmp.eq.s32.totalorder %s16, 0
    %p147 = por %p145, %p146
    %p148 = scmp.ne.s32.totalorder %s134, %s135
    %p149 = scmp.eq.s32.totalorder %s17, 3
    %p150 = por %p148, %p149
    %p152 = scmp.ne.s32.totalorder %s135, %s151
    %p153 = scmp.eq.s32.totalorder %s17, 0
    %p154 = por %p152, %p153
    %p155 = scmp.le.s32.totalorder 1, %s11
    %p156 = scmp.lt.s32.totalorder %s11, 5
    %p157 = pnand %p155, %p156
    %p158 = pneg %p157
    // Predicated region
    $region9: #{_lambda_.1} parent=5 // pred_check
      _
    $region10: #{_lambda_.1} parent=5 // pred_check_branch
      %160 = sbr.rel (%p157) target = $region12
    $region11: #{_lambda_.1} parent=5 // pred_region
      %s161 = ssub.s32 %s11, 1
      // Predicated region
      $region13: #{_lambda_.1} parent=11 // pred_check
        %p162 = pneg %p58
      $region14: #{_lambda_.1} parent=11 // pred_check_branch
        %164 = sbr.rel (%p162) target = $region16
      $region15: #{_lambda_.1} parent=11 // pred_region
        _
      $region16: #{_lambda_.1} parent=11 // pred_fallthru
        _
      // Predicated region
      $region17: #{_lambda_.1} parent=11 // pred_check
        %p165 = pneg %p79
      $region18: #{_lambda_.1} parent=11 // pred_check_branch
        %167 = sbr.rel (%p165) target = $region20
      $region19: #{_lambda_.1} parent=11 // pred_region
        _
      $region20: #{_lambda_.1} parent=11 // pred_fallthru
        _
      // Predicated region
      $region21: #{_lambda_.1} parent=11 // pred_check
        %p168 = pneg %p100
      $region22: #{_lambda_.1} parent=11 // pred_check_branch
        %170 = sbr.rel (%p168) target = $region24
      $region23: #{_lambda_.1} parent=11 // pred_region
        _
      $region24: #{_lambda_.1} parent=11 // pred_fallthru
        _
      // Predicated region
      $region25: #{_lambda_.1} parent=11 // pred_check
        %p171 = pneg %p121
      $region26: #{_lambda_.1} parent=11 // pred_check_branch
        %173 = sbr.rel (%p171) target = $region28
      $region27: #{_lambda_.1} parent=11 // pred_region
        _
      $region28: #{_lambda_.1} parent=11 // pred_fallthru
        _
    $region12: #{_lambda_.1} parent=5 // pred_fallthru
      _
    %p174 = scmp.lt.s32.totalorder %s11, 4
    // Predicated region
    $region29: #{_lambda_.1} parent=5 // pred_check
      %p175 = pneg %p174
    $region30: #{_lambda_.1} parent=5 // pred_check_branch
      %177 = sbr.rel (%p175) target = $region32
    $region31: #{_lambda_.1} parent=5 // pred_region
      // Predicated region
      $region33: #{_lambda_.1} parent=31 // pred_check
        %p178 = pneg %p31
      $region34: #{_lambda_.1} parent=31 // pred_check_branch
        %180 = sbr.rel (%p178) target = $region36
      $region35: #{_lambda_.1} parent=31 // pred_region
        %s181 = smul.u32 128, %s11
        %p182 = scmp.lt.s32.totalorder %s181, 511
        %s183 = scalar_select %p182, %s181, 511
        %s184 = smul.addr %s183, 4
        %s185 = scalar_lea.vmem %s0, %s184
        %s186 = smul.u32 128, %s11
      $region36: #{_lambda_.1} parent=31 // pred_fallthru
        _
    $region32: #{_lambda_.1} parent=5 // pred_fallthru
      _
    %p187 = scmp.le.s32.totalorder 1, %s11
    %p188 = scmp.lt.s32.totalorder %s11, 5
    %p189 = pnand %p187, %p188
    %p190 = pneg %p189
    // Predicated region
    $region37: #{_lambda_.1} parent=5 // pred_check
      _
    $region38: #{_lambda_.1} parent=5 // pred_check_branch
      %192 = sbr.rel (%p189) target = $region40
    $region39: #{_lambda_.1} parent=5 // pred_region
      %s193 = ssub.s32 %s11, 1
      %s194 = smul.u32 128, %s16
      %p195 = scmp.lt.s32.totalorder %s194, 511
      %s196 = scalar_select %p195, %s194, 511
      %s197 = smul.addr %s196, 4
      %s198 = scalar_lea.vmem %s0, %s197
      %p199 = pneg %p37
      %p200 = pneg %p34
      %p201 = pneg %p58
      %p202 = pneg %p55
      %p203 = pneg %p79
      %p204 = pneg %p76
      %p205 = pneg %p100
      %p206 = pneg %p97
      %p207 = pneg %p121
      %p208 = pneg %p118
      %p209 = pneg %p147
      %p210 = pneg %p144
      %s211 = smul.u32 128, %s16
      %p212 = scmp.lt.s32.totalorder %s211, 511
      %s213 = scalar_select %p212, %s211, 511
      %s214 = smul.addr %s213, 8
      %s215 = scalar_lea.vmem %s5, %s214
      %s216 = smul.u32 128, %s16
      %p217 = scmp.lt.s32.totalorder %s216, 511
      %s218 = scalar_select %p217, %s216, 511
      %s219 = smul.addr %s218, 4
      %s220 = scalar_lea.vmem %s0, %s219
      %s221 = smul.u32 128, %s16
      %s222 = smul.u32 128, %s16
      %p223 = scmp.lt.s32.totalorder %s222, 511
      %s224 = scalar_select %p223, %s222, 511
      %s225 = smul.addr %s224, 8
      %s226 = scalar_lea.vmem %s5, %s225
      %s227 = smul.u32 128, %s16
      %v229 = vld [vmem:[%s220] sm:$0xf]
      %v230 = vld [vmem:[%s220 + $0x4] sm:$0xf]
      %v231 = vld [vmem:[%s220 + $0x8] sm:$0xf]
      %v232 = vld [vmem:[%s220 + $0xc] sm:$0xf]
      %v233 = vld [vmem:[%s220 + $0x10] sm:$0xf]
      %v234 = vld [vmem:[%s220 + $0x14] sm:$0xf]
      %v235 = vld [vmem:[%s220 + $0x18] sm:$0xf]
      %v236 = vld [vmem:[%s220 + $0x1c] sm:$0xf]
      %v237 = vld [vmem:[%s220 + $0x20] sm:$0xf]
      %v238 = vld [vmem:[%s220 + $0x24] sm:$0xf]
      %v239 = vld [vmem:[%s220 + $0x28] sm:$0xf]
      %v240 = vld [vmem:[%s220 + $0x2c] sm:$0xf]
      %v241 = vld [vmem:[%s220 + $0x30] sm:$0xf]
      %v242 = vld [vmem:[%s220 + $0x34] sm:$0xf]
      %v243 = vld [vmem:[%s220 + $0x38] sm:$0xf]
      %v244 = vld [vmem:[%s220 + $0x3c] sm:$0xf]
      %v245 = vld [vmem:[%s220 + $0x40] sm:$0xf]
      %v246 = vld [vmem:[%s220 + $0x44] sm:$0xf]
      %v247 = vld [vmem:[%s220 + $0x48] sm:$0xf]
      %v248 = vld [vmem:[%s220 + $0x4c] sm:$0xf]
      %v249 = vld [vmem:[%s220 + $0x50] sm:$0xf]
      %v250 = vld [vmem:[%s220 + $0x54] sm:$0xf]
      %v251 = vld [vmem:[%s220 + $0x58] sm:$0xf]
      %v252 = vld [vmem:[%s220 + $0x5c] sm:$0xf]
      %v253 = vld [vmem:[%s220 + $0x60] sm:$0xf]
      %v254 = vld [vmem:[%s220 + $0x64] sm:$0xf]
      %v255 = vld [vmem:[%s220 + $0x68] sm:$0xf]
      %v256 = vld [vmem:[%s220 + $0x6c] sm:$0xf]
      %v257 = vld [vmem:[%s220 + $0x70] sm:$0xf]
      %v258 = vld [vmem:[%s220 + $0x74] sm:$0xf]
      %v259 = vld [vmem:[%s220 + $0x78] sm:$0xf]
      %v260 = vld [vmem:[%s220 + $0x7c] sm:$0xf]
      %v261 = vld [vmem:[%s220 + $0x80] sm:$0xf]
      %v262 = vld [vmem:[%s220 + $0x84] sm:$0xf]
      %v263 = vld [vmem:[%s220 + $0x88] sm:$0xf]
      %v264 = vld [vmem:[%s220 + $0x8c] sm:$0xf]
      %v265 = vld [vmem:[%s220 + $0x90] sm:$0xf]
      %v266 = vld [vmem:[%s220 + $0x94] sm:$0xf]
      %v267 = vld [vmem:[%s220 + $0x98] sm:$0xf]
      %v268 = vld [vmem:[%s220 + $0x9c] sm:$0xf]
      %v269 = vld [vmem:[%s220 + $0xa0] sm:$0xf]
      %v270 = vld [vmem:[%s220 + $0xa4] sm:$0xf]
      %v271 = vld [vmem:[%s220 + $0xa8] sm:$0xf]
      %v272 = vld [vmem:[%s220 + $0xac] sm:$0xf]
      %v273 = vld [vmem:[%s220 + $0xb0] sm:$0xf]
      %v274 = vld [vmem:[%s220 + $0xb4] sm:$0xf]
      %v275 = vld [vmem:[%s220 + $0xb8] sm:$0xf]
      %v276 = vld [vmem:[%s220 + $0xbc] sm:$0xf]
      %v277 = vld [vmem:[%s220 + $0xc0] sm:$0xf]
      %v278 = vld [vmem:[%s220 + $0xc4] sm:$0xf]
      %v279 = vld [vmem:[%s220 + $0xc8] sm:$0xf]
      %v280 = vld [vmem:[%s220 + $0xcc] sm:$0xf]
      %v281 = vld [vmem:[%s220 + $0xd0] sm:$0xf]
      %v282 = vld [vmem:[%s220 + $0xd4] sm:$0xf]
      %v283 = vld [vmem:[%s220 + $0xd8] sm:$0xf]
      %v284 = vld [vmem:[%s220 + $0xdc] sm:$0xf]
      %v285 = vld [vmem:[%s220 + $0xe0] sm:$0xf]
      %v286 = vld [vmem:[%s220 + $0xe4] sm:$0xf]
      %v287 = vld [vmem:[%s220 + $0xe8] sm:$0xf]
      %v288 = vld [vmem:[%s220 + $0xec] sm:$0xf]
      %v289 = vld [vmem:[%s220 + $0xf0] sm:$0xf]
      %v290 = vld [vmem:[%s220 + $0xf4] sm:$0xf]
      %v291 = vld [vmem:[%s220 + $0xf8] sm:$0xf]
      %v292 = vld [vmem:[%s220 + $0xfc] sm:$0xf]
      %v293 = vld [vmem:[%s220 + $0x100] sm:$0xf]
      %v294 = vld [vmem:[%s220 + $0x104] sm:$0xf]
      %v295 = vld [vmem:[%s220 + $0x108] sm:$0xf]
      %v296 = vld [vmem:[%s220 + $0x10c] sm:$0xf]
      %v297 = vld [vmem:[%s220 + $0x110] sm:$0xf]
      %v298 = vld [vmem:[%s220 + $0x114] sm:$0xf]
      %v299 = vld [vmem:[%s220 + $0x118] sm:$0xf]
      %v300 = vld [vmem:[%s220 + $0x11c] sm:$0xf]
      %v301 = vld [vmem:[%s220 + $0x120] sm:$0xf]
      %v302 = vld [vmem:[%s220 + $0x124] sm:$0xf]
      %v303 = vld [vmem:[%s220 + $0x128] sm:$0xf]
      %v304 = vld [vmem:[%s220 + $0x12c] sm:$0xf]
      %v305 = vld [vmem:[%s220 + $0x130] sm:$0xf]
      %v306 = vld [vmem:[%s220 + $0x134] sm:$0xf]
      %v307 = vld [vmem:[%s220 + $0x138] sm:$0xf]
      %v308 = vld [vmem:[%s220 + $0x13c] sm:$0xf]
      %v309 = vld [vmem:[%s220 + $0x140] sm:$0xf]
      %v310 = vld [vmem:[%s220 + $0x144] sm:$0xf]
      %v311 = vld [vmem:[%s220 + $0x148] sm:$0xf]
      %v312 = vld [vmem:[%s220 + $0x14c] sm:$0xf]
      %v313 = vld [vmem:[%s220 + $0x150] sm:$0xf]
      %v314 = vld [vmem:[%s220 + $0x154] sm:$0xf]
      %v315 = vld [vmem:[%s220 + $0x158] sm:$0xf]
      %v316 = vld [vmem:[%s220 + $0x15c] sm:$0xf]
      %v317 = vld [vmem:[%s220 + $0x160] sm:$0xf]
      %v318 = vld [vmem:[%s220 + $0x164] sm:$0xf]
      %v319 = vld [vmem:[%s220 + $0x168] sm:$0xf]
      %v320 = vld [vmem:[%s220 + $0x16c] sm:$0xf]
      %v321 = vld [vmem:[%s220 + $0x170] sm:$0xf]
      %v322 = vld [vmem:[%s220 + $0x174] sm:$0xf]
      %v323 = vld [vmem:[%s220 + $0x178] sm:$0xf]
      %v324 = vld [vmem:[%s220 + $0x17c] sm:$0xf]
      %v325 = vld [vmem:[%s220 + $0x180] sm:$0xf]
      %v326 = vld [vmem:[%s220 + $0x184] sm:$0xf]
      %v327 = vld [vmem:[%s220 + $0x188] sm:$0xf]
      %v328 = vld [vmem:[%s220 + $0x18c] sm:$0xf]
      %v329 = vld [vmem:[%s220 + $0x190] sm:$0xf]
      %v330 = vld [vmem:[%s220 + $0x194] sm:$0xf]
      %v331 = vld [vmem:[%s220 + $0x198] sm:$0xf]
      %v332 = vld [vmem:[%s220 + $0x19c] sm:$0xf]
      %v333 = vld [vmem:[%s220 + $0x1a0] sm:$0xf]
      %v334 = vld [vmem:[%s220 + $0x1a4] sm:$0xf]
      %v335 = vld [vmem:[%s220 + $0x1a8] sm:$0xf]
      %v336 = vld [vmem:[%s220 + $0x1ac] sm:$0xf]
      %v337 = vld [vmem:[%s220 + $0x1b0] sm:$0xf]
      %v338 = vld [vmem:[%s220 + $0x1b4] sm:$0xf]
      %v339 = vld [vmem:[%s220 + $0x1b8] sm:$0xf]
      %v340 = vld [vmem:[%s220 + $0x1bc] sm:$0xf]
      %v341 = vld [vmem:[%s220 + $0x1c0] sm:$0xf]
      %v342 = vld [vmem:[%s220 + $0x1c4] sm:$0xf]
      %v343 = vld [vmem:[%s220 + $0x1c8] sm:$0xf]
      %v344 = vld [vmem:[%s220 + $0x1cc] sm:$0xf]
      %v345 = vld [vmem:[%s220 + $0x1d0] sm:$0xf]
      %v346 = vld [vmem:[%s220 + $0x1d4] sm:$0xf]
      %v347 = vld [vmem:[%s220 + $0x1d8] sm:$0xf]
      %v348 = vld [vmem:[%s220 + $0x1dc] sm:$0xf]
      %v349 = vld [vmem:[%s220 + $0x1e0] sm:$0xf]
      %v350 = vld [vmem:[%s220 + $0x1e4] sm:$0xf]
      %v351 = vld [vmem:[%s220 + $0x1e8] sm:$0xf]
      %v352 = vld [vmem:[%s220 + $0x1ec] sm:$0xf]
      %v353 = vld [vmem:[%s220 + $0x1f0] sm:$0xf]
      %v354 = vld [vmem:[%s220 + $0x1f4] sm:$0xf]
      %v355 = vld [vmem:[%s220 + $0x1f8] sm:$0xf]
      %v356 = vld [vmem:[%s220 + $0x1fc] sm:$0xf]
      %v357 = vld [vmem:[%s1] sm:$0xf]
      %v358 = vld [vmem:[%s1 + $0x4] sm:$0xf]
      %v359 = vld [vmem:[%s1 + $0x8] sm:$0xf]
      %v360 = vld [vmem:[%s1 + $0xc] sm:$0xf]
      %v361 = vld [vmem:[%s1 + $0x10] sm:$0xf]
      %v362 = vld [vmem:[%s1 + $0x14] sm:$0xf]
      %v363 = vld [vmem:[%s1 + $0x18] sm:$0xf]
      %v364 = vld [vmem:[%s1 + $0x1c] sm:$0xf]
      %v493 = vunpack.c.l.b16 %v229
      %v494 = vunpack.c.l.b16 %v230
      %v495 = vunpack.c.l.b16 %v231
      %v496 = vunpack.c.l.b16 %v232
      %v497 = vunpack.c.l.b16 %v233
      %v498 = vunpack.c.l.b16 %v234
      %v499 = vunpack.c.l.b16 %v235
      %v500 = vunpack.c.l.b16 %v236
      %v501 = vunpack.c.l.b16 %v237
      %v502 = vunpack.c.l.b16 %v238
      %v503 = vunpack.c.l.b16 %v239
      %v504 = vunpack.c.l.b16 %v240
      %v505 = vunpack.c.l.b16 %v241
      %v506 = vunpack.c.l.b16 %v242
      %v507 = vunpack.c.l.b16 %v243
      %v508 = vunpack.c.l.b16 %v244
      %v509 = vunpack.c.l.b16 %v245
      %v510 = vunpack.c.l.b16 %v246
      %v511 = vunpack.c.l.b16 %v247
      %v512 = vunpack.c.l.b16 %v248
      %v513 = vunpack.c.l.b16 %v249
      %v514 = vunpack.c.l.b16 %v250
      %v515 = vunpack.c.l.b16 %v251
      %v516 = vunpack.c.l.b16 %v252
      %v517 = vunpack.c.l.b16 %v253
      %v518 = vunpack.c.l.b16 %v254
      %v519 = vunpack.c.l.b16 %v255
      %v520 = vunpack.c.l.b16 %v256
      %v521 = vunpack.c.l.b16 %v257
      %v522 = vunpack.c.l.b16 %v258
      %v523 = vunpack.c.l.b16 %v259
      %v524 = vunpack.c.l.b16 %v260
      %v525 = vunpack.c.l.b16 %v261
      %v526 = vunpack.c.l.b16 %v262
      %v527 = vunpack.c.l.b16 %v263
      %v528 = vunpack.c.l.b16 %v264
      %v529 = vunpack.c.l.b16 %v265
      %v530 = vunpack.c.l.b16 %v266
      %v531 = vunpack.c.l.b16 %v267
      %v532 = vunpack.c.l.b16 %v268
      %v533 = vunpack.c.l.b16 %v269
      %v534 = vunpack.c.l.b16 %v270
      %v535 = vunpack.c.l.b16 %v271
      %v536 = vunpack.c.l.b16 %v272
      %v537 = vunpack.c.l.b16 %v273
      %v538 = vunpack.c.l.b16 %v274
      %v539 = vunpack.c.l.b16 %v275
      %v540 = vunpack.c.l.b16 %v276
      %v541 = vunpack.c.l.b16 %v277
      %v542 = vunpack.c.l.b16 %v278
      %v543 = vunpack.c.l.b16 %v279
      %v544 = vunpack.c.l.b16 %v280
      %v545 = vunpack.c.l.b16 %v281
      %v546 = vunpack.c.l.b16 %v282
      %v547 = vunpack.c.l.b16 %v283
      %v548 = vunpack.c.l.b16 %v284
      %v549 = vunpack.c.l.b16 %v285
      %v550 = vunpack.c.l.b16 %v286
      %v551 = vunpack.c.l.b16 %v287
      %v552 = vunpack.c.l.b16 %v288
      %v553 = vunpack.c.l.b16 %v289
      %v554 = vunpack.c.l.b16 %v290
      %v555 = vunpack.c.l.b16 %v291
      %v556 = vunpack.c.l.b16 %v292
      %v557 = vunpack.c.l.b16 %v293
      %v558 = vunpack.c.l.b16 %v294
      %v559 = vunpack.c.l.b16 %v295
      %v560 = vunpack.c.l.b16 %v296
      %v561 = vunpack.c.l.b16 %v297
      %v562 = vunpack.c.l.b16 %v298
      %v563 = vunpack.c.l.b16 %v299
      %v564 = vunpack.c.l.b16 %v300
      %v565 = vunpack.c.l.b16 %v301
      %v566 = vunpack.c.l.b16 %v302
      %v567 = vunpack.c.l.b16 %v303
      %v568 = vunpack.c.l.b16 %v304
      %v569 = vunpack.c.l.b16 %v305
      %v570 = vunpack.c.l.b16 %v306
      %v571 = vunpack.c.l.b16 %v307
      %v572 = vunpack.c.l.b16 %v308
      %v573 = vunpack.c.l.b16 %v309
      %v574 = vunpack.c.l.b16 %v310
      %v575 = vunpack.c.l.b16 %v311
      %v576 = vunpack.c.l.b16 %v312
      %v577 = vunpack.c.l.b16 %v313
      %v578 = vunpack.c.l.b16 %v314
      %v579 = vunpack.c.l.b16 %v315
      %v580 = vunpack.c.l.b16 %v316
      %v581 = vunpack.c.l.b16 %v317
      %v582 = vunpack.c.l.b16 %v318
      %v583 = vunpack.c.l.b16 %v319
      %v584 = vunpack.c.l.b16 %v320
      %v585 = vunpack.c.l.b16 %v321
      %v586 = vunpack.c.l.b16 %v322
      %v587 = vunpack.c.l.b16 %v323
      %v588 = vunpack.c.l.b16 %v324
      %v589 = vunpack.c.l.b16 %v325
      %v590 = vunpack.c.l.b16 %v326
      %v591 = vunpack.c.l.b16 %v327
      %v592 = vunpack.c.l.b16 %v328
      %v593 = vunpack.c.l.b16 %v329
      %v594 = vunpack.c.l.b16 %v330
      %v595 = vunpack.c.l.b16 %v331
      %v596 = vunpack.c.l.b16 %v332
      %v597 = vunpack.c.l.b16 %v333
      %v598 = vunpack.c.l.b16 %v334
      %v599 = vunpack.c.l.b16 %v335
      %v600 = vunpack.c.l.b16 %v336
      %v601 = vunpack.c.l.b16 %v337
      %v602 = vunpack.c.l.b16 %v338
      %v603 = vunpack.c.l.b16 %v339
      %v604 = vunpack.c.l.b16 %v340
      %v605 = vunpack.c.l.b16 %v341
      %v606 = vunpack.c.l.b16 %v342
      %v607 = vunpack.c.l.b16 %v343
      %v608 = vunpack.c.l.b16 %v344
      %v609 = vunpack.c.l.b16 %v345
      %v610 = vunpack.c.l.b16 %v346
      %v611 = vunpack.c.l.b16 %v347
      %v612 = vunpack.c.l.b16 %v348
      %v613 = vunpack.c.l.b16 %v349
      %v614 = vunpack.c.l.b16 %v350
      %v615 = vunpack.c.l.b16 %v351
      %v616 = vunpack.c.l.b16 %v352
      %v617 = vunpack.c.l.b16 %v353
      %v618 = vunpack.c.l.b16 %v354
      %v619 = vunpack.c.l.b16 %v355
      %v620 = vunpack.c.l.b16 %v356
      %v621 = vpack.c.b16 %v494, %v493
      %v622 = vpack.c.b16 %v496, %v495
      %v623 = vpack.c.b16 %v498, %v497
      %v624 = vpack.c.b16 %v500, %v499
      %v625 = vpack.c.b16 %v502, %v501
      %v626 = vpack.c.b16 %v504, %v503
      %v627 = vpack.c.b16 %v506, %v505
      %v628 = vpack.c.b16 %v508, %v507
      %v629 = vpack.c.b16 %v510, %v509
      %v630 = vpack.c.b16 %v512, %v511
      %v631 = vpack.c.b16 %v514, %v513
      %v632 = vpack.c.b16 %v516, %v515
      %v633 = vpack.c.b16 %v518, %v517
      %v634 = vpack.c.b16 %v520, %v519
      %v635 = vpack.c.b16 %v522, %v521
      %v636 = vpack.c.b16 %v524, %v523
      %v637 = vpack.c.b16 %v526, %v525
      %v638 = vpack.c.b16 %v528, %v527
      %v639 = vpack.c.b16 %v530, %v529
      %v640 = vpack.c.b16 %v532, %v531
      %v641 = vpack.c.b16 %v534, %v533
      %v642 = vpack.c.b16 %v536, %v535
      %v643 = vpack.c.b16 %v538, %v537
      %v644 = vpack.c.b16 %v540, %v539
      %v645 = vpack.c.b16 %v542, %v541
      %v646 = vpack.c.b16 %v544, %v543
      %v647 = vpack.c.b16 %v546, %v545
      %v648 = vpack.c.b16 %v548, %v547
      %v649 = vpack.c.b16 %v550, %v549
      %v650 = vpack.c.b16 %v552, %v551
      %v651 = vpack.c.b16 %v554, %v553
      %v652 = vpack.c.b16 %v556, %v555
      %v653 = vpack.c.b16 %v558, %v557
      %v654 = vpack.c.b16 %v560, %v559
      %v655 = vpack.c.b16 %v562, %v561
      %v656 = vpack.c.b16 %v564, %v563
      %v657 = vpack.c.b16 %v566, %v565
      %v658 = vpack.c.b16 %v568, %v567
      %v659 = vpack.c.b16 %v570, %v569
      %v660 = vpack.c.b16 %v572, %v571
      %v661 = vpack.c.b16 %v574, %v573
      %v662 = vpack.c.b16 %v576, %v575
      %v663 = vpack.c.b16 %v578, %v577
      %v664 = vpack.c.b16 %v580, %v579
      %v665 = vpack.c.b16 %v582, %v581
      %v666 = vpack.c.b16 %v584, %v583
      %v667 = vpack.c.b16 %v586, %v585
      %v668 = vpack.c.b16 %v588, %v587
      %v669 = vpack.c.b16 %v590, %v589
      %v670 = vpack.c.b16 %v592, %v591
      %v671 = vpack.c.b16 %v594, %v593
      %v672 = vpack.c.b16 %v596, %v595
      %v673 = vpack.c.b16 %v598, %v597
      %v674 = vpack.c.b16 %v600, %v599
      %v675 = vpack.c.b16 %v602, %v601
      %v676 = vpack.c.b16 %v604, %v603
      %v677 = vpack.c.b16 %v606, %v605
      %v678 = vpack.c.b16 %v608, %v607
      %v679 = vpack.c.b16 %v610, %v609
      %v680 = vpack.c.b16 %v612, %v611
      %v681 = vpack.c.b16 %v614, %v613
      %v682 = vpack.c.b16 %v616, %v615
      %v683 = vpack.c.b16 %v618, %v617
      %v684 = vpack.c.b16 %v620, %v619
      %v693 = vunpack.c.l.b16 %v357
      %v694 = vunpack.c.l.b16 %v358
      %v695 = vunpack.c.l.b16 %v359
      %v696 = vunpack.c.l.b16 %v360
      %v697 = vunpack.c.l.b16 %v361
      %v698 = vunpack.c.l.b16 %v362
      %v699 = vunpack.c.l.b16 %v363
      %v700 = vunpack.c.l.b16 %v364
      %v701 = vpack.c.b16 %v694, %v693
      %v702 = vpack.c.b16 %v696, %v695
      %v703 = vpack.c.b16 %v698, %v697
      %v704 = vpack.c.b16 %v700, %v699
      %vm709 = vcmask 523264
      %v711 = vsel %vm709, %v621, 0
      %v714 = vsel %vm709, %v622, 0
      %v717 = vsel %vm709, %v623, 0
      %v720 = vsel %vm709, %v624, 0
      %v723 = vsel %vm709, %v625, 0
      %v726 = vsel %vm709, %v626, 0
      %v729 = vsel %vm709, %v627, 0
      %v732 = vsel %vm709, %v628, 0
      %v735 = vsel %vm709, %v629, 0
      %v738 = vsel %vm709, %v630, 0
      %v741 = vsel %vm709, %v631, 0
      %v744 = vsel %vm709, %v632, 0
      %v747 = vsel %vm709, %v633, 0
      %v750 = vsel %vm709, %v634, 0
      %v753 = vsel %vm709, %v635, 0
      %v756 = vsel %vm709, %v636, 0
      %v759 = vsel %vm709, %v637, 0
      %v762 = vsel %vm709, %v638, 0
      %v765 = vsel %vm709, %v639, 0
      %v768 = vsel %vm709, %v640, 0
      %v771 = vsel %vm709, %v641, 0
      %v774 = vsel %vm709, %v642, 0
      %v777 = vsel %vm709, %v643, 0
      %v780 = vsel %vm709, %v644, 0
      %v783 = vsel %vm709, %v645, 0
      %v786 = vsel %vm709, %v646, 0
      %v789 = vsel %vm709, %v647, 0
      %v792 = vsel %vm709, %v648, 0
      %v795 = vsel %vm709, %v649, 0
      %v798 = vsel %vm709, %v650, 0
      %v801 = vsel %vm709, %v651, 0
      %v804 = vsel %vm709, %v652, 0
      %v807 = vsel %vm709, %v653, 0
      %v810 = vsel %vm709, %v654, 0
      %v813 = vsel %vm709, %v655, 0
      %v816 = vsel %vm709, %v656, 0
      %v819 = vsel %vm709, %v657, 0
      %v822 = vsel %vm709, %v658, 0
      %v825 = vsel %vm709, %v659, 0
      %v828 = vsel %vm709, %v660, 0
      %v831 = vsel %vm709, %v661, 0
      %v834 = vsel %vm709, %v662, 0
      %v837 = vsel %vm709, %v663, 0
      %v840 = vsel %vm709, %v664, 0
      %v843 = vsel %vm709, %v665, 0
      %v846 = vsel %vm709, %v666, 0
      %v849 = vsel %vm709, %v667, 0
      %v852 = vsel %vm709, %v668, 0
      %v855 = vsel %vm709, %v669, 0
      %v858 = vsel %vm709, %v670, 0
      %v861 = vsel %vm709, %v671, 0
      %v864 = vsel %vm709, %v672, 0
      %v867 = vsel %vm709, %v673, 0
      %v870 = vsel %vm709, %v674, 0
      %v873 = vsel %vm709, %v675, 0
      %v876 = vsel %vm709, %v676, 0
      %v879 = vsel %vm709, %v677, 0
      %v882 = vsel %vm709, %v678, 0
      %v885 = vsel %vm709, %v679, 0
      %v888 = vsel %vm709, %v680, 0
      %v891 = vsel %vm709, %v681, 0
      %v894 = vsel %vm709, %v682, 0
      %v897 = vsel %vm709, %v683, 0
      %v900 = vsel %vm709, %v684, 0
      %902 = vmatprep.subr.bf16.mxu0 0
      %903 = vmatpush1.bf16.msra.mxu0 %v701
      %904 = vmatprep.subr.bf16.mxu0 0
      %905 = vmatpush1.bf16.msra.mxu0 %v702
      %906 = vmatprep.subr.bf16.mxu0 0
      %907 = vmatpush1.bf16.msra.mxu0 %v703
      %908 = vmatprep.subr.bf16.mxu0 0
      %909 = vmatpush1.bf16.msra.mxu0 %v704
      %910 = vmatprep.subr.bf16.mxu0 0
      %911 = vmatpush1.bf16.msra.mxu0 0
      %912 = vmatprep.subr.bf16.mxu0 0
      %913 = vmatpush1.bf16.msra.mxu0 0
      %914 = vmatprep.subr.bf16.mxu0 0
      %915 = vmatpush1.bf16.msra.mxu0 0
      %916 = vmatprep.subr.bf16.mxu0 0
      %917 = vmatpush1.bf16.msra.mxu0 0
      %918 = vmatprep.subr.bf16.mxu0 0
      %919 = vmatpush1.bf16.msra.mxu0 0
      %920 = vmatprep.subr.bf16.mxu0 0
      %921 = vmatpush1.bf16.msra.mxu0 0
      %922 = vmatprep.subr.bf16.mxu0 0
      %923 = vmatpush1.bf16.msra.mxu0 0
      %924 = vmatprep.subr.bf16.mxu0 0
      %925 = vmatpush1.bf16.msra.mxu0 0
      %926 = vmatprep.subr.bf16.mxu0 0
      %927 = vmatpush1.bf16.msra.mxu0 0
      %928 = vmatprep.subr.bf16.mxu0 0
      %929 = vmatpush1.bf16.msra.mxu0 0
      %930 = vmatprep.subr.bf16.mxu0 0
      %931 = vmatpush1.bf16.msra.mxu0 0
      %932 = vmatprep.subr.bf16.mxu0 0
      %933 = vmatpush1.bf16.msra.mxu0 0
      %934 = vmatprep.mubr.bf16.mxu0 0
      %935 = vmatmul.mubr.bf16.gmra.mrb[0].mxu0 %v711
      %v936 = vpop.f32.mrb[0].mxu0
      %v937 = vadd.f32 0.0, %v936
      %v938 = vpop.f32.mrb[0].mxu0
      %v939 = vpop.f32.mrb[0].mxu0
      %v940 = vadd.f32 0.0, %v939
      %v941 = vpop.f32.mrb[0].mxu0
      %942 = vmatprep.mubr.bf16.mxu0 0
      %943 = vmatmul.mubr.bf16.gmra.mrb[0].mxu0 %v714
      %v944 = vpop.f32.mrb[0].mxu0
      %v945 = vadd.f32 0.0, %v944
      %v946 = vpop.f32.mrb[0].mxu0
      %v947 = vpop.f32.mrb[0].mxu0
      %v948 = vadd.f32 0.0, %v947
      %v949 = vpop.f32.mrb[0].mxu0
      %950 = vmatprep.mubr.bf16.mxu0 0
      %951 = vmatmul.mubr.bf16.gmra.mrb[0].mxu0 %v717
      %v952 = vpop.f32.mrb[0].mxu0
      %v953 = vadd.f32 0.0, %v952
      %v954 = vpop.f32.mrb[0].mxu0
      %v955 = vpop.f32.mrb[0].mxu0
      %v956 = vadd.f32 0.0, %v955
      %v957 = vpop.f32.mrb[0].mxu0
      %958 = vmatprep.mubr.bf16.mxu0 0
      %959 = vmatmul.mubr.bf16.gmra.mrb[0].mxu0 %v720
      %v960 = vpop.f32.mrb[0].mxu0
      %v961 = vadd.f32 0.0, %v960
      %v962 = vpop.f32.mrb[0].mxu0
      %v963 = vpop.f32.mrb[0].mxu0
      %v964 = vadd.f32 0.0, %v963
      %v965 = vpop.f32.mrb[0].mxu0
      %966 = vmatprep.mubr.bf16.mxu0 0
      %967 = vmatmul.mubr.bf16.gmra.mrb[0].mxu0 %v723
      %v968 = vpop.f32.mrb[0].mxu0
      %v969 = vadd.f32 0.0, %v968
      %v970 = vpop.f32.mrb[0].mxu0
      %v971 = vpop.f32.mrb[0].mxu0
      %v972 = vadd.f32 0.0, %v971
      %v973 = vpop.f32.mrb[0].mxu0
      %974 = vmatprep.mubr.bf16.mxu0 0
      %975 = vmatmul.mubr.bf16.gmra.mrb[0].mxu0 %v726
      %v976 = vpop.f32.mrb[0].mxu0
      %v977 = vadd.f32 0.0, %v976
      %v978 = vpop.f32.mrb[0].mxu0
      %v979 = vpop.f32.mrb[0].mxu0
      %v980 = vadd.f32 0.0, %v979
      %v981 = vpop.f32.mrb[0].mxu0
      %982 = vmatprep.mubr.bf16.mxu0 0
      %983 = vmatmul.mubr.bf16.gmra.mrb[0].mxu0 %v729
      %v984 = vpop.f32.mrb[0].mxu0
      %v985 = vadd.f32 0.0, %v984
      %v986 = vpop.f32.mrb[0].mxu0
      %v987 = vpop.f32.mrb[0].mxu0
      %v988 = vadd.f32 0.0, %v987
      %v989 = vpop.f32.mrb[0].mxu0
      %990 = vmatprep.mubr.bf16.mxu0 0
      %991 = vmatmul.mubr.bf16.gmra.mrb[0].mxu0 %v732
      %v992 = vpop.f32.mrb[0].mxu0
      %v993 = vadd.f32 0.0, %v992
      %v994 = vpop.f32.mrb[0].mxu0
      %v995 = vpop.f32.mrb[0].mxu0
      %v996 = vadd.f32 0.0, %v995
      %v997 = vpop.f32.mrb[0].mxu0
      %998 = vmatprep.mubr.bf16.mxu0 0
      %999 = vmatmul.mubr.bf16.gmra.mrb[0].mxu0 %v735
      %v1000 = vpop.f32.mrb[0].mxu0
      %v1001 = vadd.f32 0.0, %v1000
      %v1002 = vpop.f32.mrb[0].mxu0
      %v1003 = vpop.f32.mrb[0].mxu0
      %v1004 = vadd.f32 0.0, %v1003
      %v1005 = vpop.f32.mrb[0].mxu0
      %1006 = vmatprep.mubr.bf16.mxu0 0
      %1007 = vmatmul.mubr.bf16.gmra.mrb[0].mxu0 %v738
      %v1008 = vpop.f32.mrb[0].mxu0
      %v1009 = vadd.f32 0.0, %v1008
      %v1010 = vpop.f32.mrb[0].mxu0
      %v1011 = vpop.f32.mrb[0].mxu0
      %v1012 = vadd.f32 0.0, %v1011
      %v1013 = vpop.f32.mrb[0].mxu0
      %1014 = vmatprep.mubr.bf16.mxu0 0
      %1015 = vmatmul.mubr.bf16.gmra.mrb[0].mxu0 %v741
      %v1016 = vpop.f32.mrb[0].mxu0
      %v1017 = vadd.f32 0.0, %v1016
      %v1018 = vpop.f32.mrb[0].mxu0
      %v1019 = vpop.f32.mrb[0].mxu0
      %v1020 = vadd.f32 0.0, %v1019
      %v1021 = vpop.f32.mrb[0].mxu0
      %1022 = vmatprep.mubr.bf16.mxu0 0
      %1023 = vmatmul.mubr.bf16.gmra.mrb[0].mxu0 %v744
      %v1024 = vpop.f32.mrb[0].mxu0
      %v1025 = vadd.f32 0.0, %v1024
      %v1026 = vpop.f32.mrb[0].mxu0
      %v1027 = vpop.f32.mrb[0].mxu0
      %v1028 = vadd.f32 0.0, %v1027
      %v1029 = vpop.f32.mrb[0].mxu0
      %1030 = vmatprep.mubr.bf16.mxu0 0
      %1031 = vmatmul.mubr.bf16.gmra.mrb[0].mxu0 %v747
      %v1032 = vpop.f32.mrb[0].mxu0
      %v1033 = vadd.f32 0.0, %v1032
      %v1034 = vpop.f32.mrb[0].mxu0
      %v1035 = vpop.f32.mrb[0].mxu0
      %v1036 = vadd.f32 0.0, %v1035
      %v1037 = vpop.f32.mrb[0].mxu0
      %1038 = vmatprep.mubr.bf16.mxu0 0
      %1039 = vmatmul.mubr.bf16.gmra.mrb[0].mxu0 %v750
      %v1040 = vpop.f32.mrb[0].mxu0
      %v1041 = vadd.f32 0.0, %v1040
      %v1042 = vpop.f32.mrb[0].mxu0
      %v1043 = vpop.f32.mrb[0].mxu0
      %v1044 = vadd.f32 0.0, %v1043
      %v1045 = vpop.f32.mrb[0].mxu0
      %1046 = vmatprep.mubr.bf16.mxu0 0
      %1047 = vmatmul.mubr.bf16.gmra.mrb[0].mxu0 %v753
      %v1048 = vpop.f32.mrb[0].mxu0
      %v1049 = vadd.f32 0.0, %v1048
      %v1050 = vpop.f32.mrb[0].mxu0
      %v1051 = vpop.f32.mrb[0].mxu0
      %v1052 = vadd.f32 0.0, %v1051
      %v1053 = vpop.f32.mrb[0].mxu0
      %1054 = vmatprep.mubr.bf16.mxu0 0
      %1055 = vmatmul.mubr.bf16.gmra.mrb[0].mxu0 %v756
      %v1056 = vpop.f32.mrb[0].mxu0
      %v1057 = vadd.f32 0.0, %v1056
      %v1058 = vpop.f32.mrb[0].mxu0
      %v1059 = vpop.f32.mrb[0].mxu0
      %v1060 = vadd.f32 0.0, %v1059
      %v1061 = vpop.f32.mrb[0].mxu0
      %1062 = vmatprep.mubr.bf16.mxu0 0
      %1063 = vmatmul.mubr.bf16.gmra.mrb[0].mxu0 %v759
      %v1064 = vpop.f32.mrb[0].mxu0
      %v1065 = vadd.f32 0.0, %v1064
      %v1066 = vpop.f32.mrb[0].mxu0
      %v1067 = vpop.f32.mrb[0].mxu0
      %v1068 = vadd.f32 0.0, %v1067
      %v1069 = vpop.f32.mrb[0].mxu0
      %1070 = vmatprep.mubr.bf16.mxu0 0
      %1071 = vmatmul.mubr.bf16.gmra.mrb[0].mxu0 %v762
      %v1072 = vpop.f32.mrb[0].mxu0
      %v1073 = vadd.f32 0.0, %v1072
      %v1074 = vpop.f32.mrb[0].mxu0
      %v1075 = vpop.f32.mrb[0].mxu0
      %v1076 = vadd.f32 0.0, %v1075
      %v1077 = vpop.f32.mrb[0].mxu0
      %1078 = vmatprep.mubr.bf16.mxu0 0
      %1079 = vmatmul.mubr.bf16.gmra.mrb[0].mxu0 %v765
      %v1080 = vpop.f32.mrb[0].mxu0
      %v1081 = vadd.f32 0.0, %v1080
      %v1082 = vpop.f32.mrb[0].mxu0
      %v1083 = vpop.f32.mrb[0].mxu0
      %v1084 = vadd.f32 0.0, %v1083
      %v1085 = vpop.f32.mrb[0].mxu0
      %1086 = vmatprep.mubr.bf16.mxu0 0
      %1087 = vmatmul.mubr.bf16.gmra.mrb[0].mxu0 %v768
      %v1088 = vpop.f32.mrb[0].mxu0
      %v1089 = vadd.f32 0.0, %v1088
      %v1090 = vpop.f32.mrb[0].mxu0
      %v1091 = vpop.f32.mrb[0].mxu0
      %v1092 = vadd.f32 0.0, %v1091
      %v1093 = vpop.f32.mrb[0].mxu0
      %1094 = vmatprep.mubr.bf16.mxu0 0
      %1095 = vmatmul.mubr.bf16.gmra.mrb[0].mxu0 %v771
      %v1096 = vpop.f32.mrb[0].mxu0
      %v1097 = vadd.f32 0.0, %v1096
      %v1098 = vpop.f32.mrb[0].mxu0
      %v1099 = vpop.f32.mrb[0].mxu0
      %v1100 = vadd.f32 0.0, %v1099
      %v1101 = vpop.f32.mrb[0].mxu0
      %1102 = vmatprep.mubr.bf16.mxu0 0
      %1103 = vmatmul.mubr.bf16.gmra.mrb[0].mxu0 %v774
      %v1104 = vpop.f32.mrb[0].mxu0
      %v1105 = vadd.f32 0.0, %v1104
      %v1106 = vpop.f32.mrb[0].mxu0
      %v1107 = vpop.f32.mrb[0].mxu0
      %v1108 = vadd.f32 0.0, %v1107
      %v1109 = vpop.f32.mrb[0].mxu0
      %1110 = vmatprep.mubr.bf16.mxu0 0
      %1111 = vmatmul.mubr.bf16.gmra.mrb[0].mxu0 %v777
      %v1112 = vpop.f32.mrb[0].mxu0
      %v1113 = vadd.f32 0.0, %v1112
      %v1114 = vpop.f32.mrb[0].mxu0
      %v1115 = vpop.f32.mrb[0].mxu0
      %v1116 = vadd.f32 0.0, %v1115
      %v1117 = vpop.f32.mrb[0].mxu0
      %1118 = vmatprep.mubr.bf16.mxu0 0
      %1119 = vmatmul.mubr.bf16.gmra.mrb[0].mxu0 %v780
      %v1120 = vpop.f32.mrb[0].mxu0
      %v1121 = vadd.f32 0.0, %v1120
      %v1122 = vpop.f32.mrb[0].mxu0
      %v1123 = vpop.f32.mrb[0].mxu0
      %v1124 = vadd.f32 0.0, %v1123
      %v1125 = vpop.f32.mrb[0].mxu0
      %1126 = vmatprep.mubr.bf16.mxu0 0
      %1127 = vmatmul.mubr.bf16.gmra.mrb[0].mxu0 %v783
      %v1128 = vpop.f32.mrb[0].mxu0
      %v1129 = vadd.f32 0.0, %v1128
      %v1130 = vpop.f32.mrb[0].mxu0
      %v1131 = vpop.f32.mrb[0].mxu0
      %v1132 = vadd.f32 0.0, %v1131
      %v1133 = vpop.f32.mrb[0].mxu0
      %1134 = vmatprep.mubr.bf16.mxu0 0
      %1135 = vmatmul.mubr.bf16.gmra.mrb[0].mxu0 %v786
      %v1136 = vpop.f32.mrb[0].mxu0
      %v1137 = vadd.f32 0.0, %v1136
      %v1138 = vpop.f32.mrb[0].mxu0
      %v1139 = vpop.f32.mrb[0].mxu0
      %v1140 = vadd.f32 0.0, %v1139
      %v1141 = vpop.f32.mrb[0].mxu0
      %1142 = vmatprep.mubr.bf16.mxu0 0
      %1143 = vmatmul.mubr.bf16.gmra.mrb[0].mxu0 %v789
      %v1144 = vpop.f32.mrb[0].mxu0
      %v1145 = vadd.f32 0.0, %v1144
      %v1146 = vpop.f32.mrb[0].mxu0
      %v1147 = vpop.f32.mrb[0].mxu0
      %v1148 = vadd.f32 0.0, %v1147
      %v1149 = vpop.f32.mrb[0].mxu0
      %1150 = vmatprep.mubr.bf16.mxu0 0
      %1151 = vmatmul.mubr.bf16.gmra.mrb[0].mxu0 %v792
      %v1152 = vpop.f32.mrb[0].mxu0
      %v1153 = vadd.f32 0.0, %v1152
      %v1154 = vpop.f32.mrb[0].mxu0
      %v1155 = vpop.f32.mrb[0].mxu0
      %v1156 = vadd.f32 0.0, %v1155
      %v1157 = vpop.f32.mrb[0].mxu0
      %1158 = vmatprep.mubr.bf16.mxu0 0
      %1159 = vmatmul.mubr.bf16.gmra.mrb[0].mxu0 %v795
      %v1160 = vpop.f32.mrb[0].mxu0
      %v1161 = vadd.f32 0.0, %v1160
      %v1162 = vpop.f32.mrb[0].mxu0
      %v1163 = vpop.f32.mrb[0].mxu0
      %v1164 = vadd.f32 0.0, %v1163
      %v1165 = vpop.f32.mrb[0].mxu0
      %1166 = vmatprep.mubr.bf16.mxu0 0
      %1167 = vmatmul.mubr.bf16.gmra.mrb[0].mxu0 %v798
      %v1168 = vpop.f32.mrb[0].mxu0
      %v1169 = vadd.f32 0.0, %v1168
      %v1170 = vpop.f32.mrb[0].mxu0
      %v1171 = vpop.f32.mrb[0].mxu0
      %v1172 = vadd.f32 0.0, %v1171
      %v1173 = vpop.f32.mrb[0].mxu0
      %1174 = vmatprep.mubr.bf16.mxu0 0
      %1175 = vmatmul.mubr.bf16.gmra.mrb[0].mxu0 %v801
      %v1176 = vpop.f32.mrb[0].mxu0
      %v1177 = vadd.f32 0.0, %v1176
      %v1178 = vpop.f32.mrb[0].mxu0
      %v1179 = vpop.f32.mrb[0].mxu0
      %v1180 = vadd.f32 0.0, %v1179
      %v1181 = vpop.f32.mrb[0].mxu0
      %1182 = vmatprep.mubr.bf16.mxu0 0
      %1183 = vmatmul.mubr.bf16.gmra.mrb[0].mxu0 %v804
      %v1184 = vpop.f32.mrb[0].mxu0
      %v1185 = vadd.f32 0.0, %v1184
      %v1186 = vpop.f32.mrb[0].mxu0
      %v1187 = vpop.f32.mrb[0].mxu0
      %v1188 = vadd.f32 0.0, %v1187
      %v1189 = vpop.f32.mrb[0].mxu0
      %1190 = vmatprep.mubr.bf16.mxu0 0
      %1191 = vmatmul.mubr.bf16.gmra.mrb[0].mxu0 %v807
      %v1192 = vpop.f32.mrb[0].mxu0
      %v1193 = vadd.f32 0.0, %v1192
      %v1194 = vpop.f32.mrb[0].mxu0
      %v1195 = vpop.f32.mrb[0].mxu0
      %v1196 = vadd.f32 0.0, %v1195
      %v1197 = vpop.f32.mrb[0].mxu0
      %1198 = vmatprep.mubr.bf16.mxu0 0
      %1199 = vmatmul.mubr.bf16.gmra.mrb[0].mxu0 %v810
      %v1200 = vpop.f32.mrb[0].mxu0
      %v1201 = vadd.f32 0.0, %v1200
      %v1202 = vpop.f32.mrb[0].mxu0
      %v1203 = vpop.f32.mrb[0].mxu0
      %v1204 = vadd.f32 0.0, %v1203
      %v1205 = vpop.f32.mrb[0].mxu0
      %1206 = vmatprep.mubr.bf16.mxu0 0
      %1207 = vmatmul.mubr.bf16.gmra.mrb[0].mxu0 %v813
      %v1208 = vpop.f32.mrb[0].mxu0
      %v1209 = vadd.f32 0.0, %v1208
      %v1210 = vpop.f32.mrb[0].mxu0
      %v1211 = vpop.f32.mrb[0].mxu0
      %v1212 = vadd.f32 0.0, %v1211
      %v1213 = vpop.f32.mrb[0].mxu0
      %1214 = vmatprep.mubr.bf16.mxu0 0
      %1215 = vmatmul.mubr.bf16.gmra.mrb[0].mxu0 %v816
      %v1216 = vpop.f32.mrb[0].mxu0
      %v1217 = vadd.f32 0.0, %v1216
      %v1218 = vpop.f32.mrb[0].mxu0
      %v1219 = vpop.f32.mrb[0].mxu0
      %v1220 = vadd.f32 0.0, %v1219
      %v1221 = vpop.f32.mrb[0].mxu0
      %1222 = vmatprep.mubr.bf16.mxu0 0
      %1223 = vmatmul.mubr.bf16.gmra.mrb[0].mxu0 %v819
      %v1224 = vpop.f32.mrb[0].mxu0
      %v1225 = vadd.f32 0.0, %v1224
      %v1226 = vpop.f32.mrb[0].mxu0
      %v1227 = vpop.f32.mrb[0].mxu0
      %v1228 = vadd.f32 0.0, %v1227
      %v1229 = vpop.f32.mrb[0].mxu0
      %1230 = vmatprep.mubr.bf16.mxu0 0
      %1231 = vmatmul.mubr.bf16.gmra.mrb[0].mxu0 %v822
      %v1232 = vpop.f32.mrb[0].mxu0
      %v1233 = vadd.f32 0.0, %v1232
      %v1234 = vpop.f32.mrb[0].mxu0
      %v1235 = vpop.f32.mrb[0].mxu0
      %v1236 = vadd.f32 0.0, %v1235
      %v1237 = vpop.f32.mrb[0].mxu0
      %1238 = vmatprep.mubr.bf16.mxu0 0
      %1239 = vmatmul.mubr.bf16.gmra.mrb[0].mxu0 %v825
      %v1240 = vpop.f32.mrb[0].mxu0
      %v1241 = vadd.f32 0.0, %v1240
      %v1242 = vpop.f32.mrb[0].mxu0
      %v1243 = vpop.f32.mrb[0].mxu0
      %v1244 = vadd.f32 0.0, %v1243
      %v1245 = vpop.f32.mrb[0].mxu0
      %1246 = vmatprep.mubr.bf16.mxu0 0
      %1247 = vmatmul.mubr.bf16.gmra.mrb[0].mxu0 %v828
      %v1248 = vpop.f32.mrb[0].mxu0
      %v1249 = vadd.f32 0.0, %v1248
      %v1250 = vpop.f32.mrb[0].mxu0
      %v1251 = vpop.f32.mrb[0].mxu0
      %v1252 = vadd.f32 0.0, %v1251
      %v1253 = vpop.f32.mrb[0].mxu0
      %1254 = vmatprep.mubr.bf16.mxu0 0
      %1255 = vmatmul.mubr.bf16.gmra.mrb[0].mxu0 %v831
      %v1256 = vpop.f32.mrb[0].mxu0
      %v1257 = vadd.f32 0.0, %v1256
      %v1258 = vpop.f32.mrb[0].mxu0
      %v1259 = vpop.f32.mrb[0].mxu0
      %v1260 = vadd.f32 0.0, %v1259
      %v1261 = vpop.f32.mrb[0].mxu0
      %1262 = vmatprep.mubr.bf16.mxu0 0
      %1263 = vmatmul.mubr.bf16.gmra.mrb[0].mxu0 %v834
      %v1264 = vpop.f32.mrb[0].mxu0
      %v1265 = vadd.f32 0.0, %v1264
      %v1266 = vpop.f32.mrb[0].mxu0
      %v1267 = vpop.f32.mrb[0].mxu0
      %v1268 = vadd.f32 0.0, %v1267
      %v1269 = vpop.f32.mrb[0].mxu0
      %1270 = vmatprep.mubr.bf16.mxu0 0
      %1271 = vmatmul.mubr.bf16.gmra.mrb[0].mxu0 %v837
      %v1272 = vpop.f32.mrb[0].mxu0
      %v1273 = vadd.f32 0.0, %v1272
      %v1274 = vpop.f32.mrb[0].mxu0
      %v1275 = vpop.f32.mrb[0].mxu0
      %v1276 = vadd.f32 0.0, %v1275
      %v1277 = vpop.f32.mrb[0].mxu0
      %1278 = vmatprep.mubr.bf16.mxu0 0
      %1279 = vmatmul.mubr.bf16.gmra.mrb[0].mxu0 %v840
      %v1280 = vpop.f32.mrb[0].mxu0
      %v1281 = vadd.f32 0.0, %v1280
      %v1282 = vpop.f32.mrb[0].mxu0
      %v1283 = vpop.f32.mrb[0].mxu0
      %v1284 = vadd.f32 0.0, %v1283
      %v1285 = vpop.f32.mrb[0].mxu0
      %1286 = vmatprep.mubr.bf16.mxu0 0
      %1287 = vmatmul.mubr.bf16.gmra.mrb[0].mxu0 %v843
      %v1288 = vpop.f32.mrb[0].mxu0
      %v1289 = vadd.f32 0.0, %v1288
      %v1290 = vpop.f32.mrb[0].mxu0
      %v1291 = vpop.f32.mrb[0].mxu0
      %v1292 = vadd.f32 0.0, %v1291
      %v1293 = vpop.f32.mrb[0].mxu0
      %1294 = vmatprep.mubr.bf16.mxu0 0
      %1295 = vmatmul.mubr.bf16.gmra.mrb[0].mxu0 %v846
      %v1296 = vpop.f32.mrb[0].mxu0
      %v1297 = vadd.f32 0.0, %v1296
      %v1298 = vpop.f32.mrb[0].mxu0
      %v1299 = vpop.f32.mrb[0].mxu0
      %v1300 = vadd.f32 0.0, %v1299
      %v1301 = vpop.f32.mrb[0].mxu0
      %1302 = vmatprep.mubr.bf16.mxu0 0
      %1303 = vmatmul.mubr.bf16.gmra.mrb[0].mxu0 %v849
      %v1304 = vpop.f32.mrb[0].mxu0
      %v1305 = vadd.f32 0.0, %v1304
      %v1306 = vpop.f32.mrb[0].mxu0
      %v1307 = vpop.f32.mrb[0].mxu0
      %v1308 = vadd.f32 0.0, %v1307
      %v1309 = vpop.f32.mrb[0].mxu0
      %1310 = vmatprep.mubr.bf16.mxu0 0
      %1311 = vmatmul.mubr.bf16.gmra.mrb[0].mxu0 %v852
      %v1312 = vpop.f32.mrb[0].mxu0
      %v1313 = vadd.f32 0.0, %v1312
      %v1314 = vpop.f32.mrb[0].mxu0
      %v1315 = vpop.f32.mrb[0].mxu0
      %v1316 = vadd.f32 0.0, %v1315
      %v1317 = vpop.f32.mrb[0].mxu0
      %1318 = vmatprep.mubr.bf16.mxu0 0
      %1319 = vmatmul.mubr.bf16.gmra.mrb[0].mxu0 %v855
      %v1320 = vpop.f32.mrb[0].mxu0
      %v1321 = vadd.f32 0.0, %v1320
      %v1322 = vpop.f32.mrb[0].mxu0
      %v1323 = vpop.f32.mrb[0].mxu0
      %v1324 = vadd.f32 0.0, %v1323
      %v1325 = vpop.f32.mrb[0].mxu0
      %1326 = vmatprep.mubr.bf16.mxu0 0
      %1327 = vmatmul.mubr.bf16.gmra.mrb[0].mxu0 %v858
      %v1328 = vpop.f32.mrb[0].mxu0
      %v1329 = vadd.f32 0.0, %v1328
      %v1330 = vpop.f32.mrb[0].mxu0
      %v1331 = vpop.f32.mrb[0].mxu0
      %v1332 = vadd.f32 0.0, %v1331
      %v1333 = vpop.f32.mrb[0].mxu0
      %1334 = vmatprep.mubr.bf16.mxu0 0
      %1335 = vmatmul.mubr.bf16.gmra.mrb[0].mxu0 %v861
      %v1336 = vpop.f32.mrb[0].mxu0
      %v1337 = vadd.f32 0.0, %v1336
      %v1338 = vpop.f32.mrb[0].mxu0
      %v1339 = vpop.f32.mrb[0].mxu0
      %v1340 = vadd.f32 0.0, %v1339
      %v1341 = vpop.f32.mrb[0].mxu0
      %1342 = vmatprep.mubr.bf16.mxu0 0
      %1343 = vmatmul.mubr.bf16.gmra.mrb[0].mxu0 %v864
      %v1344 = vpop.f32.mrb[0].mxu0
      %v1345 = vadd.f32 0.0, %v1344
      %v1346 = vpop.f32.mrb[0].mxu0
      %v1347 = vpop.f32.mrb[0].mxu0
      %v1348 = vadd.f32 0.0, %v1347
      %v1349 = vpop.f32.mrb[0].mxu0
      %1350 = vmatprep.mubr.bf16.mxu0 0
      %1351 = vmatmul.mubr.bf16.gmra.mrb[0].mxu0 %v867
      %v1352 = vpop.f32.mrb[0].mxu0
      %v1353 = vadd.f32 0.0, %v1352
      %v1354 = vpop.f32.mrb[0].mxu0
      %v1355 = vpop.f32.mrb[0].mxu0
      %v1356 = vadd.f32 0.0, %v1355
      %v1357 = vpop.f32.mrb[0].mxu0
      %1358 = vmatprep.mubr.bf16.mxu0 0
      %1359 = vmatmul.mubr.bf16.gmra.mrb[0].mxu0 %v870
      %v1360 = vpop.f32.mrb[0].mxu0
      %v1361 = vadd.f32 0.0, %v1360
      %v1362 = vpop.f32.mrb[0].mxu0
      %v1363 = vpop.f32.mrb[0].mxu0
      %v1364 = vadd.f32 0.0, %v1363
      %v1365 = vpop.f32.mrb[0].mxu0
      %1366 = vmatprep.mubr.bf16.mxu0 0
      %1367 = vmatmul.mubr.bf16.gmra.mrb[0].mxu0 %v873
      %v1368 = vpop.f32.mrb[0].mxu0
      %v1369 = vadd.f32 0.0, %v1368
      %v1370 = vpop.f32.mrb[0].mxu0
      %v1371 = vpop.f32.mrb[0].mxu0
      %v1372 = vadd.f32 0.0, %v1371
      %v1373 = vpop.f32.mrb[0].mxu0
      %1374 = vmatprep.mubr.bf16.mxu0 0
      %1375 = vmatmul.mubr.bf16.gmra.mrb[0].mxu0 %v876
      %v1376 = vpop.f32.mrb[0].mxu0
      %v1377 = vadd.f32 0.0, %v1376
      %v1378 = vpop.f32.mrb[0].mxu0
      %v1379 = vpop.f32.mrb[0].mxu0
      %v1380 = vadd.f32 0.0, %v1379
      %v1381 = vpop.f32.mrb[0].mxu0
      %1382 = vmatprep.mubr.bf16.mxu0 0
      %1383 = vmatmul.mubr.bf16.gmra.mrb[0].mxu0 %v879
      %v1384 = vpop.f32.mrb[0].mxu0
      %v1385 = vadd.f32 0.0, %v1384
      %v1386 = vpop.f32.mrb[0].mxu0
      %v1387 = vpop.f32.mrb[0].mxu0
      %v1388 = vadd.f32 0.0, %v1387
      %v1389 = vpop.f32.mrb[0].mxu0
      %1390 = vmatprep.mubr.bf16.mxu0 0
      %1391 = vmatmul.mubr.bf16.gmra.mrb[0].mxu0 %v882
      %v1392 = vpop.f32.mrb[0].mxu0
      %v1393 = vadd.f32 0.0, %v1392
      %v1394 = vpop.f32.mrb[0].mxu0
      %v1395 = vpop.f32.mrb[0].mxu0
      %v1396 = vadd.f32 0.0, %v1395
      %v1397 = vpop.f32.mrb[0].mxu0
      %1398 = vmatprep.mubr.bf16.mxu0 0
      %1399 = vmatmul.mubr.bf16.gmra.mrb[0].mxu0 %v885
      %v1400 = vpop.f32.mrb[0].mxu0
      %v1401 = vadd.f32 0.0, %v1400
      %v1402 = vpop.f32.mrb[0].mxu0
      %v1403 = vpop.f32.mrb[0].mxu0
      %v1404 = vadd.f32 0.0, %v1403
      %v1405 = vpop.f32.mrb[0].mxu0
      %1406 = vmatprep.mubr.bf16.mxu0 0
      %1407 = vmatmul.mubr.bf16.gmra.mrb[0].mxu0 %v888
      %v1408 = vpop.f32.mrb[0].mxu0
      %v1409 = vadd.f32 0.0, %v1408
      %v1410 = vpop.f32.mrb[0].mxu0
      %v1411 = vpop.f32.mrb[0].mxu0
      %v1412 = vadd.f32 0.0, %v1411
      %v1413 = vpop.f32.mrb[0].mxu0
      %1414 = vmatprep.mubr.bf16.mxu0 0
      %1415 = vmatmul.mubr.bf16.gmra.mrb[0].mxu0 %v891
      %v1416 = vpop.f32.mrb[0].mxu0
      %v1417 = vadd.f32 0.0, %v1416
      %v1418 = vpop.f32.mrb[0].mxu0
      %v1419 = vpop.f32.mrb[0].mxu0
      %v1420 = vadd.f32 0.0, %v1419
      %v1421 = vpop.f32.mrb[0].mxu0
      %1422 = vmatprep.mubr.bf16.mxu0 0
      %1423 = vmatmul.mubr.bf16.gmra.mrb[0].mxu0 %v894
      %v1424 = vpop.f32.mrb[0].mxu0
      %v1425 = vadd.f32 0.0, %v1424
      %v1426 = vpop.f32.mrb[0].mxu0
      %v1427 = vpop.f32.mrb[0].mxu0
      %v1428 = vadd.f32 0.0, %v1427
      %v1429 = vpop.f32.mrb[0].mxu0
      %1430 = vmatprep.mubr.bf16.mxu0 0
      %1431 = vmatmul.mubr.bf16.gmra.mrb[0].mxu0 %v897
      %v1432 = vpop.f32.mrb[0].mxu0
      %v1433 = vadd.f32 0.0, %v1432
      %v1434 = vpop.f32.mrb[0].mxu0
      %v1435 = vpop.f32.mrb[0].mxu0
      %v1436 = vadd.f32 0.0, %v1435
      %v1437 = vpop.f32.mrb[0].mxu0
      %1438 = vmatprep.mubr.bf16.mxu0 0
      %1439 = vmatmul.mubr.bf16.gmra.mrb[0].mxu0 %v900
      %v1440 = vpop.f32.mrb[0].mxu0
      %v1441 = vadd.f32 0.0, %v1440
      %v1442 = vpop.f32.mrb[0].mxu0
      %v1443 = vpop.f32.mrb[0].mxu0
      %v1444 = vadd.f32 0.0, %v1443
      %v1445 = vpop.f32.mrb[0].mxu0
      %1446 = vdwg.mxu0
      %v1447 = vmax.f32 %v937, 0.0
      %v1448 = vmax.f32 %v940, 0.0
      %v1449 = vmax.f32 %v945, 0.0
      %v1450 = vmax.f32 %v948, 0.0
      %v1451 = vmax.f32 %v953, 0.0
      %v1452 = vmax.f32 %v956, 0.0
      %v1453 = vmax.f32 %v961, 0.0
      %v1454 = vmax.f32 %v964, 0.0
      %v1455 = vmax.f32 %v969, 0.0
      %v1456 = vmax.f32 %v972, 0.0
      %v1457 = vmax.f32 %v977, 0.0
      %v1458 = vmax.f32 %v980, 0.0
      %v1459 = vmax.f32 %v985, 0.0
      %v1460 = vmax.f32 %v988, 0.0
      %v1461 = vmax.f32 %v993, 0.0
      %v1462 = vmax.f32 %v996, 0.0
      %v1463 = vmax.f32 %v1001, 0.0
      %v1464 = vmax.f32 %v1004, 0.0
      %v1465 = vmax.f32 %v1009, 0.0
      %v1466 = vmax.f32 %v1012, 0.0
      %v1467 = vmax.f32 %v1017, 0.0
      %v1468 = vmax.f32 %v1020, 0.0
      %v1469 = vmax.f32 %v1025, 0.0
      %v1470 = vmax.f32 %v1028, 0.0
      %v1471 = vmax.f32 %v1033, 0.0
      %v1472 = vmax.f32 %v1036, 0.0
      %v1473 = vmax.f32 %v1041, 0.0
      %v1474 = vmax.f32 %v1044, 0.0
      %v1475 = vmax.f32 %v1049, 0.0
      %v1476 = vmax.f32 %v1052, 0.0
      %v1477 = vmax.f32 %v1057, 0.0
      %v1478 = vmax.f32 %v1060, 0.0
      %v1479 = vmax.f32 %v1065, 0.0
      %v1480 = vmax.f32 %v1068, 0.0
      %v1481 = vmax.f32 %v1073, 0.0
      %v1482 = vmax.f32 %v1076, 0.0
      %v1483 = vmax.f32 %v1081, 0.0
      %v1484 = vmax.f32 %v1084, 0.0
      %v1485 = vmax.f32 %v1089, 0.0
      %v1486 = vmax.f32 %v1092, 0.0
      %v1487 = vmax.f32 %v1097, 0.0
      %v1488 = vmax.f32 %v1100, 0.0
      %v1489 = vmax.f32 %v1105, 0.0
      %v1490 = vmax.f32 %v1108, 0.0
      %v1491 = vmax.f32 %v1113, 0.0
      %v1492 = vmax.f32 %v1116, 0.0
      %v1493 = vmax.f32 %v1121, 0.0
      %v1494 = vmax.f32 %v1124, 0.0
      %v1495 = vmax.f32 %v1129, 0.0
      %v1496 = vmax.f32 %v1132, 0.0
      %v1497 = vmax.f32 %v1137, 0.0
      %v1498 = vmax.f32 %v1140, 0.0
      %v1499 = vmax.f32 %v1145, 0.0
      %v1500 = vmax.f32 %v1148, 0.0
      %v1501 = vmax.f32 %v1153, 0.0
      %v1502 = vmax.f32 %v1156, 0.0
      %v1503 = vmax.f32 %v1161, 0.0
      %v1504 = vmax.f32 %v1164, 0.0
      %v1505 = vmax.f32 %v1169, 0.0
      %v1506 = vmax.f32 %v1172, 0.0
      %v1507 = vmax.f32 %v1177, 0.0
      %v1508 = vmax.f32 %v1180, 0.0
      %v1509 = vmax.f32 %v1185, 0.0
      %v1510 = vmax.f32 %v1188, 0.0
      %v1511 = vmax.f32 %v1193, 0.0
      %v1512 = vmax.f32 %v1196, 0.0
      %v1513 = vmax.f32 %v1201, 0.0
      %v1514 = vmax.f32 %v1204, 0.0
      %v1515 = vmax.f32 %v1209, 0.0
      %v1516 = vmax.f32 %v1212, 0.0
      %v1517 = vmax.f32 %v1217, 0.0
      %v1518 = vmax.f32 %v1220, 0.0
      %v1519 = vmax.f32 %v1225, 0.0
      %v1520 = vmax.f32 %v1228, 0.0
      %v1521 = vmax.f32 %v1233, 0.0
      %v1522 = vmax.f32 %v1236, 0.0
      %v1523 = vmax.f32 %v1241, 0.0
      %v1524 = vmax.f32 %v1244, 0.0
      %v1525 = vmax.f32 %v1249, 0.0
      %v1526 = vmax.f32 %v1252, 0.0
      %v1527 = vmax.f32 %v1257, 0.0
      %v1528 = vmax.f32 %v1260, 0.0
      %v1529 = vmax.f32 %v1265, 0.0
      %v1530 = vmax.f32 %v1268, 0.0
      %v1531 = vmax.f32 %v1273, 0.0
      %v1532 = vmax.f32 %v1276, 0.0
      %v1533 = vmax.f32 %v1281, 0.0
      %v1534 = vmax.f32 %v1284, 0.0
      %v1535 = vmax.f32 %v1289, 0.0
      %v1536 = vmax.f32 %v1292, 0.0
      %v1537 = vmax.f32 %v1297, 0.0
      %v1538 = vmax.f32 %v1300, 0.0
      %v1539 = vmax.f32 %v1305, 0.0
      %v1540 = vmax.f32 %v1308, 0.0
      %v1541 = vmax.f32 %v1313, 0.0
      %v1542 = vmax.f32 %v1316, 0.0
      %v1543 = vmax.f32 %v1321, 0.0
      %v1544 = vmax.f32 %v1324, 0.0
      %v1545 = vmax.f32 %v1329, 0.0
      %v1546 = vmax.f32 %v1332, 0.0
      %v1547 = vmax.f32 %v1337, 0.0
      %v1548 = vmax.f32 %v1340, 0.0
      %v1549 = vmax.f32 %v1345, 0.0
      %v1550 = vmax.f32 %v1348, 0.0
      %v1551 = vmax.f32 %v1353, 0.0
      %v1552 = vmax.f32 %v1356, 0.0
      %v1553 = vmax.f32 %v1361, 0.0
      %v1554 = vmax.f32 %v1364, 0.0
      %v1555 = vmax.f32 %v1369, 0.0
      %v1556 = vmax.f32 %v1372, 0.0
      %v1557 = vmax.f32 %v1377, 0.0
      %v1558 = vmax.f32 %v1380, 0.0
      %v1559 = vmax.f32 %v1385, 0.0
      %v1560 = vmax.f32 %v1388, 0.0
      %v1561 = vmax.f32 %v1393, 0.0
      %v1562 = vmax.f32 %v1396, 0.0
      %v1563 = vmax.f32 %v1401, 0.0
      %v1564 = vmax.f32 %v1404, 0.0
      %v1565 = vmax.f32 %v1409, 0.0
      %v1566 = vmax.f32 %v1412, 0.0
      %v1567 = vmax.f32 %v1417, 0.0
      %v1568 = vmax.f32 %v1420, 0.0
      %v1569 = vmax.f32 %v1425, 0.0
      %v1570 = vmax.f32 %v1428, 0.0
      %v1571 = vmax.f32 %v1433, 0.0
      %v1572 = vmax.f32 %v1436, 0.0
      %v1573 = vmax.f32 %v1441, 0.0
      %v1574 = vmax.f32 %v1444, 0.0
      %v1575 = vpack.c.bf16 %v1448, %v1447
      %v1576 = vpack.c.bf16 %v1450, %v1449
      %v1577 = vpack.c.bf16 %v1452, %v1451
      %v1578 = vpack.c.bf16 %v1454, %v1453
      %v1579 = vpack.c.bf16 %v1456, %v1455
      %v1580 = vpack.c.bf16 %v1458, %v1457
      %v1581 = vpack.c.bf16 %v1460, %v1459
      %v1582 = vpack.c.bf16 %v1462, %v1461
      %v1583 = vpack.c.bf16 %v1464, %v1463
      %v1584 = vpack.c.bf16 %v1466, %v1465
      %v1585 = vpack.c.bf16 %v1468, %v1467
      %v1586 = vpack.c.bf16 %v1470, %v1469
      %v1587 = vpack.c.bf16 %v1472, %v1471
      %v1588 = vpack.c.bf16 %v1474, %v1473
      %v1589 = vpack.c.bf16 %v1476, %v1475
      %v1590 = vpack.c.bf16 %v1478, %v1477
      %v1591 = vpack.c.bf16 %v1480, %v1479
      %v1592 = vpack.c.bf16 %v1482, %v1481
      %v1593 = vpack.c.bf16 %v1484, %v1483
      %v1594 = vpack.c.bf16 %v1486, %v1485
      %v1595 = vpack.c.bf16 %v1488, %v1487
      %v1596 = vpack.c.bf16 %v1490, %v1489
      %v1597 = vpack.c.bf16 %v1492, %v1491
      %v1598 = vpack.c.bf16 %v1494, %v1493
      %v1599 = vpack.c.bf16 %v1496, %v1495
      %v1600 = vpack.c.bf16 %v1498, %v1497
      %v1601 = vpack.c.bf16 %v1500, %v1499
      %v1602 = vpack.c.bf16 %v1502, %v1501
      %v1603 = vpack.c.bf16 %v1504, %v1503
      %v1604 = vpack.c.bf16 %v1506, %v1505
      %v1605 = vpack.c.bf16 %v1508, %v1507
      %v1606 = vpack.c.bf16 %v1510, %v1509
      %v1607 = vpack.c.bf16 %v1512, %v1511
      %v1608 = vpack.c.bf16 %v1514, %v1513
      %v1609 = vpack.c.bf16 %v1516, %v1515
      %v1610 = vpack.c.bf16 %v1518, %v1517
      %v1611 = vpack.c.bf16 %v1520, %v1519
      %v1612 = vpack.c.bf16 %v1522, %v1521
      %v1613 = vpack.c.bf16 %v1524, %v1523
      %v1614 = vpack.c.bf16 %v1526, %v1525
      %v1615 = vpack.c.bf16 %v1528, %v1527
      %v1616 = vpack.c.bf16 %v1530, %v1529
      %v1617 = vpack.c.bf16 %v1532, %v1531
      %v1618 = vpack.c.bf16 %v1534, %v1533
      %v1619 = vpack.c.bf16 %v1536, %v1535
      %v1620 = vpack.c.bf16 %v1538, %v1537
      %v1621 = vpack.c.bf16 %v1540, %v1539
      %v1622 = vpack.c.bf16 %v1542, %v1541
      %v1623 = vpack.c.bf16 %v1544, %v1543
      %v1624 = vpack.c.bf16 %v1546, %v1545
      %v1625 = vpack.c.bf16 %v1548, %v1547
      %v1626 = vpack.c.bf16 %v1550, %v1549
      %v1627 = vpack.c.bf16 %v1552, %v1551
      %v1628 = vpack.c.bf16 %v1554, %v1553
      %v1629 = vpack.c.bf16 %v1556, %v1555
      %v1630 = vpack.c.bf16 %v1558, %v1557
      %v1631 = vpack.c.bf16 %v1560, %v1559
      %v1632 = vpack.c.bf16 %v1562, %v1561
      %v1633 = vpack.c.bf16 %v1564, %v1563
      %v1634 = vpack.c.bf16 %v1566, %v1565
      %v1635 = vpack.c.bf16 %v1568, %v1567
      %v1636 = vpack.c.bf16 %v1570, %v1569
      %v1637 = vpack.c.bf16 %v1572, %v1571
      %v1638 = vpack.c.bf16 %v1574, %v1573
      %v1639 = vld [vmem:[%s2] sm:$0xf]
      %v1640 = vld [vmem:[%s2 + $0x4] sm:$0xf]
      %v1641 = vld [vmem:[%s2 + $0x8] sm:$0xf]
      %v1642 = vld [vmem:[%s2 + $0xc] sm:$0xf]
      %v1643 = vld [vmem:[%s2 + $0x10] sm:$0xf]
      %v1644 = vld [vmem:[%s2 + $0x14] sm:$0xf]
      %v1645 = vld [vmem:[%s2 + $0x18] sm:$0xf]
      %v1646 = vld [vmem:[%s2 + $0x1c] sm:$0xf]
      %v1655 = vunpack.c.l.b16 %v1639
      %v1656 = vunpack.c.l.b16 %v1640
      %v1657 = vunpack.c.l.b16 %v1641
      %v1658 = vunpack.c.l.b16 %v1642
      %v1659 = vunpack.c.l.b16 %v1643
      %v1660 = vunpack.c.l.b16 %v1644
      %v1661 = vunpack.c.l.b16 %v1645
      %v1662 = vunpack.c.l.b16 %v1646
      %v1663 = vpack.c.b16 %v1656, %v1655
      %v1664 = vpack.c.b16 %v1658, %v1657
      %v1665 = vpack.c.b16 %v1660, %v1659
      %v1666 = vpack.c.b16 %v1662, %v1661
      %v1672 = vsel %vm709, %v1575, 0
      %v1675 = vsel %vm709, %v1576, 0
      %v1678 = vsel %vm709, %v1577, 0
      %v1681 = vsel %vm709, %v1578, 0
      %v1684 = vsel %vm709, %v1579, 0
      %v1687 = vsel %vm709, %v1580, 0
      %v1690 = vsel %vm709, %v1581, 0
      %v1693 = vsel %vm709, %v1582, 0
      %v1696 = vsel %vm709, %v1583, 0
      %v1699 = vsel %vm709, %v1584, 0
      %v1702 = vsel %vm709, %v1585, 0
      %v1705 = vsel %vm709, %v1586, 0
      %v1708 = vsel %vm709, %v1587, 0
      %v1711 = vsel %vm709, %v1588, 0
      %v1714 = vsel %vm709, %v1589, 0
      %v1717 = vsel %vm709, %v1590, 0
      %v1720 = vsel %vm709, %v1591, 0
      %v1723 = vsel %vm709, %v1592, 0
      %v1726 = vsel %vm709, %v1593, 0
      %v1729 = vsel %vm709, %v1594, 0
      %v1732 = vsel %vm709, %v1595, 0
      %v1735 = vsel %vm709, %v1596, 0
      %v1738 = vsel %vm709, %v1597, 0
      %v1741 = vsel %vm709, %v1598, 0
      %v1744 = vsel %vm709, %v1599, 0
      %v1747 = vsel %vm709, %v1600, 0
      %v1750 = vsel %vm709, %v1601, 0
      %v1753 = vsel %vm709, %v1602, 0
      %v1756 = vsel %vm709, %v1603, 0
      %v1759 = vsel %vm709, %v1604, 0
      %v1762 = vsel %vm709, %v1605, 0
      %v1765 = vsel %vm709, %v1606, 0
      %v1768 = vsel %vm709, %v1607, 0
      %v1771 = vsel %vm709, %v1608, 0
      %v1774 = vsel %vm709, %v1609, 0
      %v1777 = vsel %vm709, %v1610, 0
      %v1780 = vsel %vm709, %v1611, 0
      %v1783 = vsel %vm709, %v1612, 0
      %v1786 = vsel %vm709, %v1613, 0
      %v1789 = vsel %vm709, %v1614, 0
      %v1792 = vsel %vm709, %v1615, 0
      %v1795 = vsel %vm709, %v1616, 0
      %v1798 = vsel %vm709, %v1617, 0
      %v1801 = vsel %vm709, %v1618, 0
      %v1804 = vsel %vm709, %v1619, 0
      %v1807 = vsel %vm709, %v1620, 0
      %v1810 = vsel %vm709, %v1621, 0
      %v1813 = vsel %vm709, %v1622, 0
      %v1816 = vsel %vm709, %v1623, 0
      %v1819 = vsel %vm709, %v1624, 0
      %v1822 = vsel %vm709, %v1625, 0
      %v1825 = vsel %vm709, %v1626, 0
      %v1828 = vsel %vm709, %v1627, 0
      %v1831 = vsel %vm709, %v1628, 0
      %v1834 = vsel %vm709, %v1629, 0
      %v1837 = vsel %vm709, %v1630, 0
      %v1840 = vsel %vm709, %v1631, 0
      %v1843 = vsel %vm709, %v1632, 0
      %v1846 = vsel %vm709, %v1633, 0
      %v1849 = vsel %vm709, %v1634, 0
      %v1852 = vsel %vm709, %v1635, 0
      %v1855 = vsel %vm709, %v1636, 0
      %v1858 = vsel %vm709, %v1637, 0
      %v1861 = vsel %vm709, %v1638, 0
      %1863 = vmatprep.subr.bf16.mxu0 0
      %1864 = vmatpush1.bf16.msra.mxu0 %v1663
      %1865 = vmatprep.subr.bf16.mxu0 0
      %1866 = vmatpush1.bf16.msra.mxu0 %v1664
      %1867 = vmatprep.subr.bf16.mxu0 0
      %1868 = vmatpush1.bf16.msra.mxu0 %v1665
      %1869 = vmatprep.subr.bf16.mxu0 0
      %1870 = vmatpush1.bf16.msra.mxu0 %v1666
      %1871 = vmatprep.subr.bf16.mxu0 0
      %1872 = vmatpush1.bf16.msra.mxu0 0
      %1873 = vmatprep.subr.bf16.mxu0 0
      %1874 = vmatpush1.bf16.msra.mxu0 0
      %1875 = vmatprep.subr.bf16.mxu0 0
      %1876 = vmatpush1.bf16.msra.mxu0 0
      %1877 = vmatprep.subr.bf16.mxu0 0
      %1878 = vmatpush1.bf16.msra.mxu0 0
      %1879 = vmatprep.subr.bf16.mxu0 0
      %1880 = vmatpush1.bf16.msra.mxu0 0
      %1881 = vmatprep.subr.bf16.mxu0 0
      %1882 = vmatpush1.bf16.msra.mxu0 0
      %1883 = vmatprep.subr.bf16.mxu0 0
      %1884 = vmatpush1.bf16.msra.mxu0 0
      %1885 = vmatprep.subr.bf16.mxu0 0
      %1886 = vmatpush1.bf16.msra.mxu0 0
      %1887 = vmatprep.subr.bf16.mxu0 0
      %1888 = vmatpush1.bf16.msra.mxu0 0
      %1889 = vmatprep.subr.bf16.mxu0 0
      %1890 = vmatpush1.bf16.msra.mxu0 0
      %1891 = vmatprep.subr.bf16.mxu0 0
      %1892 = vmatpush1.bf16.msra.mxu0 0
      %1893 = vmatprep.subr.bf16.mxu0 0
      %1894 = vmatpush1.bf16.msra.mxu0 0
      %1895 = vmatprep.mubr.bf16.mxu0 0
      %1896 = vmatmul.mubr.bf16.gmra.mrb[0].mxu0 %v1672
      %v1897 = vpop.f32.mrb[0].mxu0
      %v1898 = vadd.f32 0.0, %v1897
      %v1899 = vpop.f32.mrb[0].mxu0
      %v1900 = vpop.f32.mrb[0].mxu0
      %v1901 = vadd.f32 0.0, %v1900
      %v1902 = vpop.f32.mrb[0].mxu0
      %1903 = vmatprep.mubr.bf16.mxu0 0
      %1904 = vmatmul.mubr.bf16.gmra.mrb[0].mxu0 %v1675
      %v1905 = vpop.f32.mrb[0].mxu0
      %v1906 = vadd.f32 0.0, %v1905
      %v1907 = vpop.f32.mrb[0].mxu0
      %v1908 = vpop.f32.mrb[0].mxu0
      %v1909 = vadd.f32 0.0, %v1908
      %v1910 = vpop.f32.mrb[0].mxu0
      %1911 = vmatprep.mubr.bf16.mxu0 0
      %1912 = vmatmul.mubr.bf16.gmra.mrb[0].mxu0 %v1678
      %v1913 = vpop.f32.mrb[0].mxu0
      %v1914 = vadd.f32 0.0, %v1913
      %v1915 = vpop.f32.mrb[0].mxu0
      %v1916 = vpop.f32.mrb[0].mxu0
      %v1917 = vadd.f32 0.0, %v1916
      %v1918 = vpop.f32.mrb[0].mxu0
      %1919 = vmatprep.mubr.bf16.mxu0 0
      %1920 = vmatmul.mubr.bf16.gmra.mrb[0].mxu0 %v1681
      %v1921 = vpop.f32.mrb[0].mxu0
      %v1922 = vadd.f32 0.0, %v1921
      %v1923 = vpop.f32.mrb[0].mxu0
      %v1924 = vpop.f32.mrb[0].mxu0
      %v1925 = vadd.f32 0.0, %v1924
      %v1926 = vpop.f32.mrb[0].mxu0
      %1927 = vmatprep.mubr.bf16.mxu0 0
      %1928 = vmatmul.mubr.bf16.gmra.mrb[0].mxu0 %v1684
      %v1929 = vpop.f32.mrb[0].mxu0
      %v1930 = vadd.f32 0.0, %v1929
      %v1931 = vpop.f32.mrb[0].mxu0
      %v1932 = vpop.f32.mrb[0].mxu0
      %v1933 = vadd.f32 0.0, %v1932
      %v1934 = vpop.f32.mrb[0].mxu0
      %1935 = vmatprep.mubr.bf16.mxu0 0
      %1936 = vmatmul.mubr.bf16.gmra.mrb[0].mxu0 %v1687
      %v1937 = vpop.f32.mrb[0].mxu0
      %v1938 = vadd.f32 0.0, %v1937
      %v1939 = vpop.f32.mrb[0].mxu0
      %v1940 = vpop.f32.mrb[0].mxu0
      %v1941 = vadd.f32 0.0, %v1940
      %v1942 = vpop.f32.mrb[0].mxu0
      %1943 = vmatprep.mubr.bf16.mxu0 0
      %1944 = vmatmul.mubr.bf16.gmra.mrb[0].mxu0 %v1690
      %v1945 = vpop.f32.mrb[0].mxu0
      %v1946 = vadd.f32 0.0, %v1945
      %v1947 = vpop.f32.mrb[0].mxu0
      %v1948 = vpop.f32.mrb[0].mxu0
      %v1949 = vadd.f32 0.0, %v1948
      %v1950 = vpop.f32.mrb[0].mxu0
      %1951 = vmatprep.mubr.bf16.mxu0 0
      %1952 = vmatmul.mubr.bf16.gmra.mrb[0].mxu0 %v1693
      %v1953 = vpop.f32.mrb[0].mxu0
      %v1954 = vadd.f32 0.0, %v1953
      %v1955 = vpop.f32.mrb[0].mxu0
      %v1956 = vpop.f32.mrb[0].mxu0
      %v1957 = vadd.f32 0.0, %v1956
      %v1958 = vpop.f32.mrb[0].mxu0
      %1959 = vmatprep.mubr.bf16.mxu0 0
      %1960 = vmatmul.mubr.bf16.gmra.mrb[0].mxu0 %v1696
      %v1961 = vpop.f32.mrb[0].mxu0
      %v1962 = vadd.f32 0.0, %v1961
      %v1963 = vpop.f32.mrb[0].mxu0
      %v1964 = vpop.f32.mrb[0].mxu0
      %v1965 = vadd.f32 0.0, %v1964
      %v1966 = vpop.f32.mrb[0].mxu0
      %1967 = vmatprep.mubr.bf16.mxu0 0
      %1968 = vmatmul.mubr.bf16.gmra.mrb[0].mxu0 %v1699
      %v1969 = vpop.f32.mrb[0].mxu0
      %v1970 = vadd.f32 0.0, %v1969
      %v1971 = vpop.f32.mrb[0].mxu0
      %v1972 = vpop.f32.mrb[0].mxu0
      %v1973 = vadd.f32 0.0, %v1972
      %v1974 = vpop.f32.mrb[0].mxu0
      %1975 = vmatprep.mubr.bf16.mxu0 0
      %1976 = vmatmul.mubr.bf16.gmra.mrb[0].mxu0 %v1702
      %v1977 = vpop.f32.mrb[0].mxu0
      %v1978 = vadd.f32 0.0, %v1977
      %v1979 = vpop.f32.mrb[0].mxu0
      %v1980 = vpop.f32.mrb[0].mxu0
      %v1981 = vadd.f32 0.0, %v1980
      %v1982 = vpop.f32.mrb[0].mxu0
      %1983 = vmatprep.mubr.bf16.mxu0 0
      %1984 = vmatmul.mubr.bf16.gmra.mrb[0].mxu0 %v1705
      %v1985 = vpop.f32.mrb[0].mxu0
      %v1986 = vadd.f32 0.0, %v1985
      %v1987 = vpop.f32.mrb[0].mxu0
      %v1988 = vpop.f32.mrb[0].mxu0
      %v1989 = vadd.f32 0.0, %v1988
      %v1990 = vpop.f32.mrb[0].mxu0
      %1991 = vmatprep.mubr.bf16.mxu0 0
      %1992 = vmatmul.mubr.bf16.gmra.mrb[0].mxu0 %v1708
      %v1993 = vpop.f32.mrb[0].mxu0
      %v1994 = vadd.f32 0.0, %v1993
      %v1995 = vpop.f32.mrb[0].mxu0
      %v1996 = vpop.f32.mrb[0].mxu0
      %v1997 = vadd.f32 0.0, %v1996
      %v1998 = vpop.f32.mrb[0].mxu0
      %1999 = vmatprep.mubr.bf16.mxu0 0
      %2000 = vmatmul.mubr.bf16.gmra.mrb[0].mxu0 %v1711
      %v2001 = vpop.f32.mrb[0].mxu0
      %v2002 = vadd.f32 0.0, %v2001
      %v2003 = vpop.f32.mrb[0].mxu0
      %v2004 = vpop.f32.mrb[0].mxu0
      %v2005 = vadd.f32 0.0, %v2004
      %v2006 = vpop.f32.mrb[0].mxu0
      %2007 = vmatprep.mubr.bf16.mxu0 0
      %2008 = vmatmul.mubr.bf16.gmra.mrb[0].mxu0 %v1714
      %v2009 = vpop.f32.mrb[0].mxu0
      %v2010 = vadd.f32 0.0, %v2009
      %v2011 = vpop.f32.mrb[0].mxu0
      %v2012 = vpop.f32.mrb[0].mxu0
      %v2013 = vadd.f32 0.0, %v2012
      %v2014 = vpop.f32.mrb[0].mxu0
      %2015 = vmatprep.mubr.bf16.mxu0 0
      %2016 = vmatmul.mubr.bf16.gmra.mrb[0].mxu0 %v1717
      %v2017 = vpop.f32.mrb[0].mxu0
      %v2018 = vadd.f32 0.0, %v2017
      %v2019 = vpop.f32.mrb[0].mxu0
      %v2020 = vpop.f32.mrb[0].mxu0
      %v2021 = vadd.f32 0.0, %v2020
      %v2022 = vpop.f32.mrb[0].mxu0
      %2023 = vmatprep.mubr.bf16.mxu0 0
      %2024 = vmatmul.mubr.bf16.gmra.mrb[0].mxu0 %v1720
      %v2025 = vpop.f32.mrb[0].mxu0
      %v2026 = vadd.f32 0.0, %v2025
      %v2027 = vpop.f32.mrb[0].mxu0
      %v2028 = vpop.f32.mrb[0].mxu0
      %v2029 = vadd.f32 0.0, %v2028
      %v2030 = vpop.f32.mrb[0].mxu0
      %2031 = vmatprep.mubr.bf16.mxu0 0
      %2032 = vmatmul.mubr.bf16.gmra.mrb[0].mxu0 %v1723
      %v2033 = vpop.f32.mrb[0].mxu0
      %v2034 = vadd.f32 0.0, %v2033
      %v2035 = vpop.f32.mrb[0].mxu0
      %v2036 = vpop.f32.mrb[0].mxu0
      %v2037 = vadd.f32 0.0, %v2036
      %v2038 = vpop.f32.mrb[0].mxu0
      %2039 = vmatprep.mubr.bf16.mxu0 0
      %2040 = vmatmul.mubr.bf16.gmra.mrb[0].mxu0 %v1726
      %v2041 = vpop.f32.mrb[0].mxu0
      %v2042 = vadd.f32 0.0, %v2041
      %v2043 = vpop.f32.mrb[0].mxu0
      %v2044 = vpop.f32.mrb[0].mxu0
      %v2045 = vadd.f32 0.0, %v2044
      %v2046 = vpop.f32.mrb[0].mxu0
      %2047 = vmatprep.mubr.bf16.mxu0 0
      %2048 = vmatmul.mubr.bf16.gmra.mrb[0].mxu0 %v1729
      %v2049 = vpop.f32.mrb[0].mxu0
      %v2050 = vadd.f32 0.0, %v2049
      %v2051 = vpop.f32.mrb[0].mxu0
      %v2052 = vpop.f32.mrb[0].mxu0
      %v2053 = vadd.f32 0.0, %v2052
      %v2054 = vpop.f32.mrb[0].mxu0
      %2055 = vmatprep.mubr.bf16.mxu0 0
      %2056 = vmatmul.mubr.bf16.gmra.mrb[0].mxu0 %v1732
      %v2057 = vpop.f32.mrb[0].mxu0
      %v2058 = vadd.f32 0.0, %v2057
      %v2059 = vpop.f32.mrb[0].mxu0
      %v2060 = vpop.f32.mrb[0].mxu0
      %v2061 = vadd.f32 0.0, %v2060
      %v2062 = vpop.f32.mrb[0].mxu0
      %2063 = vmatprep.mubr.bf16.mxu0 0
      %2064 = vmatmul.mubr.bf16.gmra.mrb[0].mxu0 %v1735
      %v2065 = vpop.f32.mrb[0].mxu0
      %v2066 = vadd.f32 0.0, %v2065
      %v2067 = vpop.f32.mrb[0].mxu0
      %v2068 = vpop.f32.mrb[0].mxu0
      %v2069 = vadd.f32 0.0, %v2068
      %v2070 = vpop.f32.mrb[0].mxu0
      %2071 = vmatprep.mubr.bf16.mxu0 0
      %2072 = vmatmul.mubr.bf16.gmra.mrb[0].mxu0 %v1738
      %v2073 = vpop.f32.mrb[0].mxu0
      %v2074 = vadd.f32 0.0, %v2073
      %v2075 = vpop.f32.mrb[0].mxu0
      %v2076 = vpop.f32.mrb[0].mxu0
      %v2077 = vadd.f32 0.0, %v2076
      %v2078 = vpop.f32.mrb[0].mxu0
      %2079 = vmatprep.mubr.bf16.mxu0 0
      %2080 = vmatmul.mubr.bf16.gmra.mrb[0].mxu0 %v1741
      %v2081 = vpop.f32.mrb[0].mxu0
      %v2082 = vadd.f32 0.0, %v2081
      %v2083 = vpop.f32.mrb[0].mxu0
      %v2084 = vpop.f32.mrb[0].mxu0
      %v2085 = vadd.f32 0.0, %v2084
      %v2086 = vpop.f32.mrb[0].mxu0
      %2087 = vmatprep.mubr.bf16.mxu0 0
      %2088 = vmatmul.mubr.bf16.gmra.mrb[0].mxu0 %v1744
      %v2089 = vpop.f32.mrb[0].mxu0
      %v2090 = vadd.f32 0.0, %v2089
      %v2091 = vpop.f32.mrb[0].mxu0
      %v2092 = vpop.f32.mrb[0].mxu0
      %v2093 = vadd.f32 0.0, %v2092
      %v2094 = vpop.f32.mrb[0].mxu0
      %2095 = vmatprep.mubr.bf16.mxu0 0
      %2096 = vmatmul.mubr.bf16.gmra.mrb[0].mxu0 %v1747
      %v2097 = vpop.f32.mrb[0].mxu0
      %v2098 = vadd.f32 0.0, %v2097
      %v2099 = vpop.f32.mrb[0].mxu0
      %v2100 = vpop.f32.mrb[0].mxu0
      %v2101 = vadd.f32 0.0, %v2100
      %v2102 = vpop.f32.mrb[0].mxu0
      %2103 = vmatprep.mubr.bf16.mxu0 0
      %2104 = vmatmul.mubr.bf16.gmra.mrb[0].mxu0 %v1750
      %v2105 = vpop.f32.mrb[0].mxu0
      %v2106 = vadd.f32 0.0, %v2105
      %v2107 = vpop.f32.mrb[0].mxu0
      %v2108 = vpop.f32.mrb[0].mxu0
      %v2109 = vadd.f32 0.0, %v2108
      %v2110 = vpop.f32.mrb[0].mxu0
      %2111 = vmatprep.mubr.bf16.mxu0 0
      %2112 = vmatmul.mubr.bf16.gmra.mrb[0].mxu0 %v1753
      %v2113 = vpop.f32.mrb[0].mxu0
      %v2114 = vadd.f32 0.0, %v2113
      %v2115 = vpop.f32.mrb[0].mxu0
      %v2116 = vpop.f32.mrb[0].mxu0
      %v2117 = vadd.f32 0.0, %v2116
      %v2118 = vpop.f32.mrb[0].mxu0
      %2119 = vmatprep.mubr.bf16.mxu0 0
      %2120 = vmatmul.mubr.bf16.gmra.mrb[0].mxu0 %v1756
      %v2121 = vpop.f32.mrb[0].mxu0
      %v2122 = vadd.f32 0.0, %v2121
      %v2123 = vpop.f32.mrb[0].mxu0
      %v2124 = vpop.f32.mrb[0].mxu0
      %v2125 = vadd.f32 0.0, %v2124
      %v2126 = vpop.f32.mrb[0].mxu0
      %2127 = vmatprep.mubr.bf16.mxu0 0
      %2128 = vmatmul.mubr.bf16.gmra.mrb[0].mxu0 %v1759
      %v2129 = vpop.f32.mrb[0].mxu0
      %v2130 = vadd.f32 0.0, %v2129
      %v2131 = vpop.f32.mrb[0].mxu0
      %v2132 = vpop.f32.mrb[0].mxu0
      %v2133 = vadd.f32 0.0, %v2132
      %v2134 = vpop.f32.mrb[0].mxu0
      %2135 = vmatprep.mubr.bf16.mxu0 0
      %2136 = vmatmul.mubr.bf16.gmra.mrb[0].mxu0 %v1762
      %v2137 = vpop.f32.mrb[0].mxu0
      %v2138 = vadd.f32 0.0, %v2137
      %v2139 = vpop.f32.mrb[0].mxu0
      %v2140 = vpop.f32.mrb[0].mxu0
      %v2141 = vadd.f32 0.0, %v2140
      %v2142 = vpop.f32.mrb[0].mxu0
      %2143 = vmatprep.mubr.bf16.mxu0 0
      %2144 = vmatmul.mubr.bf16.gmra.mrb[0].mxu0 %v1765
      %v2145 = vpop.f32.mrb[0].mxu0
      %v2146 = vadd.f32 0.0, %v2145
      %v2147 = vpop.f32.mrb[0].mxu0
      %v2148 = vpop.f32.mrb[0].mxu0
      %v2149 = vadd.f32 0.0, %v2148
      %v2150 = vpop.f32.mrb[0].mxu0
      %2151 = vmatprep.mubr.bf16.mxu0 0
      %2152 = vmatmul.mubr.bf16.gmra.mrb[0].mxu0 %v1768
      %v2153 = vpop.f32.mrb[0].mxu0
      %v2154 = vadd.f32 0.0, %v2153
      %v2155 = vpop.f32.mrb[0].mxu0
      %v2156 = vpop.f32.mrb[0].mxu0
      %v2157 = vadd.f32 0.0, %v2156
      %v2158 = vpop.f32.mrb[0].mxu0
      %2159 = vmatprep.mubr.bf16.mxu0 0
      %2160 = vmatmul.mubr.bf16.gmra.mrb[0].mxu0 %v1771
      %v2161 = vpop.f32.mrb[0].mxu0
      %v2162 = vadd.f32 0.0, %v2161
      %v2163 = vpop.f32.mrb[0].mxu0
      %v2164 = vpop.f32.mrb[0].mxu0
      %v2165 = vadd.f32 0.0, %v2164
      %v2166 = vpop.f32.mrb[0].mxu0
      %2167 = vmatprep.mubr.bf16.mxu0 0
      %2168 = vmatmul.mubr.bf16.gmra.mrb[0].mxu0 %v1774
      %v2169 = vpop.f32.mrb[0].mxu0
      %v2170 = vadd.f32 0.0, %v2169
      %v2171 = vpop.f32.mrb[0].mxu0
      %v2172 = vpop.f32.mrb[0].mxu0
      %v2173 = vadd.f32 0.0, %v2172
      %v2174 = vpop.f32.mrb[0].mxu0
      %2175 = vmatprep.mubr.bf16.mxu0 0
      %2176 = vmatmul.mubr.bf16.gmra.mrb[0].mxu0 %v1777
      %v2177 = vpop.f32.mrb[0].mxu0
      %v2178 = vadd.f32 0.0, %v2177
      %v2179 = vpop.f32.mrb[0].mxu0
      %v2180 = vpop.f32.mrb[0].mxu0
      %v2181 = vadd.f32 0.0, %v2180
      %v2182 = vpop.f32.mrb[0].mxu0
      %2183 = vmatprep.mubr.bf16.mxu0 0
      %2184 = vmatmul.mubr.bf16.gmra.mrb[0].mxu0 %v1780
      %v2185 = vpop.f32.mrb[0].mxu0
      %v2186 = vadd.f32 0.0, %v2185
      %v2187 = vpop.f32.mrb[0].mxu0
      %v2188 = vpop.f32.mrb[0].mxu0
      %v2189 = vadd.f32 0.0, %v2188
      %v2190 = vpop.f32.mrb[0].mxu0
      %2191 = vmatprep.mubr.bf16.mxu0 0
      %2192 = vmatmul.mubr.bf16.gmra.mrb[0].mxu0 %v1783
      %v2193 = vpop.f32.mrb[0].mxu0
      %v2194 = vadd.f32 0.0, %v2193
      %v2195 = vpop.f32.mrb[0].mxu0
      %v2196 = vpop.f32.mrb[0].mxu0
      %v2197 = vadd.f32 0.0, %v2196
      %v2198 = vpop.f32.mrb[0].mxu0
      %2199 = vmatprep.mubr.bf16.mxu0 0
      %2200 = vmatmul.mubr.bf16.gmra.mrb[0].mxu0 %v1786
      %v2201 = vpop.f32.mrb[0].mxu0
      %v2202 = vadd.f32 0.0, %v2201
      %v2203 = vpop.f32.mrb[0].mxu0
      %v2204 = vpop.f32.mrb[0].mxu0
      %v2205 = vadd.f32 0.0, %v2204
      %v2206 = vpop.f32.mrb[0].mxu0
      %2207 = vmatprep.mubr.bf16.mxu0 0
      %2208 = vmatmul.mubr.bf16.gmra.mrb[0].mxu0 %v1789
      %v2209 = vpop.f32.mrb[0].mxu0
      %v2210 = vadd.f32 0.0, %v2209
      %v2211 = vpop.f32.mrb[0].mxu0
      %v2212 = vpop.f32.mrb[0].mxu0
      %v2213 = vadd.f32 0.0, %v2212
      %v2214 = vpop.f32.mrb[0].mxu0
      %2215 = vmatprep.mubr.bf16.mxu0 0
      %2216 = vmatmul.mubr.bf16.gmra.mrb[0].mxu0 %v1792
      %v2217 = vpop.f32.mrb[0].mxu0
      %v2218 = vadd.f32 0.0, %v2217
      %v2219 = vpop.f32.mrb[0].mxu0
      %v2220 = vpop.f32.mrb[0].mxu0
      %v2221 = vadd.f32 0.0, %v2220
      %v2222 = vpop.f32.mrb[0].mxu0
      %2223 = vmatprep.mubr.bf16.mxu0 0
      %2224 = vmatmul.mubr.bf16.gmra.mrb[0].mxu0 %v1795
      %v2225 = vpop.f32.mrb[0].mxu0
      %v2226 = vadd.f32 0.0, %v2225
      %v2227 = vpop.f32.mrb[0].mxu0
      %v2228 = vpop.f32.mrb[0].mxu0
      %v2229 = vadd.f32 0.0, %v2228
      %v2230 = vpop.f32.mrb[0].mxu0
      %2231 = vmatprep.mubr.bf16.mxu0 0
      %2232 = vmatmul.mubr.bf16.gmra.mrb[0].mxu0 %v1798
      %v2233 = vpop.f32.mrb[0].mxu0
      %v2234 = vadd.f32 0.0, %v2233
      %v2235 = vpop.f32.mrb[0].mxu0
      %v2236 = vpop.f32.mrb[0].mxu0
      %v2237 = vadd.f32 0.0, %v2236
      %v2238 = vpop.f32.mrb[0].mxu0
      %2239 = vmatprep.mubr.bf16.mxu0 0
      %2240 = vmatmul.mubr.bf16.gmra.mrb[0].mxu0 %v1801
      %v2241 = vpop.f32.mrb[0].mxu0
      %v2242 = vadd.f32 0.0, %v2241
      %v2243 = vpop.f32.mrb[0].mxu0
      %v2244 = vpop.f32.mrb[0].mxu0
      %v2245 = vadd.f32 0.0, %v2244
      %v2246 = vpop.f32.mrb[0].mxu0
      %2247 = vmatprep.mubr.bf16.mxu0 0
      %2248 = vmatmul.mubr.bf16.gmra.mrb[0].mxu0 %v1804
      %v2249 = vpop.f32.mrb[0].mxu0
      %v2250 = vadd.f32 0.0, %v2249
      %v2251 = vpop.f32.mrb[0].mxu0
      %v2252 = vpop.f32.mrb[0].mxu0
      %v2253 = vadd.f32 0.0, %v2252
      %v2254 = vpop.f32.mrb[0].mxu0
      %2255 = vmatprep.mubr.bf16.mxu0 0
      %2256 = vmatmul.mubr.bf16.gmra.mrb[0].mxu0 %v1807
      %v2257 = vpop.f32.mrb[0].mxu0
      %v2258 = vadd.f32 0.0, %v2257
      %v2259 = vpop.f32.mrb[0].mxu0
      %v2260 = vpop.f32.mrb[0].mxu0
      %v2261 = vadd.f32 0.0, %v2260
      %v2262 = vpop.f32.mrb[0].mxu0
      %2263 = vmatprep.mubr.bf16.mxu0 0
      %2264 = vmatmul.mubr.bf16.gmra.mrb[0].mxu0 %v1810
      %v2265 = vpop.f32.mrb[0].mxu0
      %v2266 = vadd.f32 0.0, %v2265
      %v2267 = vpop.f32.mrb[0].mxu0
      %v2268 = vpop.f32.mrb[0].mxu0
      %v2269 = vadd.f32 0.0, %v2268
      %v2270 = vpop.f32.mrb[0].mxu0
      %2271 = vmatprep.mubr.bf16.mxu0 0
      %2272 = vmatmul.mubr.bf16.gmra.mrb[0].mxu0 %v1813
      %v2273 = vpop.f32.mrb[0].mxu0
      %v2274 = vadd.f32 0.0, %v2273
      %v2275 = vpop.f32.mrb[0].mxu0
      %v2276 = vpop.f32.mrb[0].mxu0
      %v2277 = vadd.f32 0.0, %v2276
      %v2278 = vpop.f32.mrb[0].mxu0
      %2279 = vmatprep.mubr.bf16.mxu0 0
      %2280 = vmatmul.mubr.bf16.gmra.mrb[0].mxu0 %v1816
      %v2281 = vpop.f32.mrb[0].mxu0
      %v2282 = vadd.f32 0.0, %v2281
      %v2283 = vpop.f32.mrb[0].mxu0
      %v2284 = vpop.f32.mrb[0].mxu0
      %v2285 = vadd.f32 0.0, %v2284
      %v2286 = vpop.f32.mrb[0].mxu0
      %2287 = vmatprep.mubr.bf16.mxu0 0
      %2288 = vmatmul.mubr.bf16.gmra.mrb[0].mxu0 %v1819
      %v2289 = vpop.f32.mrb[0].mxu0
      %v2290 = vadd.f32 0.0, %v2289
      %v2291 = vpop.f32.mrb[0].mxu0
      %v2292 = vpop.f32.mrb[0].mxu0
      %v2293 = vadd.f32 0.0, %v2292
      %v2294 = vpop.f32.mrb[0].mxu0
      %2295 = vmatprep.mubr.bf16.mxu0 0
      %2296 = vmatmul.mubr.bf16.gmra.mrb[0].mxu0 %v1822
      %v2297 = vpop.f32.mrb[0].mxu0
      %v2298 = vadd.f32 0.0, %v2297
      %v2299 = vpop.f32.mrb[0].mxu0
      %v2300 = vpop.f32.mrb[0].mxu0
      %v2301 = vadd.f32 0.0, %v2300
      %v2302 = vpop.f32.mrb[0].mxu0
      %2303 = vmatprep.mubr.bf16.mxu0 0
      %2304 = vmatmul.mubr.bf16.gmra.mrb[0].mxu0 %v1825
      %v2305 = vpop.f32.mrb[0].mxu0
      %v2306 = vadd.f32 0.0, %v2305
      %v2307 = vpop.f32.mrb[0].mxu0
      %v2308 = vpop.f32.mrb[0].mxu0
      %v2309 = vadd.f32 0.0, %v2308
      %v2310 = vpop.f32.mrb[0].mxu0
      %2311 = vmatprep.mubr.bf16.mxu0 0
      %2312 = vmatmul.mubr.bf16.gmra.mrb[0].mxu0 %v1828
      %v2313 = vpop.f32.mrb[0].mxu0
      %v2314 = vadd.f32 0.0, %v2313
      %v2315 = vpop.f32.mrb[0].mxu0
      %v2316 = vpop.f32.mrb[0].mxu0
      %v2317 = vadd.f32 0.0, %v2316
      %v2318 = vpop.f32.mrb[0].mxu0
      %2319 = vmatprep.mubr.bf16.mxu0 0
      %2320 = vmatmul.mubr.bf16.gmra.mrb[0].mxu0 %v1831
      %v2321 = vpop.f32.mrb[0].mxu0
      %v2322 = vadd.f32 0.0, %v2321
      %v2323 = vpop.f32.mrb[0].mxu0
      %v2324 = vpop.f32.mrb[0].mxu0
      %v2325 = vadd.f32 0.0, %v2324
      %v2326 = vpop.f32.mrb[0].mxu0
      %2327 = vmatprep.mubr.bf16.mxu0 0
      %2328 = vmatmul.mubr.bf16.gmra.mrb[0].mxu0 %v1834
      %v2329 = vpop.f32.mrb[0].mxu0
      %v2330 = vadd.f32 0.0, %v2329
      %v2331 = vpop.f32.mrb[0].mxu0
      %v2332 = vpop.f32.mrb[0].mxu0
      %v2333 = vadd.f32 0.0, %v2332
      %v2334 = vpop.f32.mrb[0].mxu0
      %2335 = vmatprep.mubr.bf16.mxu0 0
      %2336 = vmatmul.mubr.bf16.gmra.mrb[0].mxu0 %v1837
      %v2337 = vpop.f32.mrb[0].mxu0
      %v2338 = vadd.f32 0.0, %v2337
      %v2339 = vpop.f32.mrb[0].mxu0
      %v2340 = vpop.f32.mrb[0].mxu0
      %v2341 = vadd.f32 0.0, %v2340
      %v2342 = vpop.f32.mrb[0].mxu0
      %2343 = vmatprep.mubr.bf16.mxu0 0
      %2344 = vmatmul.mubr.bf16.gmra.mrb[0].mxu0 %v1840
      %v2345 = vpop.f32.mrb[0].mxu0
      %v2346 = vadd.f32 0.0, %v2345
      %v2347 = vpop.f32.mrb[0].mxu0
      %v2348 = vpop.f32.mrb[0].mxu0
      %v2349 = vadd.f32 0.0, %v2348
      %v2350 = vpop.f32.mrb[0].mxu0
      %2351 = vmatprep.mubr.bf16.mxu0 0
      %2352 = vmatmul.mubr.bf16.gmra.mrb[0].mxu0 %v1843
      %v2353 = vpop.f32.mrb[0].mxu0
      %v2354 = vadd.f32 0.0, %v2353
      %v2355 = vpop.f32.mrb[0].mxu0
      %v2356 = vpop.f32.mrb[0].mxu0
      %v2357 = vadd.f32 0.0, %v2356
      %v2358 = vpop.f32.mrb[0].mxu0
      %2359 = vmatprep.mubr.bf16.mxu0 0
      %2360 = vmatmul.mubr.bf16.gmra.mrb[0].mxu0 %v1846
      %v2361 = vpop.f32.mrb[0].mxu0
      %v2362 = vadd.f32 0.0, %v2361
      %v2363 = vpop.f32.mrb[0].mxu0
      %v2364 = vpop.f32.mrb[0].mxu0
      %v2365 = vadd.f32 0.0, %v2364
      %v2366 = vpop.f32.mrb[0].mxu0
      %2367 = vmatprep.mubr.bf16.mxu0 0
      %2368 = vmatmul.mubr.bf16.gmra.mrb[0].mxu0 %v1849
      %v2369 = vpop.f32.mrb[0].mxu0
      %v2370 = vadd.f32 0.0, %v2369
      %v2371 = vpop.f32.mrb[0].mxu0
      %v2372 = vpop.f32.mrb[0].mxu0
      %v2373 = vadd.f32 0.0, %v2372
      %v2374 = vpop.f32.mrb[0].mxu0
      %2375 = vmatprep.mubr.bf16.mxu0 0
      %2376 = vmatmul.mubr.bf16.gmra.mrb[0].mxu0 %v1852
      %v2377 = vpop.f32.mrb[0].mxu0
      %v2378 = vadd.f32 0.0, %v2377
      %v2379 = vpop.f32.mrb[0].mxu0
      %v2380 = vpop.f32.mrb[0].mxu0
      %v2381 = vadd.f32 0.0, %v2380
      %v2382 = vpop.f32.mrb[0].mxu0
      %2383 = vmatprep.mubr.bf16.mxu0 0
      %2384 = vmatmul.mubr.bf16.gmra.mrb[0].mxu0 %v1855
      %v2385 = vpop.f32.mrb[0].mxu0
      %v2386 = vadd.f32 0.0, %v2385
      %v2387 = vpop.f32.mrb[0].mxu0
      %v2388 = vpop.f32.mrb[0].mxu0
      %v2389 = vadd.f32 0.0, %v2388
      %v2390 = vpop.f32.mrb[0].mxu0
      %2391 = vmatprep.mubr.bf16.mxu0 0
      %2392 = vmatmul.mubr.bf16.gmra.mrb[0].mxu0 %v1858
      %v2393 = vpop.f32.mrb[0].mxu0
      %v2394 = vadd.f32 0.0, %v2393
      %v2395 = vpop.f32.mrb[0].mxu0
      %v2396 = vpop.f32.mrb[0].mxu0
      %v2397 = vadd.f32 0.0, %v2396
      %v2398 = vpop.f32.mrb[0].mxu0
      %2399 = vmatprep.mubr.bf16.mxu0 0
      %2400 = vmatmul.mubr.bf16.gmra.mrb[0].mxu0 %v1861
      %v2401 = vpop.f32.mrb[0].mxu0
      %v2402 = vadd.f32 0.0, %v2401
      %v2403 = vpop.f32.mrb[0].mxu0
      %v2404 = vpop.f32.mrb[0].mxu0
      %v2405 = vadd.f32 0.0, %v2404
      %v2406 = vpop.f32.mrb[0].mxu0
      %2407 = vdwg.mxu0
      %v2408 = vmax.f32 %v1898, 0.0
      %v2409 = vmax.f32 %v1901, 0.0
      %v2410 = vmax.f32 %v1906, 0.0
      %v2411 = vmax.f32 %v1909, 0.0
      %v2412 = vmax.f32 %v1914, 0.0
      %v2413 = vmax.f32 %v1917, 0.0
      %v2414 = vmax.f32 %v1922, 0.0
      %v2415 = vmax.f32 %v1925, 0.0
      %v2416 = vmax.f32 %v1930, 0.0
      %v2417 = vmax.f32 %v1933, 0.0
      %v2418 = vmax.f32 %v1938, 0.0
      %v2419 = vmax.f32 %v1941, 0.0
      %v2420 = vmax.f32 %v1946, 0.0
      %v2421 = vmax.f32 %v1949, 0.0
      %v2422 = vmax.f32 %v1954, 0.0
      %v2423 = vmax.f32 %v1957, 0.0
      %v2424 = vmax.f32 %v1962, 0.0
      %v2425 = vmax.f32 %v1965, 0.0
      %v2426 = vmax.f32 %v1970, 0.0
      %v2427 = vmax.f32 %v1973, 0.0
      %v2428 = vmax.f32 %v1978, 0.0
      %v2429 = vmax.f32 %v1981, 0.0
      %v2430 = vmax.f32 %v1986, 0.0
      %v2431 = vmax.f32 %v1989, 0.0
      %v2432 = vmax.f32 %v1994, 0.0
      %v2433 = vmax.f32 %v1997, 0.0
      %v2434 = vmax.f32 %v2002, 0.0
      %v2435 = vmax.f32 %v2005, 0.0
      %v2436 = vmax.f32 %v2010, 0.0
      %v2437 = vmax.f32 %v2013, 0.0
      %v2438 = vmax.f32 %v2018, 0.0
      %v2439 = vmax.f32 %v2021, 0.0
      %v2440 = vmax.f32 %v2026, 0.0
      %v2441 = vmax.f32 %v2029, 0.0
      %v2442 = vmax.f32 %v2034, 0.0
      %v2443 = vmax.f32 %v2037, 0.0
      %v2444 = vmax.f32 %v2042, 0.0
      %v2445 = vmax.f32 %v2045, 0.0
      %v2446 = vmax.f32 %v2050, 0.0
      %v2447 = vmax.f32 %v2053, 0.0
      %v2448 = vmax.f32 %v2058, 0.0
      %v2449 = vmax.f32 %v2061, 0.0
      %v2450 = vmax.f32 %v2066, 0.0
      %v2451 = vmax.f32 %v2069, 0.0
      %v2452 = vmax.f32 %v2074, 0.0
      %v2453 = vmax.f32 %v2077, 0.0
      %v2454 = vmax.f32 %v2082, 0.0
      %v2455 = vmax.f32 %v2085, 0.0
      %v2456 = vmax.f32 %v2090, 0.0
      %v2457 = vmax.f32 %v2093, 0.0
      %v2458 = vmax.f32 %v2098, 0.0
      %v2459 = vmax.f32 %v2101, 0.0
      %v2460 = vmax.f32 %v2106, 0.0
      %v2461 = vmax.f32 %v2109, 0.0
      %v2462 = vmax.f32 %v2114, 0.0
      %v2463 = vmax.f32 %v2117, 0.0
      %v2464 = vmax.f32 %v2122, 0.0
      %v2465 = vmax.f32 %v2125, 0.0
      %v2466 = vmax.f32 %v2130, 0.0
      %v2467 = vmax.f32 %v2133, 0.0
      %v2468 = vmax.f32 %v2138, 0.0
      %v2469 = vmax.f32 %v2141, 0.0
      %v2470 = vmax.f32 %v2146, 0.0
      %v2471 = vmax.f32 %v2149, 0.0
      %v2472 = vmax.f32 %v2154, 0.0
      %v2473 = vmax.f32 %v2157, 0.0
      %v2474 = vmax.f32 %v2162, 0.0
      %v2475 = vmax.f32 %v2165, 0.0
      %v2476 = vmax.f32 %v2170, 0.0
      %v2477 = vmax.f32 %v2173, 0.0
      %v2478 = vmax.f32 %v2178, 0.0
      %v2479 = vmax.f32 %v2181, 0.0
      %v2480 = vmax.f32 %v2186, 0.0
      %v2481 = vmax.f32 %v2189, 0.0
      %v2482 = vmax.f32 %v2194, 0.0
      %v2483 = vmax.f32 %v2197, 0.0
      %v2484 = vmax.f32 %v2202, 0.0
      %v2485 = vmax.f32 %v2205, 0.0
      %v2486 = vmax.f32 %v2210, 0.0
      %v2487 = vmax.f32 %v2213, 0.0
      %v2488 = vmax.f32 %v2218, 0.0
      %v2489 = vmax.f32 %v2221, 0.0
      %v2490 = vmax.f32 %v2226, 0.0
      %v2491 = vmax.f32 %v2229, 0.0
      %v2492 = vmax.f32 %v2234, 0.0
      %v2493 = vmax.f32 %v2237, 0.0
      %v2494 = vmax.f32 %v2242, 0.0
      %v2495 = vmax.f32 %v2245, 0.0
      %v2496 = vmax.f32 %v2250, 0.0
      %v2497 = vmax.f32 %v2253, 0.0
      %v2498 = vmax.f32 %v2258, 0.0
      %v2499 = vmax.f32 %v2261, 0.0
      %v2500 = vmax.f32 %v2266, 0.0
      %v2501 = vmax.f32 %v2269, 0.0
      %v2502 = vmax.f32 %v2274, 0.0
      %v2503 = vmax.f32 %v2277, 0.0
      %v2504 = vmax.f32 %v2282, 0.0
      %v2505 = vmax.f32 %v2285, 0.0
      %v2506 = vmax.f32 %v2290, 0.0
      %v2507 = vmax.f32 %v2293, 0.0
      %v2508 = vmax.f32 %v2298, 0.0
      %v2509 = vmax.f32 %v2301, 0.0
      %v2510 = vmax.f32 %v2306, 0.0
      %v2511 = vmax.f32 %v2309, 0.0
      %v2512 = vmax.f32 %v2314, 0.0
      %v2513 = vmax.f32 %v2317, 0.0
      %v2514 = vmax.f32 %v2322, 0.0
      %v2515 = vmax.f32 %v2325, 0.0
      %v2516 = vmax.f32 %v2330, 0.0
      %v2517 = vmax.f32 %v2333, 0.0
      %v2518 = vmax.f32 %v2338, 0.0
      %v2519 = vmax.f32 %v2341, 0.0
      %v2520 = vmax.f32 %v2346, 0.0
      %v2521 = vmax.f32 %v2349, 0.0
      %v2522 = vmax.f32 %v2354, 0.0
      %v2523 = vmax.f32 %v2357, 0.0
      %v2524 = vmax.f32 %v2362, 0.0
      %v2525 = vmax.f32 %v2365, 0.0
      %v2526 = vmax.f32 %v2370, 0.0
      %v2527 = vmax.f32 %v2373, 0.0
      %v2528 = vmax.f32 %v2378, 0.0
      %v2529 = vmax.f32 %v2381, 0.0
      %v2530 = vmax.f32 %v2386, 0.0
      %v2531 = vmax.f32 %v2389, 0.0
      %v2532 = vmax.f32 %v2394, 0.0
      %v2533 = vmax.f32 %v2397, 0.0
      %v2534 = vmax.f32 %v2402, 0.0
      %v2535 = vmax.f32 %v2405, 0.0
      %v2536 = vpack.c.bf16 %v2409, %v2408
      %v2537 = vpack.c.bf16 %v2411, %v2410
      %v2538 = vpack.c.bf16 %v2413, %v2412
      %v2539 = vpack.c.bf16 %v2415, %v2414
      %v2540 = vpack.c.bf16 %v2417, %v2416
      %v2541 = vpack.c.bf16 %v2419, %v2418
      %v2542 = vpack.c.bf16 %v2421, %v2420
      %v2543 = vpack.c.bf16 %v2423, %v2422
      %v2544 = vpack.c.bf16 %v2425, %v2424
      %v2545 = vpack.c.bf16 %v2427, %v2426
      %v2546 = vpack.c.bf16 %v2429, %v2428
      %v2547 = vpack.c.bf16 %v2431, %v2430
      %v2548 = vpack.c.bf16 %v2433, %v2432
      %v2549 = vpack.c.bf16 %v2435, %v2434
      %v2550 = vpack.c.bf16 %v2437, %v2436
      %v2551 = vpack.c.bf16 %v2439, %v2438
      %v2552 = vpack.c.bf16 %v2441, %v2440
      %v2553 = vpack.c.bf16 %v2443, %v2442
      %v2554 = vpack.c.bf16 %v2445, %v2444
      %v2555 = vpack.c.bf16 %v2447, %v2446
      %v2556 = vpack.c.bf16 %v2449, %v2448
      %v2557 = vpack.c.bf16 %v2451, %v2450
      %v2558 = vpack.c.bf16 %v2453, %v2452
      %v2559 = vpack.c.bf16 %v2455, %v2454
      %v2560 = vpack.c.bf16 %v2457, %v2456
      %v2561 = vpack.c.bf16 %v2459, %v2458
      %v2562 = vpack.c.bf16 %v2461, %v2460
      %v2563 = vpack.c.bf16 %v2463, %v2462
      %v2564 = vpack.c.bf16 %v2465, %v2464
      %v2565 = vpack.c.bf16 %v2467, %v2466
      %v2566 = vpack.c.bf16 %v2469, %v2468
      %v2567 = vpack.c.bf16 %v2471, %v2470
      %v2568 = vpack.c.bf16 %v2473, %v2472
      %v2569 = vpack.c.bf16 %v2475, %v2474
      %v2570 = vpack.c.bf16 %v2477, %v2476
      %v2571 = vpack.c.bf16 %v2479, %v2478
      %v2572 = vpack.c.bf16 %v2481, %v2480
      %v2573 = vpack.c.bf16 %v2483, %v2482
      %v2574 = vpack.c.bf16 %v2485, %v2484
      %v2575 = vpack.c.bf16 %v2487, %v2486
      %v2576 = vpack.c.bf16 %v2489, %v2488
      %v2577 = vpack.c.bf16 %v2491, %v2490
      %v2578 = vpack.c.bf16 %v2493, %v2492
      %v2579 = vpack.c.bf16 %v2495, %v2494
      %v2580 = vpack.c.bf16 %v2497, %v2496
      %v2581 = vpack.c.bf16 %v2499, %v2498
      %v2582 = vpack.c.bf16 %v2501, %v2500
      %v2583 = vpack.c.bf16 %v2503, %v2502
      %v2584 = vpack.c.bf16 %v2505, %v2504
      %v2585 = vpack.c.bf16 %v2507, %v2506
      %v2586 = vpack.c.bf16 %v2509, %v2508
      %v2587 = vpack.c.bf16 %v2511, %v2510
      %v2588 = vpack.c.bf16 %v2513, %v2512
      %v2589 = vpack.c.bf16 %v2515, %v2514
      %v2590 = vpack.c.bf16 %v2517, %v2516
      %v2591 = vpack.c.bf16 %v2519, %v2518
      %v2592 = vpack.c.bf16 %v2521, %v2520
      %v2593 = vpack.c.bf16 %v2523, %v2522
      %v2594 = vpack.c.bf16 %v2525, %v2524
      %v2595 = vpack.c.bf16 %v2527, %v2526
      %v2596 = vpack.c.bf16 %v2529, %v2528
      %v2597 = vpack.c.bf16 %v2531, %v2530
      %v2598 = vpack.c.bf16 %v2533, %v2532
      %v2599 = vpack.c.bf16 %v2535, %v2534
      %v2600 = vld [vmem:[%s3] sm:$0xf]
      %v2601 = vld [vmem:[%s3 + $0x4] sm:$0xf]
      %v2602 = vld [vmem:[%s3 + $0x8] sm:$0xf]
      %v2603 = vld [vmem:[%s3 + $0xc] sm:$0xf]
      %v2604 = vld [vmem:[%s3 + $0x10] sm:$0xf]
      %v2605 = vld [vmem:[%s3 + $0x14] sm:$0xf]
      %v2606 = vld [vmem:[%s3 + $0x18] sm:$0xf]
      %v2607 = vld [vmem:[%s3 + $0x1c] sm:$0xf]
      %v2616 = vunpack.c.l.b16 %v2600
      %v2617 = vunpack.c.l.b16 %v2601
      %v2618 = vunpack.c.l.b16 %v2602
      %v2619 = vunpack.c.l.b16 %v2603
      %v2620 = vunpack.c.l.b16 %v2604
      %v2621 = vunpack.c.l.b16 %v2605
      %v2622 = vunpack.c.l.b16 %v2606
      %v2623 = vunpack.c.l.b16 %v2607
      %v2624 = vpack.c.b16 %v2617, %v2616
      %v2625 = vpack.c.b16 %v2619, %v2618
      %v2626 = vpack.c.b16 %v2621, %v2620
      %v2627 = vpack.c.b16 %v2623, %v2622
      %v2633 = vsel %vm709, %v2536, 0
      %v2636 = vsel %vm709, %v2537, 0
      %v2639 = vsel %vm709, %v2538, 0
      %v2642 = vsel %vm709, %v2539, 0
      %v2645 = vsel %vm709, %v2540, 0
      %v2648 = vsel %vm709, %v2541, 0
      %v2651 = vsel %vm709, %v2542, 0
      %v2654 = vsel %vm709, %v2543, 0
      %v2657 = vsel %vm709, %v2544, 0
      %v2660 = vsel %vm709, %v2545, 0
      %v2663 = vsel %vm709, %v2546, 0
      %v2666 = vsel %vm709, %v2547, 0
      %v2669 = vsel %vm709, %v2548, 0
      %v2672 = vsel %vm709, %v2549, 0
      %v2675 = vsel %vm709, %v2550, 0
      %v2678 = vsel %vm709, %v2551, 0
      %v2681 = vsel %vm709, %v2552, 0
      %v2684 = vsel %vm709, %v2553, 0
      %v2687 = vsel %vm709, %v2554, 0
      %v2690 = vsel %vm709, %v2555, 0
      %v2693 = vsel %vm709, %v2556, 0
      %v2696 = vsel %vm709, %v2557, 0
      %v2699 = vsel %vm709, %v2558, 0
      %v2702 = vsel %vm709, %v2559, 0
      %v2705 = vsel %vm709, %v2560, 0
      %v2708 = vsel %vm709, %v2561, 0
      %v2711 = vsel %vm709, %v2562, 0
      %v2714 = vsel %vm709, %v2563, 0
      %v2717 = vsel %vm709, %v2564, 0
      %v2720 = vsel %vm709, %v2565, 0
      %v2723 = vsel %vm709, %v2566, 0
      %v2726 = vsel %vm709, %v2567, 0
      %v2729 = vsel %vm709, %v2568, 0
      %v2732 = vsel %vm709, %v2569, 0
      %v2735 = vsel %vm709, %v2570, 0
      %v2738 = vsel %vm709, %v2571, 0
      %v2741 = vsel %vm709, %v2572, 0
      %v2744 = vsel %vm709, %v2573, 0
      %v2747 = vsel %vm709, %v2574, 0
      %v2750 = vsel %vm709, %v2575, 0
      %v2753 = vsel %vm709, %v2576, 0
      %v2756 = vsel %vm709, %v2577, 0
      %v2759 = vsel %vm709, %v2578, 0
      %v2762 = vsel %vm709, %v2579, 0
      %v2765 = vsel %vm709, %v2580, 0
      %v2768 = vsel %vm709, %v2581, 0
      %v2771 = vsel %vm709, %v2582, 0
      %v2774 = vsel %vm709, %v2583, 0
      %v2777 = vsel %vm709, %v2584, 0
      %v2780 = vsel %vm709, %v2585, 0
      %v2783 = vsel %vm709, %v2586, 0
      %v2786 = vsel %vm709, %v2587, 0
      %v2789 = vsel %vm709, %v2588, 0
      %v2792 = vsel %vm709, %v2589, 0
      %v2795 = vsel %vm709, %v2590, 0
      %v2798 = vsel %vm709, %v2591, 0
      %v2801 = vsel %vm709, %v2592, 0
      %v2804 = vsel %vm709, %v2593, 0
      %v2807 = vsel %vm709, %v2594, 0
      %v2810 = vsel %vm709, %v2595, 0
      %v2813 = vsel %vm709, %v2596, 0
      %v2816 = vsel %vm709, %v2597, 0
      %v2819 = vsel %vm709, %v2598, 0
      %v2822 = vsel %vm709, %v2599, 0
      %2824 = vmatprep.subr.bf16.mxu0 0
      %2825 = vmatpush1.bf16.msra.mxu0 %v2624
      %2826 = vmatprep.subr.bf16.mxu0 0
      %2827 = vmatpush1.bf16.msra.mxu0 %v2625
      %2828 = vmatprep.subr.bf16.mxu0 0
      %2829 = vmatpush1.bf16.msra.mxu0 %v2626
      %2830 = vmatprep.subr.bf16.mxu0 0
      %2831 = vmatpush1.bf16.msra.mxu0 %v2627
      %2832 = vmatprep.subr.bf16.mxu0 0
      %2833 = vmatpush1.bf16.msra.mxu0 0
      %2834 = vmatprep.subr.bf16.mxu0 0
      %2835 = vmatpush1.bf16.msra.mxu0 0
      %2836 = vmatprep.subr.bf16.mxu0 0
      %2837 = vmatpush1.bf16.msra.mxu0 0
      %2838 = vmatprep.subr.bf16.mxu0 0
      %2839 = vmatpush1.bf16.msra.mxu0 0
      %2840 = vmatprep.subr.bf16.mxu0 0
      %2841 = vmatpush1.bf16.msra.mxu0 0
      %2842 = vmatprep.subr.bf16.mxu0 0
      %2843 = vmatpush1.bf16.msra.mxu0 0
      %2844 = vmatprep.subr.bf16.mxu0 0
      %2845 = vmatpush1.bf16.msra.mxu0 0
      %2846 = vmatprep.subr.bf16.mxu0 0
      %2847 = vmatpush1.bf16.msra.mxu0 0
      %2848 = vmatprep.subr.bf16.mxu0 0
      %2849 = vmatpush1.bf16.msra.mxu0 0
      %2850 = vmatprep.subr.bf16.mxu0 0
      %2851 = vmatpush1.bf16.msra.mxu0 0
      %2852 = vmatprep.subr.bf16.mxu0 0
      %2853 = vmatpush1.bf16.msra.mxu0 0
      %2854 = vmatprep.subr.bf16.mxu0 0
      %2855 = vmatpush1.bf16.msra.mxu0 0
      %2856 = vmatprep.mubr.bf16.mxu0 0
      %2857 = vmatmul.mubr.bf16.gmra.mrb[0].mxu0 %v2633
      %v2858 = vpop.f32.mrb[0].mxu0
      %v2859 = vadd.f32 0.0, %v2858
      %v2860 = vpop.f32.mrb[0].mxu0
      %v2861 = vpop.f32.mrb[0].mxu0
      %v2862 = vadd.f32 0.0, %v2861
      %v2863 = vpop.f32.mrb[0].mxu0
      %2864 = vmatprep.mubr.bf16.mxu0 0
      %2865 = vmatmul.mubr.bf16.gmra.mrb[0].mxu0 %v2636
      %v2866 = vpop.f32.mrb[0].mxu0
      %v2867 = vadd.f32 0.0, %v2866
      %v2868 = vpop.f32.mrb[0].mxu0
      %v2869 = vpop.f32.mrb[0].mxu0
      %v2870 = vadd.f32 0.0, %v2869
      %v2871 = vpop.f32.mrb[0].mxu0
      %2872 = vmatprep.mubr.bf16.mxu0 0
      %2873 = vmatmul.mubr.bf16.gmra.mrb[0].mxu0 %v2639
      %v2874 = vpop.f32.mrb[0].mxu0
      %v2875 = vadd.f32 0.0, %v2874
      %v2876 = vpop.f32.mrb[0].mxu0
      %v2877 = vpop.f32.mrb[0].mxu0
      %v2878 = vadd.f32 0.0, %v2877
      %v2879 = vpop.f32.mrb[0].mxu0
      %2880 = vmatprep.mubr.bf16.mxu0 0
      %2881 = vmatmul.mubr.bf16.gmra.mrb[0].mxu0 %v2642
      %v2882 = vpop.f32.mrb[0].mxu0
      %v2883 = vadd.f32 0.0, %v2882
      %v2884 = vpop.f32.mrb[0].mxu0
      %v2885 = vpop.f32.mrb[0].mxu0
      %v2886 = vadd.f32 0.0, %v2885
      %v2887 = vpop.f32.mrb[0].mxu0
      %2888 = vmatprep.mubr.bf16.mxu0 0
      %2889 = vmatmul.mubr.bf16.gmra.mrb[0].mxu0 %v2645
      %v2890 = vpop.f32.mrb[0].mxu0
      %v2891 = vadd.f32 0.0, %v2890
      %v2892 = vpop.f32.mrb[0].mxu0
      %v2893 = vpop.f32.mrb[0].mxu0
      %v2894 = vadd.f32 0.0, %v2893
      %v2895 = vpop.f32.mrb[0].mxu0
      %2896 = vmatprep.mubr.bf16.mxu0 0
      %2897 = vmatmul.mubr.bf16.gmra.mrb[0].mxu0 %v2648
      %v2898 = vpop.f32.mrb[0].mxu0
      %v2899 = vadd.f32 0.0, %v2898
      %v2900 = vpop.f32.mrb[0].mxu0
      %v2901 = vpop.f32.mrb[0].mxu0
      %v2902 = vadd.f32 0.0, %v2901
      %v2903 = vpop.f32.mrb[0].mxu0
      %2904 = vmatprep.mubr.bf16.mxu0 0
      %2905 = vmatmul.mubr.bf16.gmra.mrb[0].mxu0 %v2651
      %v2906 = vpop.f32.mrb[0].mxu0
      %v2907 = vadd.f32 0.0, %v2906
      %v2908 = vpop.f32.mrb[0].mxu0
      %v2909 = vpop.f32.mrb[0].mxu0
      %v2910 = vadd.f32 0.0, %v2909
      %v2911 = vpop.f32.mrb[0].mxu0
      %2912 = vmatprep.mubr.bf16.mxu0 0
      %2913 = vmatmul.mubr.bf16.gmra.mrb[0].mxu0 %v2654
      %v2914 = vpop.f32.mrb[0].mxu0
      %v2915 = vadd.f32 0.0, %v2914
      %v2916 = vpop.f32.mrb[0].mxu0
      %v2917 = vpop.f32.mrb[0].mxu0
      %v2918 = vadd.f32 0.0, %v2917
      %v2919 = vpop.f32.mrb[0].mxu0
      %2920 = vmatprep.mubr.bf16.mxu0 0
      %2921 = vmatmul.mubr.bf16.gmra.mrb[0].mxu0 %v2657
      %v2922 = vpop.f32.mrb[0].mxu0
      %v2923 = vadd.f32 0.0, %v2922
      %v2924 = vpop.f32.mrb[0].mxu0
      %v2925 = vpop.f32.mrb[0].mxu0
      %v2926 = vadd.f32 0.0, %v2925
      %v2927 = vpop.f32.mrb[0].mxu0
      %2928 = vmatprep.mubr.bf16.mxu0 0
      %2929 = vmatmul.mubr.bf16.gmra.mrb[0].mxu0 %v2660
      %v2930 = vpop.f32.mrb[0].mxu0
      %v2931 = vadd.f32 0.0, %v2930
      %v2932 = vpop.f32.mrb[0].mxu0
      %v2933 = vpop.f32.mrb[0].mxu0
      %v2934 = vadd.f32 0.0, %v2933
      %v2935 = vpop.f32.mrb[0].mxu0
      %2936 = vmatprep.mubr.bf16.mxu0 0
      %2937 = vmatmul.mubr.bf16.gmra.mrb[0].mxu0 %v2663
      %v2938 = vpop.f32.mrb[0].mxu0
      %v2939 = vadd.f32 0.0, %v2938
      %v2940 = vpop.f32.mrb[0].mxu0
      %v2941 = vpop.f32.mrb[0].mxu0
      %v2942 = vadd.f32 0.0, %v2941
      %v2943 = vpop.f32.mrb[0].mxu0
      %2944 = vmatprep.mubr.bf16.mxu0 0
      %2945 = vmatmul.mubr.bf16.gmra.mrb[0].mxu0 %v2666
      %v2946 = vpop.f32.mrb[0].mxu0
      %v2947 = vadd.f32 0.0, %v2946
      %v2948 = vpop.f32.mrb[0].mxu0
      %v2949 = vpop.f32.mrb[0].mxu0
      %v2950 = vadd.f32 0.0, %v2949
      %v2951 = vpop.f32.mrb[0].mxu0
      %2952 = vmatprep.mubr.bf16.mxu0 0
      %2953 = vmatmul.mubr.bf16.gmra.mrb[0].mxu0 %v2669
      %v2954 = vpop.f32.mrb[0].mxu0
      %v2955 = vadd.f32 0.0, %v2954
      %v2956 = vpop.f32.mrb[0].mxu0
      %v2957 = vpop.f32.mrb[0].mxu0
      %v2958 = vadd.f32 0.0, %v2957
      %v2959 = vpop.f32.mrb[0].mxu0
      %2960 = vmatprep.mubr.bf16.mxu0 0
      %2961 = vmatmul.mubr.bf16.gmra.mrb[0].mxu0 %v2672
      %v2962 = vpop.f32.mrb[0].mxu0
      %v2963 = vadd.f32 0.0, %v2962
      %v2964 = vpop.f32.mrb[0].mxu0
      %v2965 = vpop.f32.mrb[0].mxu0
      %v2966 = vadd.f32 0.0, %v2965
      %v2967 = vpop.f32.mrb[0].mxu0
      %2968 = vmatprep.mubr.bf16.mxu0 0
      %2969 = vmatmul.mubr.bf16.gmra.mrb[0].mxu0 %v2675
      %v2970 = vpop.f32.mrb[0].mxu0
      %v2971 = vadd.f32 0.0, %v2970
      %v2972 = vpop.f32.mrb[0].mxu0
      %v2973 = vpop.f32.mrb[0].mxu0
      %v2974 = vadd.f32 0.0, %v2973
      %v2975 = vpop.f32.mrb[0].mxu0
      %2976 = vmatprep.mubr.bf16.mxu0 0
      %2977 = vmatmul.mubr.bf16.gmra.mrb[0].mxu0 %v2678
      %v2978 = vpop.f32.mrb[0].mxu0
      %v2979 = vadd.f32 0.0, %v2978
      %v2980 = vpop.f32.mrb[0].mxu0
      %v2981 = vpop.f32.mrb[0].mxu0
      %v2982 = vadd.f32 0.0, %v2981
      %v2983 = vpop.f32.mrb[0].mxu0
      %2984 = vmatprep.mubr.bf16.mxu0 0
      %2985 = vmatmul.mubr.bf16.gmra.mrb[0].mxu0 %v2681
      %v2986 = vpop.f32.mrb[0].mxu0
      %v2987 = vadd.f32 0.0, %v2986
      %v2988 = vpop.f32.mrb[0].mxu0
      %v2989 = vpop.f32.mrb[0].mxu0
      %v2990 = vadd.f32 0.0, %v2989
      %v2991 = vpop.f32.mrb[0].mxu0
      %2992 = vmatprep.mubr.bf16.mxu0 0
      %2993 = vmatmul.mubr.bf16.gmra.mrb[0].mxu0 %v2684
      %v2994 = vpop.f32.mrb[0].mxu0
      %v2995 = vadd.f32 0.0, %v2994
      %v2996 = vpop.f32.mrb[0].mxu0
      %v2997 = vpop.f32.mrb[0].mxu0
      %v2998 = vadd.f32 0.0, %v2997
      %v2999 = vpop.f32.mrb[0].mxu0
      %3000 = vmatprep.mubr.bf16.mxu0 0
      %3001 = vmatmul.mubr.bf16.gmra.mrb[0].mxu0 %v2687
      %v3002 = vpop.f32.mrb[0].mxu0
      %v3003 = vadd.f32 0.0, %v3002
      %v3004 = vpop.f32.mrb[0].mxu0
      %v3005 = vpop.f32.mrb[0].mxu0
      %v3006 = vadd.f32 0.0, %v3005
      %v3007 = vpop.f32.mrb[0].mxu0
      %3008 = vmatprep.mubr.bf16.mxu0 0
      %3009 = vmatmul.mubr.bf16.gmra.mrb[0].mxu0 %v2690
      %v3010 = vpop.f32.mrb[0].mxu0
      %v3011 = vadd.f32 0.0, %v3010
      %v3012 = vpop.f32.mrb[0].mxu0
      %v3013 = vpop.f32.mrb[0].mxu0
      %v3014 = vadd.f32 0.0, %v3013
      %v3015 = vpop.f32.mrb[0].mxu0
      %3016 = vmatprep.mubr.bf16.mxu0 0
      %3017 = vmatmul.mubr.bf16.gmra.mrb[0].mxu0 %v2693
      %v3018 = vpop.f32.mrb[0].mxu0
      %v3019 = vadd.f32 0.0, %v3018
      %v3020 = vpop.f32.mrb[0].mxu0
      %v3021 = vpop.f32.mrb[0].mxu0
      %v3022 = vadd.f32 0.0, %v3021
      %v3023 = vpop.f32.mrb[0].mxu0
      %3024 = vmatprep.mubr.bf16.mxu0 0
      %3025 = vmatmul.mubr.bf16.gmra.mrb[0].mxu0 %v2696
      %v3026 = vpop.f32.mrb[0].mxu0
      %v3027 = vadd.f32 0.0, %v3026
      %v3028 = vpop.f32.mrb[0].mxu0
      %v3029 = vpop.f32.mrb[0].mxu0
      %v3030 = vadd.f32 0.0, %v3029
      %v3031 = vpop.f32.mrb[0].mxu0
      %3032 = vmatprep.mubr.bf16.mxu0 0
      %3033 = vmatmul.mubr.bf16.gmra.mrb[0].mxu0 %v2699
      %v3034 = vpop.f32.mrb[0].mxu0
      %v3035 = vadd.f32 0.0, %v3034
      %v3036 = vpop.f32.mrb[0].mxu0
      %v3037 = vpop.f32.mrb[0].mxu0
      %v3038 = vadd.f32 0.0, %v3037
      %v3039 = vpop.f32.mrb[0].mxu0
      %3040 = vmatprep.mubr.bf16.mxu0 0
      %3041 = vmatmul.mubr.bf16.gmra.mrb[0].mxu0 %v2702
      %v3042 = vpop.f32.mrb[0].mxu0
      %v3043 = vadd.f32 0.0, %v3042
      %v3044 = vpop.f32.mrb[0].mxu0
      %v3045 = vpop.f32.mrb[0].mxu0
      %v3046 = vadd.f32 0.0, %v3045
      %v3047 = vpop.f32.mrb[0].mxu0
      %3048 = vmatprep.mubr.bf16.mxu0 0
      %3049 = vmatmul.mubr.bf16.gmra.mrb[0].mxu0 %v2705
      %v3050 = vpop.f32.mrb[0].mxu0
      %v3051 = vadd.f32 0.0, %v3050
      %v3052 = vpop.f32.mrb[0].mxu0
      %v3053 = vpop.f32.mrb[0].mxu0
      %v3054 = vadd.f32 0.0, %v3053
      %v3055 = vpop.f32.mrb[0].mxu0
      %3056 = vmatprep.mubr.bf16.mxu0 0
      %3057 = vmatmul.mubr.bf16.gmra.mrb[0].mxu0 %v2708
      %v3058 = vpop.f32.mrb[0].mxu0
      %v3059 = vadd.f32 0.0, %v3058
      %v3060 = vpop.f32.mrb[0].mxu0
      %v3061 = vpop.f32.mrb[0].mxu0
      %v3062 = vadd.f32 0.0, %v3061
      %v3063 = vpop.f32.mrb[0].mxu0
      %3064 = vmatprep.mubr.bf16.mxu0 0
      %3065 = vmatmul.mubr.bf16.gmra.mrb[0].mxu0 %v2711
      %v3066 = vpop.f32.mrb[0].mxu0
      %v3067 = vadd.f32 0.0, %v3066
      %v3068 = vpop.f32.mrb[0].mxu0
      %v3069 = vpop.f32.mrb[0].mxu0
      %v3070 = vadd.f32 0.0, %v3069
      %v3071 = vpop.f32.mrb[0].mxu0
      %3072 = vmatprep.mubr.bf16.mxu0 0
      %3073 = vmatmul.mubr.bf16.gmra.mrb[0].mxu0 %v2714
      %v3074 = vpop.f32.mrb[0].mxu0
      %v3075 = vadd.f32 0.0, %v3074
      %v3076 = vpop.f32.mrb[0].mxu0
      %v3077 = vpop.f32.mrb[0].mxu0
      %v3078 = vadd.f32 0.0, %v3077
      %v3079 = vpop.f32.mrb[0].mxu0
      %3080 = vmatprep.mubr.bf16.mxu0 0
      %3081 = vmatmul.mubr.bf16.gmra.mrb[0].mxu0 %v2717
      %v3082 = vpop.f32.mrb[0].mxu0
      %v3083 = vadd.f32 0.0, %v3082
      %v3084 = vpop.f32.mrb[0].mxu0
      %v3085 = vpop.f32.mrb[0].mxu0
      %v3086 = vadd.f32 0.0, %v3085
      %v3087 = vpop.f32.mrb[0].mxu0
      %3088 = vmatprep.mubr.bf16.mxu0 0
      %3089 = vmatmul.mubr.bf16.gmra.mrb[0].mxu0 %v2720
      %v3090 = vpop.f32.mrb[0].mxu0
      %v3091 = vadd.f32 0.0, %v3090
      %v3092 = vpop.f32.mrb[0].mxu0
      %v3093 = vpop.f32.mrb[0].mxu0
      %v3094 = vadd.f32 0.0, %v3093
      %v3095 = vpop.f32.mrb[0].mxu0
      %3096 = vmatprep.mubr.bf16.mxu0 0
      %3097 = vmatmul.mubr.bf16.gmra.mrb[0].mxu0 %v2723
      %v3098 = vpop.f32.mrb[0].mxu0
      %v3099 = vadd.f32 0.0, %v3098
      %v3100 = vpop.f32.mrb[0].mxu0
      %v3101 = vpop.f32.mrb[0].mxu0
      %v3102 = vadd.f32 0.0, %v3101
      %v3103 = vpop.f32.mrb[0].mxu0
      %3104 = vmatprep.mubr.bf16.mxu0 0
      %3105 = vmatmul.mubr.bf16.gmra.mrb[0].mxu0 %v2726
      %v3106 = vpop.f32.mrb[0].mxu0
      %v3107 = vadd.f32 0.0, %v3106
      %v3108 = vpop.f32.mrb[0].mxu0
      %v3109 = vpop.f32.mrb[0].mxu0
      %v3110 = vadd.f32 0.0, %v3109
      %v3111 = vpop.f32.mrb[0].mxu0
      %3112 = vmatprep.mubr.bf16.mxu0 0
      %3113 = vmatmul.mubr.bf16.gmra.mrb[0].mxu0 %v2729
      %v3114 = vpop.f32.mrb[0].mxu0
      %v3115 = vadd.f32 0.0, %v3114
      %v3116 = vpop.f32.mrb[0].mxu0
      %v3117 = vpop.f32.mrb[0].mxu0
      %v3118 = vadd.f32 0.0, %v3117
      %v3119 = vpop.f32.mrb[0].mxu0
      %3120 = vmatprep.mubr.bf16.mxu0 0
      %3121 = vmatmul.mubr.bf16.gmra.mrb[0].mxu0 %v2732
      %v3122 = vpop.f32.mrb[0].mxu0
      %v3123 = vadd.f32 0.0, %v3122
      %v3124 = vpop.f32.mrb[0].mxu0
      %v3125 = vpop.f32.mrb[0].mxu0
      %v3126 = vadd.f32 0.0, %v3125
      %v3127 = vpop.f32.mrb[0].mxu0
      %3128 = vmatprep.mubr.bf16.mxu0 0
      %3129 = vmatmul.mubr.bf16.gmra.mrb[0].mxu0 %v2735
      %v3130 = vpop.f32.mrb[0].mxu0
      %v3131 = vadd.f32 0.0, %v3130
      %v3132 = vpop.f32.mrb[0].mxu0
      %v3133 = vpop.f32.mrb[0].mxu0
      %v3134 = vadd.f32 0.0, %v3133
      %v3135 = vpop.f32.mrb[0].mxu0
      %3136 = vmatprep.mubr.bf16.mxu0 0
      %3137 = vmatmul.mubr.bf16.gmra.mrb[0].mxu0 %v2738
      %v3138 = vpop.f32.mrb[0].mxu0
      %v3139 = vadd.f32 0.0, %v3138
      %v3140 = vpop.f32.mrb[0].mxu0
      %v3141 = vpop.f32.mrb[0].mxu0
      %v3142 = vadd.f32 0.0, %v3141
      %v3143 = vpop.f32.mrb[0].mxu0
      %3144 = vmatprep.mubr.bf16.mxu0 0
      %3145 = vmatmul.mubr.bf16.gmra.mrb[0].mxu0 %v2741
      %v3146 = vpop.f32.mrb[0].mxu0
      %v3147 = vadd.f32 0.0, %v3146
      %v3148 = vpop.f32.mrb[0].mxu0
      %v3149 = vpop.f32.mrb[0].mxu0
      %v3150 = vadd.f32 0.0, %v3149
      %v3151 = vpop.f32.mrb[0].mxu0
      %3152 = vmatprep.mubr.bf16.mxu0 0
      %3153 = vmatmul.mubr.bf16.gmra.mrb[0].mxu0 %v2744
      %v3154 = vpop.f32.mrb[0].mxu0
      %v3155 = vadd.f32 0.0, %v3154
      %v3156 = vpop.f32.mrb[0].mxu0
      %v3157 = vpop.f32.mrb[0].mxu0
      %v3158 = vadd.f32 0.0, %v3157
      %v3159 = vpop.f32.mrb[0].mxu0
      %3160 = vmatprep.mubr.bf16.mxu0 0
      %3161 = vmatmul.mubr.bf16.gmra.mrb[0].mxu0 %v2747
      %v3162 = vpop.f32.mrb[0].mxu0
      %v3163 = vadd.f32 0.0, %v3162
      %v3164 = vpop.f32.mrb[0].mxu0
      %v3165 = vpop.f32.mrb[0].mxu0
      %v3166 = vadd.f32 0.0, %v3165
      %v3167 = vpop.f32.mrb[0].mxu0
      %3168 = vmatprep.mubr.bf16.mxu0 0
      %3169 = vmatmul.mubr.bf16.gmra.mrb[0].mxu0 %v2750
      %v3170 = vpop.f32.mrb[0].mxu0
      %v3171 = vadd.f32 0.0, %v3170
      %v3172 = vpop.f32.mrb[0].mxu0
      %v3173 = vpop.f32.mrb[0].mxu0
      %v3174 = vadd.f32 0.0, %v3173
      %v3175 = vpop.f32.mrb[0].mxu0
      %3176 = vmatprep.mubr.bf16.mxu0 0
      %3177 = vmatmul.mubr.bf16.gmra.mrb[0].mxu0 %v2753
      %v3178 = vpop.f32.mrb[0].mxu0
      %v3179 = vadd.f32 0.0, %v3178
      %v3180 = vpop.f32.mrb[0].mxu0
      %v3181 = vpop.f32.mrb[0].mxu0
      %v3182 = vadd.f32 0.0, %v3181
      %v3183 = vpop.f32.mrb[0].mxu0
      %3184 = vmatprep.mubr.bf16.mxu0 0
      %3185 = vmatmul.mubr.bf16.gmra.mrb[0].mxu0 %v2756
      %v3186 = vpop.f32.mrb[0].mxu0
      %v3187 = vadd.f32 0.0, %v3186
      %v3188 = vpop.f32.mrb[0].mxu0
      %v3189 = vpop.f32.mrb[0].mxu0
      %v3190 = vadd.f32 0.0, %v3189
      %v3191 = vpop.f32.mrb[0].mxu0
      %3192 = vmatprep.mubr.bf16.mxu0 0
      %3193 = vmatmul.mubr.bf16.gmra.mrb[0].mxu0 %v2759
      %v3194 = vpop.f32.mrb[0].mxu0
      %v3195 = vadd.f32 0.0, %v3194
      %v3196 = vpop.f32.mrb[0].mxu0
      %v3197 = vpop.f32.mrb[0].mxu0
      %v3198 = vadd.f32 0.0, %v3197
      %v3199 = vpop.f32.mrb[0].mxu0
      %3200 = vmatprep.mubr.bf16.mxu0 0
      %3201 = vmatmul.mubr.bf16.gmra.mrb[0].mxu0 %v2762
      %v3202 = vpop.f32.mrb[0].mxu0
      %v3203 = vadd.f32 0.0, %v3202
      %v3204 = vpop.f32.mrb[0].mxu0
      %v3205 = vpop.f32.mrb[0].mxu0
      %v3206 = vadd.f32 0.0, %v3205
      %v3207 = vpop.f32.mrb[0].mxu0
      %3208 = vmatprep.mubr.bf16.mxu0 0
      %3209 = vmatmul.mubr.bf16.gmra.mrb[0].mxu0 %v2765
      %v3210 = vpop.f32.mrb[0].mxu0
      %v3211 = vadd.f32 0.0, %v3210
      %v3212 = vpop.f32.mrb[0].mxu0
      %v3213 = vpop.f32.mrb[0].mxu0
      %v3214 = vadd.f32 0.0, %v3213
      %v3215 = vpop.f32.mrb[0].mxu0
      %3216 = vmatprep.mubr.bf16.mxu0 0
      %3217 = vmatmul.mubr.bf16.gmra.mrb[0].mxu0 %v2768
      %v3218 = vpop.f32.mrb[0].mxu0
      %v3219 = vadd.f32 0.0, %v3218
      %v3220 = vpop.f32.mrb[0].mxu0
      %v3221 = vpop.f32.mrb[0].mxu0
      %v3222 = vadd.f32 0.0, %v3221
      %v3223 = vpop.f32.mrb[0].mxu0
      %3224 = vmatprep.mubr.bf16.mxu0 0
      %3225 = vmatmul.mubr.bf16.gmra.mrb[0].mxu0 %v2771
      %v3226 = vpop.f32.mrb[0].mxu0
      %v3227 = vadd.f32 0.0, %v3226
      %v3228 = vpop.f32.mrb[0].mxu0
      %v3229 = vpop.f32.mrb[0].mxu0
      %v3230 = vadd.f32 0.0, %v3229
      %v3231 = vpop.f32.mrb[0].mxu0
      %3232 = vmatprep.mubr.bf16.mxu0 0
      %3233 = vmatmul.mubr.bf16.gmra.mrb[0].mxu0 %v2774
      %v3234 = vpop.f32.mrb[0].mxu0
      %v3235 = vadd.f32 0.0, %v3234
      %v3236 = vpop.f32.mrb[0].mxu0
      %v3237 = vpop.f32.mrb[0].mxu0
      %v3238 = vadd.f32 0.0, %v3237
      %v3239 = vpop.f32.mrb[0].mxu0
      %3240 = vmatprep.mubr.bf16.mxu0 0
      %3241 = vmatmul.mubr.bf16.gmra.mrb[0].mxu0 %v2777
      %v3242 = vpop.f32.mrb[0].mxu0
      %v3243 = vadd.f32 0.0, %v3242
      %v3244 = vpop.f32.mrb[0].mxu0
      %v3245 = vpop.f32.mrb[0].mxu0
      %v3246 = vadd.f32 0.0, %v3245
      %v3247 = vpop.f32.mrb[0].mxu0
      %3248 = vmatprep.mubr.bf16.mxu0 0
      %3249 = vmatmul.mubr.bf16.gmra.mrb[0].mxu0 %v2780
      %v3250 = vpop.f32.mrb[0].mxu0
      %v3251 = vadd.f32 0.0, %v3250
      %v3252 = vpop.f32.mrb[0].mxu0
      %v3253 = vpop.f32.mrb[0].mxu0
      %v3254 = vadd.f32 0.0, %v3253
      %v3255 = vpop.f32.mrb[0].mxu0
      %3256 = vmatprep.mubr.bf16.mxu0 0
      %3257 = vmatmul.mubr.bf16.gmra.mrb[0].mxu0 %v2783
      %v3258 = vpop.f32.mrb[0].mxu0
      %v3259 = vadd.f32 0.0, %v3258
      %v3260 = vpop.f32.mrb[0].mxu0
      %v3261 = vpop.f32.mrb[0].mxu0
      %v3262 = vadd.f32 0.0, %v3261
      %v3263 = vpop.f32.mrb[0].mxu0
      %3264 = vmatprep.mubr.bf16.mxu0 0
      %3265 = vmatmul.mubr.bf16.gmra.mrb[0].mxu0 %v2786
      %v3266 = vpop.f32.mrb[0].mxu0
      %v3267 = vadd.f32 0.0, %v3266
      %v3268 = vpop.f32.mrb[0].mxu0
      %v3269 = vpop.f32.mrb[0].mxu0
      %v3270 = vadd.f32 0.0, %v3269
      %v3271 = vpop.f32.mrb[0].mxu0
      %3272 = vmatprep.mubr.bf16.mxu0 0
      %3273 = vmatmul.mubr.bf16.gmra.mrb[0].mxu0 %v2789
      %v3274 = vpop.f32.mrb[0].mxu0
      %v3275 = vadd.f32 0.0, %v3274
      %v3276 = vpop.f32.mrb[0].mxu0
      %v3277 = vpop.f32.mrb[0].mxu0
      %v3278 = vadd.f32 0.0, %v3277
      %v3279 = vpop.f32.mrb[0].mxu0
      %3280 = vmatprep.mubr.bf16.mxu0 0
      %3281 = vmatmul.mubr.bf16.gmra.mrb[0].mxu0 %v2792
      %v3282 = vpop.f32.mrb[0].mxu0
      %v3283 = vadd.f32 0.0, %v3282
      %v3284 = vpop.f32.mrb[0].mxu0
      %v3285 = vpop.f32.mrb[0].mxu0
      %v3286 = vadd.f32 0.0, %v3285
      %v3287 = vpop.f32.mrb[0].mxu0
      %3288 = vmatprep.mubr.bf16.mxu0 0
      %3289 = vmatmul.mubr.bf16.gmra.mrb[0].mxu0 %v2795
      %v3290 = vpop.f32.mrb[0].mxu0
      %v3291 = vadd.f32 0.0, %v3290
      %v3292 = vpop.f32.mrb[0].mxu0
      %v3293 = vpop.f32.mrb[0].mxu0
      %v3294 = vadd.f32 0.0, %v3293
      %v3295 = vpop.f32.mrb[0].mxu0
      %3296 = vmatprep.mubr.bf16.mxu0 0
      %3297 = vmatmul.mubr.bf16.gmra.mrb[0].mxu0 %v2798
      %v3298 = vpop.f32.mrb[0].mxu0
      %v3299 = vadd.f32 0.0, %v3298
      %v3300 = vpop.f32.mrb[0].mxu0
      %v3301 = vpop.f32.mrb[0].mxu0
      %v3302 = vadd.f32 0.0, %v3301
      %v3303 = vpop.f32.mrb[0].mxu0
      %3304 = vmatprep.mubr.bf16.mxu0 0
      %3305 = vmatmul.mubr.bf16.gmra.mrb[0].mxu0 %v2801
      %v3306 = vpop.f32.mrb[0].mxu0
      %v3307 = vadd.f32 0.0, %v3306
      %v3308 = vpop.f32.mrb[0].mxu0
      %v3309 = vpop.f32.mrb[0].mxu0
      %v3310 = vadd.f32 0.0, %v3309
      %v3311 = vpop.f32.mrb[0].mxu0
      %3312 = vmatprep.mubr.bf16.mxu0 0
      %3313 = vmatmul.mubr.bf16.gmra.mrb[0].mxu0 %v2804
      %v3314 = vpop.f32.mrb[0].mxu0
      %v3315 = vadd.f32 0.0, %v3314
      %v3316 = vpop.f32.mrb[0].mxu0
      %v3317 = vpop.f32.mrb[0].mxu0
      %v3318 = vadd.f32 0.0, %v3317
      %v3319 = vpop.f32.mrb[0].mxu0
      %3320 = vmatprep.mubr.bf16.mxu0 0
      %3321 = vmatmul.mubr.bf16.gmra.mrb[0].mxu0 %v2807
      %v3322 = vpop.f32.mrb[0].mxu0
      %v3323 = vadd.f32 0.0, %v3322
      %v3324 = vpop.f32.mrb[0].mxu0
      %v3325 = vpop.f32.mrb[0].mxu0
      %v3326 = vadd.f32 0.0, %v3325
      %v3327 = vpop.f32.mrb[0].mxu0
      %3328 = vmatprep.mubr.bf16.mxu0 0
      %3329 = vmatmul.mubr.bf16.gmra.mrb[0].mxu0 %v2810
      %v3330 = vpop.f32.mrb[0].mxu0
      %v3331 = vadd.f32 0.0, %v3330
      %v3332 = vpop.f32.mrb[0].mxu0
      %v3333 = vpop.f32.mrb[0].mxu0
      %v3334 = vadd.f32 0.0, %v3333
      %v3335 = vpop.f32.mrb[0].mxu0
      %3336 = vmatprep.mubr.bf16.mxu0 0
      %3337 = vmatmul.mubr.bf16.gmra.mrb[0].mxu0 %v2813
      %v3338 = vpop.f32.mrb[0].mxu0
      %v3339 = vadd.f32 0.0, %v3338
      %v3340 = vpop.f32.mrb[0].mxu0
      %v3341 = vpop.f32.mrb[0].mxu0
      %v3342 = vadd.f32 0.0, %v3341
      %v3343 = vpop.f32.mrb[0].mxu0
      %3344 = vmatprep.mubr.bf16.mxu0 0
      %3345 = vmatmul.mubr.bf16.gmra.mrb[0].mxu0 %v2816
      %v3346 = vpop.f32.mrb[0].mxu0
      %v3347 = vadd.f32 0.0, %v3346
      %v3348 = vpop.f32.mrb[0].mxu0
      %v3349 = vpop.f32.mrb[0].mxu0
      %v3350 = vadd.f32 0.0, %v3349
      %v3351 = vpop.f32.mrb[0].mxu0
      %3352 = vmatprep.mubr.bf16.mxu0 0
      %3353 = vmatmul.mubr.bf16.gmra.mrb[0].mxu0 %v2819
      %v3354 = vpop.f32.mrb[0].mxu0
      %v3355 = vadd.f32 0.0, %v3354
      %v3356 = vpop.f32.mrb[0].mxu0
      %v3357 = vpop.f32.mrb[0].mxu0
      %v3358 = vadd.f32 0.0, %v3357
      %v3359 = vpop.f32.mrb[0].mxu0
      %3360 = vmatprep.mubr.bf16.mxu0 0
      %3361 = vmatmul.mubr.bf16.gmra.mrb[0].mxu0 %v2822
      %v3362 = vpop.f32.mrb[0].mxu0
      %v3363 = vadd.f32 0.0, %v3362
      %v3364 = vpop.f32.mrb[0].mxu0
      %v3365 = vpop.f32.mrb[0].mxu0
      %v3366 = vadd.f32 0.0, %v3365
      %v3367 = vpop.f32.mrb[0].mxu0
      %3368 = vdwg.mxu0
      %v3369 = vmax.f32 %v2859, 0.0
      %v3370 = vmax.f32 %v2862, 0.0
      %v3371 = vmax.f32 %v2867, 0.0
      %v3372 = vmax.f32 %v2870, 0.0
      %v3373 = vmax.f32 %v2875, 0.0
      %v3374 = vmax.f32 %v2878, 0.0
      %v3375 = vmax.f32 %v2883, 0.0
      %v3376 = vmax.f32 %v2886, 0.0
      %v3377 = vmax.f32 %v2891, 0.0
      %v3378 = vmax.f32 %v2894, 0.0
      %v3379 = vmax.f32 %v2899, 0.0
      %v3380 = vmax.f32 %v2902, 0.0
      %v3381 = vmax.f32 %v2907, 0.0
      %v3382 = vmax.f32 %v2910, 0.0
      %v3383 = vmax.f32 %v2915, 0.0
      %v3384 = vmax.f32 %v2918, 0.0
      %v3385 = vmax.f32 %v2923, 0.0
      %v3386 = vmax.f32 %v2926, 0.0
      %v3387 = vmax.f32 %v2931, 0.0
      %v3388 = vmax.f32 %v2934, 0.0
      %v3389 = vmax.f32 %v2939, 0.0
      %v3390 = vmax.f32 %v2942, 0.0
      %v3391 = vmax.f32 %v2947, 0.0
      %v3392 = vmax.f32 %v2950, 0.0
      %v3393 = vmax.f32 %v2955, 0.0
      %v3394 = vmax.f32 %v2958, 0.0
      %v3395 = vmax.f32 %v2963, 0.0
      %v3396 = vmax.f32 %v2966, 0.0
      %v3397 = vmax.f32 %v2971, 0.0
      %v3398 = vmax.f32 %v2974, 0.0
      %v3399 = vmax.f32 %v2979, 0.0
      %v3400 = vmax.f32 %v2982, 0.0
      %v3401 = vmax.f32 %v2987, 0.0
      %v3402 = vmax.f32 %v2990, 0.0
      %v3403 = vmax.f32 %v2995, 0.0
      %v3404 = vmax.f32 %v2998, 0.0
      %v3405 = vmax.f32 %v3003, 0.0
      %v3406 = vmax.f32 %v3006, 0.0
      %v3407 = vmax.f32 %v3011, 0.0
      %v3408 = vmax.f32 %v3014, 0.0
      %v3409 = vmax.f32 %v3019, 0.0
      %v3410 = vmax.f32 %v3022, 0.0
      %v3411 = vmax.f32 %v3027, 0.0
      %v3412 = vmax.f32 %v3030, 0.0
      %v3413 = vmax.f32 %v3035, 0.0
      %v3414 = vmax.f32 %v3038, 0.0
      %v3415 = vmax.f32 %v3043, 0.0
      %v3416 = vmax.f32 %v3046, 0.0
      %v3417 = vmax.f32 %v3051, 0.0
      %v3418 = vmax.f32 %v3054, 0.0
      %v3419 = vmax.f32 %v3059, 0.0
      %v3420 = vmax.f32 %v3062, 0.0
      %v3421 = vmax.f32 %v3067, 0.0
      %v3422 = vmax.f32 %v3070, 0.0
      %v3423 = vmax.f32 %v3075, 0.0
      %v3424 = vmax.f32 %v3078, 0.0
      %v3425 = vmax.f32 %v3083, 0.0
      %v3426 = vmax.f32 %v3086, 0.0
      %v3427 = vmax.f32 %v3091, 0.0
      %v3428 = vmax.f32 %v3094, 0.0
      %v3429 = vmax.f32 %v3099, 0.0
      %v3430 = vmax.f32 %v3102, 0.0
      %v3431 = vmax.f32 %v3107, 0.0
      %v3432 = vmax.f32 %v3110, 0.0
      %v3433 = vmax.f32 %v3115, 0.0
      %v3434 = vmax.f32 %v3118, 0.0
      %v3435 = vmax.f32 %v3123, 0.0
      %v3436 = vmax.f32 %v3126, 0.0
      %v3437 = vmax.f32 %v3131, 0.0
      %v3438 = vmax.f32 %v3134, 0.0
      %v3439 = vmax.f32 %v3139, 0.0
      %v3440 = vmax.f32 %v3142, 0.0
      %v3441 = vmax.f32 %v3147, 0.0
      %v3442 = vmax.f32 %v3150, 0.0
      %v3443 = vmax.f32 %v3155, 0.0
      %v3444 = vmax.f32 %v3158, 0.0
      %v3445 = vmax.f32 %v3163, 0.0
      %v3446 = vmax.f32 %v3166, 0.0
      %v3447 = vmax.f32 %v3171, 0.0
      %v3448 = vmax.f32 %v3174, 0.0
      %v3449 = vmax.f32 %v3179, 0.0
      %v3450 = vmax.f32 %v3182, 0.0
      %v3451 = vmax.f32 %v3187, 0.0
      %v3452 = vmax.f32 %v3190, 0.0
      %v3453 = vmax.f32 %v3195, 0.0
      %v3454 = vmax.f32 %v3198, 0.0
      %v3455 = vmax.f32 %v3203, 0.0
      %v3456 = vmax.f32 %v3206, 0.0
      %v3457 = vmax.f32 %v3211, 0.0
      %v3458 = vmax.f32 %v3214, 0.0
      %v3459 = vmax.f32 %v3219, 0.0
      %v3460 = vmax.f32 %v3222, 0.0
      %v3461 = vmax.f32 %v3227, 0.0
      %v3462 = vmax.f32 %v3230, 0.0
      %v3463 = vmax.f32 %v3235, 0.0
      %v3464 = vmax.f32 %v3238, 0.0
      %v3465 = vmax.f32 %v3243, 0.0
      %v3466 = vmax.f32 %v3246, 0.0
      %v3467 = vmax.f32 %v3251, 0.0
      %v3468 = vmax.f32 %v3254, 0.0
      %v3469 = vmax.f32 %v3259, 0.0
      %v3470 = vmax.f32 %v3262, 0.0
      %v3471 = vmax.f32 %v3267, 0.0
      %v3472 = vmax.f32 %v3270, 0.0
      %v3473 = vmax.f32 %v3275, 0.0
      %v3474 = vmax.f32 %v3278, 0.0
      %v3475 = vmax.f32 %v3283, 0.0
      %v3476 = vmax.f32 %v3286, 0.0
      %v3477 = vmax.f32 %v3291, 0.0
      %v3478 = vmax.f32 %v3294, 0.0
      %v3479 = vmax.f32 %v3299, 0.0
      %v3480 = vmax.f32 %v3302, 0.0
      %v3481 = vmax.f32 %v3307, 0.0
      %v3482 = vmax.f32 %v3310, 0.0
      %v3483 = vmax.f32 %v3315, 0.0
      %v3484 = vmax.f32 %v3318, 0.0
      %v3485 = vmax.f32 %v3323, 0.0
      %v3486 = vmax.f32 %v3326, 0.0
      %v3487 = vmax.f32 %v3331, 0.0
      %v3488 = vmax.f32 %v3334, 0.0
      %v3489 = vmax.f32 %v3339, 0.0
      %v3490 = vmax.f32 %v3342, 0.0
      %v3491 = vmax.f32 %v3347, 0.0
      %v3492 = vmax.f32 %v3350, 0.0
      %v3493 = vmax.f32 %v3355, 0.0
      %v3494 = vmax.f32 %v3358, 0.0
      %v3495 = vmax.f32 %v3363, 0.0
      %v3496 = vmax.f32 %v3366, 0.0
      %v3497 = vpack.c.bf16 %v3370, %v3369
      %v3498 = vpack.c.bf16 %v3372, %v3371
      %v3499 = vpack.c.bf16 %v3374, %v3373
      %v3500 = vpack.c.bf16 %v3376, %v3375
      %v3501 = vpack.c.bf16 %v3378, %v3377
      %v3502 = vpack.c.bf16 %v3380, %v3379
      %v3503 = vpack.c.bf16 %v3382, %v3381
      %v3504 = vpack.c.bf16 %v3384, %v3383
      %v3505 = vpack.c.bf16 %v3386, %v3385
      %v3506 = vpack.c.bf16 %v3388, %v3387
      %v3507 = vpack.c.bf16 %v3390, %v3389
      %v3508 = vpack.c.bf16 %v3392, %v3391
      %v3509 = vpack.c.bf16 %v3394, %v3393
      %v3510 = vpack.c.bf16 %v3396, %v3395
      %v3511 = vpack.c.bf16 %v3398, %v3397
      %v3512 = vpack.c.bf16 %v3400, %v3399
      %v3513 = vpack.c.bf16 %v3402, %v3401
      %v3514 = vpack.c.bf16 %v3404, %v3403
      %v3515 = vpack.c.bf16 %v3406, %v3405
      %v3516 = vpack.c.bf16 %v3408, %v3407
      %v3517 = vpack.c.bf16 %v3410, %v3409
      %v3518 = vpack.c.bf16 %v3412, %v3411
      %v3519 = vpack.c.bf16 %v3414, %v3413
      %v3520 = vpack.c.bf16 %v3416, %v3415
      %v3521 = vpack.c.bf16 %v3418, %v3417
      %v3522 = vpack.c.bf16 %v3420, %v3419
      %v3523 = vpack.c.bf16 %v3422, %v3421
      %v3524 = vpack.c.bf16 %v3424, %v3423
      %v3525 = vpack.c.bf16 %v3426, %v3425
      %v3526 = vpack.c.bf16 %v3428, %v3427
      %v3527 = vpack.c.bf16 %v3430, %v3429
      %v3528 = vpack.c.bf16 %v3432, %v3431
      %v3529 = vpack.c.bf16 %v3434, %v3433
      %v3530 = vpack.c.bf16 %v3436, %v3435
      %v3531 = vpack.c.bf16 %v3438, %v3437
      %v3532 = vpack.c.bf16 %v3440, %v3439
      %v3533 = vpack.c.bf16 %v3442, %v3441
      %v3534 = vpack.c.bf16 %v3444, %v3443
      %v3535 = vpack.c.bf16 %v3446, %v3445
      %v3536 = vpack.c.bf16 %v3448, %v3447
      %v3537 = vpack.c.bf16 %v3450, %v3449
      %v3538 = vpack.c.bf16 %v3452, %v3451
      %v3539 = vpack.c.bf16 %v3454, %v3453
      %v3540 = vpack.c.bf16 %v3456, %v3455
      %v3541 = vpack.c.bf16 %v3458, %v3457
      %v3542 = vpack.c.bf16 %v3460, %v3459
      %v3543 = vpack.c.bf16 %v3462, %v3461
      %v3544 = vpack.c.bf16 %v3464, %v3463
      %v3545 = vpack.c.bf16 %v3466, %v3465
      %v3546 = vpack.c.bf16 %v3468, %v3467
      %v3547 = vpack.c.bf16 %v3470, %v3469
      %v3548 = vpack.c.bf16 %v3472, %v3471
      %v3549 = vpack.c.bf16 %v3474, %v3473
      %v3550 = vpack.c.bf16 %v3476, %v3475
      %v3551 = vpack.c.bf16 %v3478, %v3477
      %v3552 = vpack.c.bf16 %v3480, %v3479
      %v3553 = vpack.c.bf16 %v3482, %v3481
      %v3554 = vpack.c.bf16 %v3484, %v3483
      %v3555 = vpack.c.bf16 %v3486, %v3485
      %v3556 = vpack.c.bf16 %v3488, %v3487
      %v3557 = vpack.c.bf16 %v3490, %v3489
      %v3558 = vpack.c.bf16 %v3492, %v3491
      %v3559 = vpack.c.bf16 %v3494, %v3493
      %v3560 = vpack.c.bf16 %v3496, %v3495
      %v3561 = vld [vmem:[%s4] sm:$0xf]
      %v3562 = vld [vmem:[%s4 + $0x4] sm:$0xf]
      %v3563 = vld [vmem:[%s4 + $0x8] sm:$0xf]
      %v3564 = vld [vmem:[%s4 + $0xc] sm:$0xf]
      %v3565 = vld [vmem:[%s4 + $0x10] sm:$0xf]
      %v3566 = vld [vmem:[%s4 + $0x14] sm:$0xf]
      %v3567 = vld [vmem:[%s4 + $0x18] sm:$0xf]
      %v3568 = vld [vmem:[%s4 + $0x1c] sm:$0xf]
      %v3577 = vunpack.c.l.b16 %v3561
      %v3578 = vunpack.c.l.b16 %v3562
      %v3579 = vunpack.c.l.b16 %v3563
      %v3580 = vunpack.c.l.b16 %v3564
      %v3581 = vunpack.c.l.b16 %v3565
      %v3582 = vunpack.c.l.b16 %v3566
      %v3583 = vunpack.c.l.b16 %v3567
      %v3584 = vunpack.c.l.b16 %v3568
      %v3585 = vpack.c.b16 %v3578, %v3577
      %v3586 = vpack.c.b16 %v3580, %v3579
      %v3587 = vpack.c.b16 %v3582, %v3581
      %v3588 = vpack.c.b16 %v3584, %v3583
      %v3594 = vsel %vm709, %v3497, 0
      %v3597 = vsel %vm709, %v3498, 0
      %v3600 = vsel %vm709, %v3499, 0
      %v3603 = vsel %vm709, %v3500, 0
      %v3606 = vsel %vm709, %v3501, 0
      %v3609 = vsel %vm709, %v3502, 0
      %v3612 = vsel %vm709, %v3503, 0
      %v3615 = vsel %vm709, %v3504, 0
      %v3618 = vsel %vm709, %v3505, 0
      %v3621 = vsel %vm709, %v3506, 0
      %v3624 = vsel %vm709, %v3507, 0
      %v3627 = vsel %vm709, %v3508, 0
      %v3630 = vsel %vm709, %v3509, 0
      %v3633 = vsel %vm709, %v3510, 0
      %v3636 = vsel %vm709, %v3511, 0
      %v3639 = vsel %vm709, %v3512, 0
      %v3642 = vsel %vm709, %v3513, 0
      %v3645 = vsel %vm709, %v3514, 0
      %v3648 = vsel %vm709, %v3515, 0
      %v3651 = vsel %vm709, %v3516, 0
      %v3654 = vsel %vm709, %v3517, 0
      %v3657 = vsel %vm709, %v3518, 0
      %v3660 = vsel %vm709, %v3519, 0
      %v3663 = vsel %vm709, %v3520, 0
      %v3666 = vsel %vm709, %v3521, 0
      %v3669 = vsel %vm709, %v3522, 0
      %v3672 = vsel %vm709, %v3523, 0
      %v3675 = vsel %vm709, %v3524, 0
      %v3678 = vsel %vm709, %v3525, 0
      %v3681 = vsel %vm709, %v3526, 0
      %v3684 = vsel %vm709, %v3527, 0
      %v3687 = vsel %vm709, %v3528, 0
      %v3690 = vsel %vm709, %v3529, 0
      %v3693 = vsel %vm709, %v3530, 0
      %v3696 = vsel %vm709, %v3531, 0
      %v3699 = vsel %vm709, %v3532, 0
      %v3702 = vsel %vm709, %v3533, 0
      %v3705 = vsel %vm709, %v3534, 0
      %v3708 = vsel %vm709, %v3535, 0
      %v3711 = vsel %vm709, %v3536, 0
      %v3714 = vsel %vm709, %v3537, 0
      %v3717 = vsel %vm709, %v3538, 0
      %v3720 = vsel %vm709, %v3539, 0
      %v3723 = vsel %vm709, %v3540, 0
      %v3726 = vsel %vm709, %v3541, 0
      %v3729 = vsel %vm709, %v3542, 0
      %v3732 = vsel %vm709, %v3543, 0
      %v3735 = vsel %vm709, %v3544, 0
      %v3738 = vsel %vm709, %v3545, 0
      %v3741 = vsel %vm709, %v3546, 0
      %v3744 = vsel %vm709, %v3547, 0
      %v3747 = vsel %vm709, %v3548, 0
      %v3750 = vsel %vm709, %v3549, 0
      %v3753 = vsel %vm709, %v3550, 0
      %v3756 = vsel %vm709, %v3551, 0
      %v3759 = vsel %vm709, %v3552, 0
      %v3762 = vsel %vm709, %v3553, 0
      %v3765 = vsel %vm709, %v3554, 0
      %v3768 = vsel %vm709, %v3555, 0
      %v3771 = vsel %vm709, %v3556, 0
      %v3774 = vsel %vm709, %v3557, 0
      %v3777 = vsel %vm709, %v3558, 0
      %v3780 = vsel %vm709, %v3559, 0
      %v3783 = vsel %vm709, %v3560, 0
      %3785 = vmatprep.subr.bf16.mxu0 0
      %3786 = vmatpush1.bf16.msra.mxu0 %v3585
      %3787 = vmatprep.subr.bf16.mxu0 0
      %3788 = vmatpush1.bf16.msra.mxu0 %v3586
      %3789 = vmatprep.subr.bf16.mxu0 0
      %3790 = vmatpush1.bf16.msra.mxu0 %v3587
      %3791 = vmatprep.subr.bf16.mxu0 0
      %3792 = vmatpush1.bf16.msra.mxu0 %v3588
      %3793 = vmatprep.subr.bf16.mxu0 0
      %3794 = vmatpush1.bf16.msra.mxu0 0
      %3795 = vmatprep.subr.bf16.mxu0 0
      %3796 = vmatpush1.bf16.msra.mxu0 0
      %3797 = vmatprep.subr.bf16.mxu0 0
      %3798 = vmatpush1.bf16.msra.mxu0 0
      %3799 = vmatprep.subr.bf16.mxu0 0
      %3800 = vmatpush1.bf16.msra.mxu0 0
      %3801 = vmatprep.subr.bf16.mxu0 0
      %3802 = vmatpush1.bf16.msra.mxu0 0
      %3803 = vmatprep.subr.bf16.mxu0 0
      %3804 = vmatpush1.bf16.msra.mxu0 0
      %3805 = vmatprep.subr.bf16.mxu0 0
      %3806 = vmatpush1.bf16.msra.mxu0 0
      %3807 = vmatprep.subr.bf16.mxu0 0
      %3808 = vmatpush1.bf16.msra.mxu0 0
      %3809 = vmatprep.subr.bf16.mxu0 0
      %3810 = vmatpush1.bf16.msra.mxu0 0
      %3811 = vmatprep.subr.bf16.mxu0 0
      %3812 = vmatpush1.bf16.msra.mxu0 0
      %3813 = vmatprep.subr.bf16.mxu0 0
      %3814 = vmatpush1.bf16.msra.mxu0 0
      %3815 = vmatprep.subr.bf16.mxu0 0
      %3816 = vmatpush1.bf16.msra.mxu0 0
      %3817 = vmatprep.mubr.bf16.mxu0 0
      %3818 = vmatmul.mubr.bf16.gmra.mrb[0].mxu0 %v3594
      %v3819 = vpop.f32.mrb[0].mxu0
      %v3820 = vadd.f32 0.0, %v3819
      %v3821 = vpop.f32.mrb[0].mxu0
      %v3822 = vpop.f32.mrb[0].mxu0
      %v3823 = vadd.f32 0.0, %v3822
      %v3824 = vpop.f32.mrb[0].mxu0
      %3825 = vmatprep.mubr.bf16.mxu0 0
      %3826 = vmatmul.mubr.bf16.gmra.mrb[0].mxu0 %v3597
      %v3827 = vpop.f32.mrb[0].mxu0
      %v3828 = vadd.f32 0.0, %v3827
      %v3829 = vpop.f32.mrb[0].mxu0
      %v3830 = vpop.f32.mrb[0].mxu0
      %v3831 = vadd.f32 0.0, %v3830
      %v3832 = vpop.f32.mrb[0].mxu0
      %3833 = vmatprep.mubr.bf16.mxu0 0
      %3834 = vmatmul.mubr.bf16.gmra.mrb[0].mxu0 %v3600
      %v3835 = vpop.f32.mrb[0].mxu0
      %v3836 = vadd.f32 0.0, %v3835
      %v3837 = vpop.f32.mrb[0].mxu0
      %v3838 = vpop.f32.mrb[0].mxu0
      %v3839 = vadd.f32 0.0, %v3838
      %v3840 = vpop.f32.mrb[0].mxu0
      %3841 = vmatprep.mubr.bf16.mxu0 0
      %3842 = vmatmul.mubr.bf16.gmra.mrb[0].mxu0 %v3603
      %v3843 = vpop.f32.mrb[0].mxu0
      %v3844 = vadd.f32 0.0, %v3843
      %v3845 = vpop.f32.mrb[0].mxu0
      %v3846 = vpop.f32.mrb[0].mxu0
      %v3847 = vadd.f32 0.0, %v3846
      %v3848 = vpop.f32.mrb[0].mxu0
      %3849 = vmatprep.mubr.bf16.mxu0 0
      %3850 = vmatmul.mubr.bf16.gmra.mrb[0].mxu0 %v3606
      %v3851 = vpop.f32.mrb[0].mxu0
      %v3852 = vadd.f32 0.0, %v3851
      %v3853 = vpop.f32.mrb[0].mxu0
      %v3854 = vpop.f32.mrb[0].mxu0
      %v3855 = vadd.f32 0.0, %v3854
      %v3856 = vpop.f32.mrb[0].mxu0
      %3857 = vmatprep.mubr.bf16.mxu0 0
      %3858 = vmatmul.mubr.bf16.gmra.mrb[0].mxu0 %v3609
      %v3859 = vpop.f32.mrb[0].mxu0
      %v3860 = vadd.f32 0.0, %v3859
      %v3861 = vpop.f32.mrb[0].mxu0
      %v3862 = vpop.f32.mrb[0].mxu0
      %v3863 = vadd.f32 0.0, %v3862
      %v3864 = vpop.f32.mrb[0].mxu0
      %3865 = vmatprep.mubr.bf16.mxu0 0
      %3866 = vmatmul.mubr.bf16.gmra.mrb[0].mxu0 %v3612
      %v3867 = vpop.f32.mrb[0].mxu0
      %v3868 = vadd.f32 0.0, %v3867
      %v3869 = vpop.f32.mrb[0].mxu0
      %v3870 = vpop.f32.mrb[0].mxu0
      %v3871 = vadd.f32 0.0, %v3870
      %v3872 = vpop.f32.mrb[0].mxu0
      %3873 = vmatprep.mubr.bf16.mxu0 0
      %3874 = vmatmul.mubr.bf16.gmra.mrb[0].mxu0 %v3615
      %v3875 = vpop.f32.mrb[0].mxu0
      %v3876 = vadd.f32 0.0, %v3875
      %v3877 = vpop.f32.mrb[0].mxu0
      %v3878 = vpop.f32.mrb[0].mxu0
      %v3879 = vadd.f32 0.0, %v3878
      %v3880 = vpop.f32.mrb[0].mxu0
      %3881 = vmatprep.mubr.bf16.mxu0 0
      %3882 = vmatmul.mubr.bf16.gmra.mrb[0].mxu0 %v3618
      %v3883 = vpop.f32.mrb[0].mxu0
      %v3884 = vadd.f32 0.0, %v3883
      %v3885 = vpop.f32.mrb[0].mxu0
      %v3886 = vpop.f32.mrb[0].mxu0
      %v3887 = vadd.f32 0.0, %v3886
      %v3888 = vpop.f32.mrb[0].mxu0
      %3889 = vmatprep.mubr.bf16.mxu0 0
      %3890 = vmatmul.mubr.bf16.gmra.mrb[0].mxu0 %v3621
      %v3891 = vpop.f32.mrb[0].mxu0
      %v3892 = vadd.f32 0.0, %v3891
      %v3893 = vpop.f32.mrb[0].mxu0
      %v3894 = vpop.f32.mrb[0].mxu0
      %v3895 = vadd.f32 0.0, %v3894
      %v3896 = vpop.f32.mrb[0].mxu0
      %3897 = vmatprep.mubr.bf16.mxu0 0
      %3898 = vmatmul.mubr.bf16.gmra.mrb[0].mxu0 %v3624
      %v3899 = vpop.f32.mrb[0].mxu0
      %v3900 = vadd.f32 0.0, %v3899
      %v3901 = vpop.f32.mrb[0].mxu0
      %v3902 = vpop.f32.mrb[0].mxu0
      %v3903 = vadd.f32 0.0, %v3902
      %v3904 = vpop.f32.mrb[0].mxu0
      %3905 = vmatprep.mubr.bf16.mxu0 0
      %3906 = vmatmul.mubr.bf16.gmra.mrb[0].mxu0 %v3627
      %v3907 = vpop.f32.mrb[0].mxu0
      %v3908 = vadd.f32 0.0, %v3907
      %v3909 = vpop.f32.mrb[0].mxu0
      %v3910 = vpop.f32.mrb[0].mxu0
      %v3911 = vadd.f32 0.0, %v3910
      %v3912 = vpop.f32.mrb[0].mxu0
      %3913 = vmatprep.mubr.bf16.mxu0 0
      %3914 = vmatmul.mubr.bf16.gmra.mrb[0].mxu0 %v3630
      %v3915 = vpop.f32.mrb[0].mxu0
      %v3916 = vadd.f32 0.0, %v3915
      %v3917 = vpop.f32.mrb[0].mxu0
      %v3918 = vpop.f32.mrb[0].mxu0
      %v3919 = vadd.f32 0.0, %v3918
      %v3920 = vpop.f32.mrb[0].mxu0
      %3921 = vmatprep.mubr.bf16.mxu0 0
      %3922 = vmatmul.mubr.bf16.gmra.mrb[0].mxu0 %v3633
      %v3923 = vpop.f32.mrb[0].mxu0
      %v3924 = vadd.f32 0.0, %v3923
      %v3925 = vpop.f32.mrb[0].mxu0
      %v3926 = vpop.f32.mrb[0].mxu0
      %v3927 = vadd.f32 0.0, %v3926
      %v3928 = vpop.f32.mrb[0].mxu0
      %3929 = vmatprep.mubr.bf16.mxu0 0
      %3930 = vmatmul.mubr.bf16.gmra.mrb[0].mxu0 %v3636
      %v3931 = vpop.f32.mrb[0].mxu0
      %v3932 = vadd.f32 0.0, %v3931
      %v3933 = vpop.f32.mrb[0].mxu0
      %v3934 = vpop.f32.mrb[0].mxu0
      %v3935 = vadd.f32 0.0, %v3934
      %v3936 = vpop.f32.mrb[0].mxu0
      %3937 = vmatprep.mubr.bf16.mxu0 0
      %3938 = vmatmul.mubr.bf16.gmra.mrb[0].mxu0 %v3639
      %v3939 = vpop.f32.mrb[0].mxu0
      %v3940 = vadd.f32 0.0, %v3939
      %v3941 = vpop.f32.mrb[0].mxu0
      %v3942 = vpop.f32.mrb[0].mxu0
      %v3943 = vadd.f32 0.0, %v3942
      %v3944 = vpop.f32.mrb[0].mxu0
      %3945 = vmatprep.mubr.bf16.mxu0 0
      %3946 = vmatmul.mubr.bf16.gmra.mrb[0].mxu0 %v3642
      %v3947 = vpop.f32.mrb[0].mxu0
      %v3948 = vadd.f32 0.0, %v3947
      %v3949 = vpop.f32.mrb[0].mxu0
      %v3950 = vpop.f32.mrb[0].mxu0
      %v3951 = vadd.f32 0.0, %v3950
      %v3952 = vpop.f32.mrb[0].mxu0
      %3953 = vmatprep.mubr.bf16.mxu0 0
      %3954 = vmatmul.mubr.bf16.gmra.mrb[0].mxu0 %v3645
      %v3955 = vpop.f32.mrb[0].mxu0
      %v3956 = vadd.f32 0.0, %v3955
      %v3957 = vpop.f32.mrb[0].mxu0
      %v3958 = vpop.f32.mrb[0].mxu0
      %v3959 = vadd.f32 0.0, %v3958
      %v3960 = vpop.f32.mrb[0].mxu0
      %3961 = vmatprep.mubr.bf16.mxu0 0
      %3962 = vmatmul.mubr.bf16.gmra.mrb[0].mxu0 %v3648
      %v3963 = vpop.f32.mrb[0].mxu0
      %v3964 = vadd.f32 0.0, %v3963
      %v3965 = vpop.f32.mrb[0].mxu0
      %v3966 = vpop.f32.mrb[0].mxu0
      %v3967 = vadd.f32 0.0, %v3966
      %v3968 = vpop.f32.mrb[0].mxu0
      %3969 = vmatprep.mubr.bf16.mxu0 0
      %3970 = vmatmul.mubr.bf16.gmra.mrb[0].mxu0 %v3651
      %v3971 = vpop.f32.mrb[0].mxu0
      %v3972 = vadd.f32 0.0, %v3971
      %v3973 = vpop.f32.mrb[0].mxu0
      %v3974 = vpop.f32.mrb[0].mxu0
      %v3975 = vadd.f32 0.0, %v3974
      %v3976 = vpop.f32.mrb[0].mxu0
      %3977 = vmatprep.mubr.bf16.mxu0 0
      %3978 = vmatmul.mubr.bf16.gmra.mrb[0].mxu0 %v3654
      %v3979 = vpop.f32.mrb[0].mxu0
      %v3980 = vadd.f32 0.0, %v3979
      %v3981 = vpop.f32.mrb[0].mxu0
      %v3982 = vpop.f32.mrb[0].mxu0
      %v3983 = vadd.f32 0.0, %v3982
      %v3984 = vpop.f32.mrb[0].mxu0
      %3985 = vmatprep.mubr.bf16.mxu0 0
      %3986 = vmatmul.mubr.bf16.gmra.mrb[0].mxu0 %v3657
      %v3987 = vpop.f32.mrb[0].mxu0
      %v3988 = vadd.f32 0.0, %v3987
      %v3989 = vpop.f32.mrb[0].mxu0
      %v3990 = vpop.f32.mrb[0].mxu0
      %v3991 = vadd.f32 0.0, %v3990
      %v3992 = vpop.f32.mrb[0].mxu0
      %3993 = vmatprep.mubr.bf16.mxu0 0
      %3994 = vmatmul.mubr.bf16.gmra.mrb[0].mxu0 %v3660
      %v3995 = vpop.f32.mrb[0].mxu0
      %v3996 = vadd.f32 0.0, %v3995
      %v3997 = vpop.f32.mrb[0].mxu0
      %v3998 = vpop.f32.mrb[0].mxu0
      %v3999 = vadd.f32 0.0, %v3998
      %v4000 = vpop.f32.mrb[0].mxu0
      %4001 = vmatprep.mubr.bf16.mxu0 0
      %4002 = vmatmul.mubr.bf16.gmra.mrb[0].mxu0 %v3663
      %v4003 = vpop.f32.mrb[0].mxu0
      %v4004 = vadd.f32 0.0, %v4003
      %v4005 = vpop.f32.mrb[0].mxu0
      %v4006 = vpop.f32.mrb[0].mxu0
      %v4007 = vadd.f32 0.0, %v4006
      %v4008 = vpop.f32.mrb[0].mxu0
      %4009 = vmatprep.mubr.bf16.mxu0 0
      %4010 = vmatmul.mubr.bf16.gmra.mrb[0].mxu0 %v3666
      %v4011 = vpop.f32.mrb[0].mxu0
      %v4012 = vadd.f32 0.0, %v4011
      %v4013 = vpop.f32.mrb[0].mxu0
      %v4014 = vpop.f32.mrb[0].mxu0
      %v4015 = vadd.f32 0.0, %v4014
      %v4016 = vpop.f32.mrb[0].mxu0
      %4017 = vmatprep.mubr.bf16.mxu0 0
      %4018 = vmatmul.mubr.bf16.gmra.mrb[0].mxu0 %v3669
      %v4019 = vpop.f32.mrb[0].mxu0
      %v4020 = vadd.f32 0.0, %v4019
      %v4021 = vpop.f32.mrb[0].mxu0
      %v4022 = vpop.f32.mrb[0].mxu0
      %v4023 = vadd.f32 0.0, %v4022
      %v4024 = vpop.f32.mrb[0].mxu0
      %4025 = vmatprep.mubr.bf16.mxu0 0
      %4026 = vmatmul.mubr.bf16.gmra.mrb[0].mxu0 %v3672
      %v4027 = vpop.f32.mrb[0].mxu0
      %v4028 = vadd.f32 0.0, %v4027
      %v4029 = vpop.f32.mrb[0].mxu0
      %v4030 = vpop.f32.mrb[0].mxu0
      %v4031 = vadd.f32 0.0, %v4030
      %v4032 = vpop.f32.mrb[0].mxu0
      %4033 = vmatprep.mubr.bf16.mxu0 0
      %4034 = vmatmul.mubr.bf16.gmra.mrb[0].mxu0 %v3675
      %v4035 = vpop.f32.mrb[0].mxu0
      %v4036 = vadd.f32 0.0, %v4035
      %v4037 = vpop.f32.mrb[0].mxu0
      %v4038 = vpop.f32.mrb[0].mxu0
      %v4039 = vadd.f32 0.0, %v4038
      %v4040 = vpop.f32.mrb[0].mxu0
      %4041 = vmatprep.mubr.bf16.mxu0 0
      %4042 = vmatmul.mubr.bf16.gmra.mrb[0].mxu0 %v3678
      %v4043 = vpop.f32.mrb[0].mxu0
      %v4044 = vadd.f32 0.0, %v4043
      %v4045 = vpop.f32.mrb[0].mxu0
      %v4046 = vpop.f32.mrb[0].mxu0
      %v4047 = vadd.f32 0.0, %v4046
      %v4048 = vpop.f32.mrb[0].mxu0
      %4049 = vmatprep.mubr.bf16.mxu0 0
      %4050 = vmatmul.mubr.bf16.gmra.mrb[0].mxu0 %v3681
      %v4051 = vpop.f32.mrb[0].mxu0
      %v4052 = vadd.f32 0.0, %v4051
      %v4053 = vpop.f32.mrb[0].mxu0
      %v4054 = vpop.f32.mrb[0].mxu0
      %v4055 = vadd.f32 0.0, %v4054
      %v4056 = vpop.f32.mrb[0].mxu0
      %4057 = vmatprep.mubr.bf16.mxu0 0
      %4058 = vmatmul.mubr.bf16.gmra.mrb[0].mxu0 %v3684
      %v4059 = vpop.f32.mrb[0].mxu0
      %v4060 = vadd.f32 0.0, %v4059
      %v4061 = vpop.f32.mrb[0].mxu0
      %v4062 = vpop.f32.mrb[0].mxu0
      %v4063 = vadd.f32 0.0, %v4062
      %v4064 = vpop.f32.mrb[0].mxu0
      %4065 = vmatprep.mubr.bf16.mxu0 0
      %4066 = vmatmul.mubr.bf16.gmra.mrb[0].mxu0 %v3687
      %v4067 = vpop.f32.mrb[0].mxu0
      %v4068 = vadd.f32 0.0, %v4067
      %v4069 = vpop.f32.mrb[0].mxu0
      %v4070 = vpop.f32.mrb[0].mxu0
      %v4071 = vadd.f32 0.0, %v4070
      %v4072 = vpop.f32.mrb[0].mxu0
      %4073 = vmatprep.mubr.bf16.mxu0 0
      %4074 = vmatmul.mubr.bf16.gmra.mrb[0].mxu0 %v3690
      %v4075 = vpop.f32.mrb[0].mxu0
      %v4076 = vadd.f32 0.0, %v4075
      %v4077 = vpop.f32.mrb[0].mxu0
      %v4078 = vpop.f32.mrb[0].mxu0
      %v4079 = vadd.f32 0.0, %v4078
      %v4080 = vpop.f32.mrb[0].mxu0
      %4081 = vmatprep.mubr.bf16.mxu0 0
      %4082 = vmatmul.mubr.bf16.gmra.mrb[0].mxu0 %v3693
      %v4083 = vpop.f32.mrb[0].mxu0
      %v4084 = vadd.f32 0.0, %v4083
      %v4085 = vpop.f32.mrb[0].mxu0
      %v4086 = vpop.f32.mrb[0].mxu0
      %v4087 = vadd.f32 0.0, %v4086
      %v4088 = vpop.f32.mrb[0].mxu0
      %4089 = vmatprep.mubr.bf16.mxu0 0
      %4090 = vmatmul.mubr.bf16.gmra.mrb[0].mxu0 %v3696
      %v4091 = vpop.f32.mrb[0].mxu0
      %v4092 = vadd.f32 0.0, %v4091
      %v4093 = vpop.f32.mrb[0].mxu0
      %v4094 = vpop.f32.mrb[0].mxu0
      %v4095 = vadd.f32 0.0, %v4094
      %v4096 = vpop.f32.mrb[0].mxu0
      %4097 = vmatprep.mubr.bf16.mxu0 0
      %4098 = vmatmul.mubr.bf16.gmra.mrb[0].mxu0 %v3699
      %v4099 = vpop.f32.mrb[0].mxu0
      %v4100 = vadd.f32 0.0, %v4099
      %v4101 = vpop.f32.mrb[0].mxu0
      %v4102 = vpop.f32.mrb[0].mxu0
      %v4103 = vadd.f32 0.0, %v4102
      %v4104 = vpop.f32.mrb[0].mxu0
      %4105 = vmatprep.mubr.bf16.mxu0 0
      %4106 = vmatmul.mubr.bf16.gmra.mrb[0].mxu0 %v3702
      %v4107 = vpop.f32.mrb[0].mxu0
      %v4108 = vadd.f32 0.0, %v4107
      %v4109 = vpop.f32.mrb[0].mxu0
      %v4110 = vpop.f32.mrb[0].mxu0
      %v4111 = vadd.f32 0.0, %v4110
      %v4112 = vpop.f32.mrb[0].mxu0
      %4113 = vmatprep.mubr.bf16.mxu0 0
      %4114 = vmatmul.mubr.bf16.gmra.mrb[0].mxu0 %v3705
      %v4115 = vpop.f32.mrb[0].mxu0
      %v4116 = vadd.f32 0.0, %v4115
      %v4117 = vpop.f32.mrb[0].mxu0
      %v4118 = vpop.f32.mrb[0].mxu0
      %v4119 = vadd.f32 0.0, %v4118
      %v4120 = vpop.f32.mrb[0].mxu0
      %4121 = vmatprep.mubr.bf16.mxu0 0
      %4122 = vmatmul.mubr.bf16.gmra.mrb[0].mxu0 %v3708
      %v4123 = vpop.f32.mrb[0].mxu0
      %v4124 = vadd.f32 0.0, %v4123
      %v4125 = vpop.f32.mrb[0].mxu0
      %v4126 = vpop.f32.mrb[0].mxu0
      %v4127 = vadd.f32 0.0, %v4126
      %v4128 = vpop.f32.mrb[0].mxu0
      %4129 = vmatprep.mubr.bf16.mxu0 0
      %4130 = vmatmul.mubr.bf16.gmra.mrb[0].mxu0 %v3711
      %v4131 = vpop.f32.mrb[0].mxu0
      %v4132 = vadd.f32 0.0, %v4131
      %v4133 = vpop.f32.mrb[0].mxu0
      %v4134 = vpop.f32.mrb[0].mxu0
      %v4135 = vadd.f32 0.0, %v4134
      %v4136 = vpop.f32.mrb[0].mxu0
      %4137 = vmatprep.mubr.bf16.mxu0 0
      %4138 = vmatmul.mubr.bf16.gmra.mrb[0].mxu0 %v3714
      %v4139 = vpop.f32.mrb[0].mxu0
      %v4140 = vadd.f32 0.0, %v4139
      %v4141 = vpop.f32.mrb[0].mxu0
      %v4142 = vpop.f32.mrb[0].mxu0
      %v4143 = vadd.f32 0.0, %v4142
      %v4144 = vpop.f32.mrb[0].mxu0
      %4145 = vmatprep.mubr.bf16.mxu0 0
      %4146 = vmatmul.mubr.bf16.gmra.mrb[0].mxu0 %v3717
      %v4147 = vpop.f32.mrb[0].mxu0
      %v4148 = vadd.f32 0.0, %v4147
      %v4149 = vpop.f32.mrb[0].mxu0
      %v4150 = vpop.f32.mrb[0].mxu0
      %v4151 = vadd.f32 0.0, %v4150
      %v4152 = vpop.f32.mrb[0].mxu0
      %4153 = vmatprep.mubr.bf16.mxu0 0
      %4154 = vmatmul.mubr.bf16.gmra.mrb[0].mxu0 %v3720
      %v4155 = vpop.f32.mrb[0].mxu0
      %v4156 = vadd.f32 0.0, %v4155
      %v4157 = vpop.f32.mrb[0].mxu0
      %v4158 = vpop.f32.mrb[0].mxu0
      %v4159 = vadd.f32 0.0, %v4158
      %v4160 = vpop.f32.mrb[0].mxu0
      %4161 = vmatprep.mubr.bf16.mxu0 0
      %4162 = vmatmul.mubr.bf16.gmra.mrb[0].mxu0 %v3723
      %v4163 = vpop.f32.mrb[0].mxu0
      %v4164 = vadd.f32 0.0, %v4163
      %v4165 = vpop.f32.mrb[0].mxu0
      %v4166 = vpop.f32.mrb[0].mxu0
      %v4167 = vadd.f32 0.0, %v4166
      %v4168 = vpop.f32.mrb[0].mxu0
      %4169 = vmatprep.mubr.bf16.mxu0 0
      %4170 = vmatmul.mubr.bf16.gmra.mrb[0].mxu0 %v3726
      %v4171 = vpop.f32.mrb[0].mxu0
      %v4172 = vadd.f32 0.0, %v4171
      %v4173 = vpop.f32.mrb[0].mxu0
      %v4174 = vpop.f32.mrb[0].mxu0
      %v4175 = vadd.f32 0.0, %v4174
      %v4176 = vpop.f32.mrb[0].mxu0
      %4177 = vmatprep.mubr.bf16.mxu0 0
      %4178 = vmatmul.mubr.bf16.gmra.mrb[0].mxu0 %v3729
      %v4179 = vpop.f32.mrb[0].mxu0
      %v4180 = vadd.f32 0.0, %v4179
      %v4181 = vpop.f32.mrb[0].mxu0
      %v4182 = vpop.f32.mrb[0].mxu0
      %v4183 = vadd.f32 0.0, %v4182
      %v4184 = vpop.f32.mrb[0].mxu0
      %4185 = vmatprep.mubr.bf16.mxu0 0
      %4186 = vmatmul.mubr.bf16.gmra.mrb[0].mxu0 %v3732
      %v4187 = vpop.f32.mrb[0].mxu0
      %v4188 = vadd.f32 0.0, %v4187
      %v4189 = vpop.f32.mrb[0].mxu0
      %v4190 = vpop.f32.mrb[0].mxu0
      %v4191 = vadd.f32 0.0, %v4190
      %v4192 = vpop.f32.mrb[0].mxu0
      %4193 = vmatprep.mubr.bf16.mxu0 0
      %4194 = vmatmul.mubr.bf16.gmra.mrb[0].mxu0 %v3735
      %v4195 = vpop.f32.mrb[0].mxu0
      %v4196 = vadd.f32 0.0, %v4195
      %v4197 = vpop.f32.mrb[0].mxu0
      %v4198 = vpop.f32.mrb[0].mxu0
      %v4199 = vadd.f32 0.0, %v4198
      %v4200 = vpop.f32.mrb[0].mxu0
      %4201 = vmatprep.mubr.bf16.mxu0 0
      %4202 = vmatmul.mubr.bf16.gmra.mrb[0].mxu0 %v3738
      %v4203 = vpop.f32.mrb[0].mxu0
      %v4204 = vadd.f32 0.0, %v4203
      %v4205 = vpop.f32.mrb[0].mxu0
      %v4206 = vpop.f32.mrb[0].mxu0
      %v4207 = vadd.f32 0.0, %v4206
      %v4208 = vpop.f32.mrb[0].mxu0
      %4209 = vmatprep.mubr.bf16.mxu0 0
      %4210 = vmatmul.mubr.bf16.gmra.mrb[0].mxu0 %v3741
      %v4211 = vpop.f32.mrb[0].mxu0
      %v4212 = vadd.f32 0.0, %v4211
      %v4213 = vpop.f32.mrb[0].mxu0
      %v4214 = vpop.f32.mrb[0].mxu0
      %v4215 = vadd.f32 0.0, %v4214
      %v4216 = vpop.f32.mrb[0].mxu0
      %4217 = vmatprep.mubr.bf16.mxu0 0
      %4218 = vmatmul.mubr.bf16.gmra.mrb[0].mxu0 %v3744
      %v4219 = vpop.f32.mrb[0].mxu0
      %v4220 = vadd.f32 0.0, %v4219
      %v4221 = vpop.f32.mrb[0].mxu0
      %v4222 = vpop.f32.mrb[0].mxu0
      %v4223 = vadd.f32 0.0, %v4222
      %v4224 = vpop.f32.mrb[0].mxu0
      %4225 = vmatprep.mubr.bf16.mxu0 0
      %4226 = vmatmul.mubr.bf16.gmra.mrb[0].mxu0 %v3747
      %v4227 = vpop.f32.mrb[0].mxu0
      %v4228 = vadd.f32 0.0, %v4227
      %v4229 = vpop.f32.mrb[0].mxu0
      %v4230 = vpop.f32.mrb[0].mxu0
      %v4231 = vadd.f32 0.0, %v4230
      %v4232 = vpop.f32.mrb[0].mxu0
      %4233 = vmatprep.mubr.bf16.mxu0 0
      %4234 = vmatmul.mubr.bf16.gmra.mrb[0].mxu0 %v3750
      %v4235 = vpop.f32.mrb[0].mxu0
      %v4236 = vadd.f32 0.0, %v4235
      %v4237 = vpop.f32.mrb[0].mxu0
      %v4238 = vpop.f32.mrb[0].mxu0
      %v4239 = vadd.f32 0.0, %v4238
      %v4240 = vpop.f32.mrb[0].mxu0
      %4241 = vmatprep.mubr.bf16.mxu0 0
      %4242 = vmatmul.mubr.bf16.gmra.mrb[0].mxu0 %v3753
      %v4243 = vpop.f32.mrb[0].mxu0
      %v4244 = vadd.f32 0.0, %v4243
      %v4245 = vpop.f32.mrb[0].mxu0
      %v4246 = vpop.f32.mrb[0].mxu0
      %v4247 = vadd.f32 0.0, %v4246
      %v4248 = vpop.f32.mrb[0].mxu0
      %4249 = vmatprep.mubr.bf16.mxu0 0
      %4250 = vmatmul.mubr.bf16.gmra.mrb[0].mxu0 %v3756
      %v4251 = vpop.f32.mrb[0].mxu0
      %v4252 = vadd.f32 0.0, %v4251
      %v4253 = vpop.f32.mrb[0].mxu0
      %v4254 = vpop.f32.mrb[0].mxu0
      %v4255 = vadd.f32 0.0, %v4254
      %v4256 = vpop.f32.mrb[0].mxu0
      %4257 = vmatprep.mubr.bf16.mxu0 0
      %4258 = vmatmul.mubr.bf16.gmra.mrb[0].mxu0 %v3759
      %v4259 = vpop.f32.mrb[0].mxu0
      %v4260 = vadd.f32 0.0, %v4259
      %v4261 = vpop.f32.mrb[0].mxu0
      %v4262 = vpop.f32.mrb[0].mxu0
      %v4263 = vadd.f32 0.0, %v4262
      %v4264 = vpop.f32.mrb[0].mxu0
      %4265 = vmatprep.mubr.bf16.mxu0 0
      %4266 = vmatmul.mubr.bf16.gmra.mrb[0].mxu0 %v3762
      %v4267 = vpop.f32.mrb[0].mxu0
      %v4268 = vadd.f32 0.0, %v4267
      %v4269 = vpop.f32.mrb[0].mxu0
      %v4270 = vpop.f32.mrb[0].mxu0
      %v4271 = vadd.f32 0.0, %v4270
      %v4272 = vpop.f32.mrb[0].mxu0
      %4273 = vmatprep.mubr.bf16.mxu0 0
      %4274 = vmatmul.mubr.bf16.gmra.mrb[0].mxu0 %v3765
      %v4275 = vpop.f32.mrb[0].mxu0
      %v4276 = vadd.f32 0.0, %v4275
      %v4277 = vpop.f32.mrb[0].mxu0
      %v4278 = vpop.f32.mrb[0].mxu0
      %v4279 = vadd.f32 0.0, %v4278
      %v4280 = vpop.f32.mrb[0].mxu0
      %4281 = vmatprep.mubr.bf16.mxu0 0
      %4282 = vmatmul.mubr.bf16.gmra.mrb[0].mxu0 %v3768
      %v4283 = vpop.f32.mrb[0].mxu0
      %v4284 = vadd.f32 0.0, %v4283
      %v4285 = vpop.f32.mrb[0].mxu0
      %v4286 = vpop.f32.mrb[0].mxu0
      %v4287 = vadd.f32 0.0, %v4286
      %v4288 = vpop.f32.mrb[0].mxu0
      %4289 = vmatprep.mubr.bf16.mxu0 0
      %4290 = vmatmul.mubr.bf16.gmra.mrb[0].mxu0 %v3771
      %v4291 = vpop.f32.mrb[0].mxu0
      %v4292 = vadd.f32 0.0, %v4291
      %v4293 = vpop.f32.mrb[0].mxu0
      %v4294 = vpop.f32.mrb[0].mxu0
      %v4295 = vadd.f32 0.0, %v4294
      %v4296 = vpop.f32.mrb[0].mxu0
      %4297 = vmatprep.mubr.bf16.mxu0 0
      %4298 = vmatmul.mubr.bf16.gmra.mrb[0].mxu0 %v3774
      %v4299 = vpop.f32.mrb[0].mxu0
      %v4300 = vadd.f32 0.0, %v4299
      %v4301 = vpop.f32.mrb[0].mxu0
      %v4302 = vpop.f32.mrb[0].mxu0
      %v4303 = vadd.f32 0.0, %v4302
      %v4304 = vpop.f32.mrb[0].mxu0
      %4305 = vmatprep.mubr.bf16.mxu0 0
      %4306 = vmatmul.mubr.bf16.gmra.mrb[0].mxu0 %v3777
      %v4307 = vpop.f32.mrb[0].mxu0
      %v4308 = vadd.f32 0.0, %v4307
      %v4309 = vpop.f32.mrb[0].mxu0
      %v4310 = vpop.f32.mrb[0].mxu0
      %v4311 = vadd.f32 0.0, %v4310
      %v4312 = vpop.f32.mrb[0].mxu0
      %4313 = vmatprep.mubr.bf16.mxu0 0
      %4314 = vmatmul.mubr.bf16.gmra.mrb[0].mxu0 %v3780
      %v4315 = vpop.f32.mrb[0].mxu0
      %v4316 = vadd.f32 0.0, %v4315
      %v4317 = vpop.f32.mrb[0].mxu0
      %v4318 = vpop.f32.mrb[0].mxu0
      %v4319 = vadd.f32 0.0, %v4318
      %v4320 = vpop.f32.mrb[0].mxu0
      %4321 = vmatprep.mubr.bf16.mxu0 0
      %4322 = vmatmul.mubr.bf16.gmra.mrb[0].mxu0 %v3783
      %v4323 = vpop.f32.mrb[0].mxu0
      %v4324 = vadd.f32 0.0, %v4323
      %v4325 = vpop.f32.mrb[0].mxu0
      %v4326 = vpop.f32.mrb[0].mxu0
      %v4327 = vadd.f32 0.0, %v4326
      %v4328 = vpop.f32.mrb[0].mxu0
      %4329 = vdwg.mxu0
      %vm4330 = vcmask 130048
      %4331 = vst.msk [vmem:[%s226] sm:$0xff] %vm4330, %v3820
      %4332 = vst.msk [vmem:[%s226 + $0x8] sm:$0xff] %vm4330, %v3823
      %4333 = vst.msk [vmem:[%s226 + $0x10] sm:$0xff] %vm4330, %v3828
      %4334 = vst.msk [vmem:[%s226 + $0x18] sm:$0xff] %vm4330, %v3831
      %4335 = vst.msk [vmem:[%s226 + $0x20] sm:$0xff] %vm4330, %v3836
      %4336 = vst.msk [vmem:[%s226 + $0x28] sm:$0xff] %vm4330, %v3839
      %4337 = vst.msk [vmem:[%s226 + $0x30] sm:$0xff] %vm4330, %v3844
      %4338 = vst.msk [vmem:[%s226 + $0x38] sm:$0xff] %vm4330, %v3847
      %4339 = vst.msk [vmem:[%s226 + $0x40] sm:$0xff] %vm4330, %v3852
      %4340 = vst.msk [vmem:[%s226 + $0x48] sm:$0xff] %vm4330, %v3855
      %4341 = vst.msk [vmem:[%s226 + $0x50] sm:$0xff] %vm4330, %v3860
      %4342 = vst.msk [vmem:[%s226 + $0x58] sm:$0xff] %vm4330, %v3863
      %4343 = vst.msk [vmem:[%s226 + $0x60] sm:$0xff] %vm4330, %v3868
      %4344 = vst.msk [vmem:[%s226 + $0x68] sm:$0xff] %vm4330, %v3871
      %4345 = vst.msk [vmem:[%s226 + $0x70] sm:$0xff] %vm4330, %v3876
      %4346 = vst.msk [vmem:[%s226 + $0x78] sm:$0xff] %vm4330, %v3879
      %4347 = vst.msk [vmem:[%s226 + $0x80] sm:$0xff] %vm4330, %v3884
      %4348 = vst.msk [vmem:[%s226 + $0x88] sm:$0xff] %vm4330, %v3887
      %4349 = vst.msk [vmem:[%s226 + $0x90] sm:$0xff] %vm4330, %v3892
      %4350 = vst.msk [vmem:[%s226 + $0x98] sm:$0xff] %vm4330, %v3895
      %4351 = vst.msk [vmem:[%s226 + $0xa0] sm:$0xff] %vm4330, %v3900
      %4352 = vst.msk [vmem:[%s226 + $0xa8] sm:$0xff] %vm4330, %v3903
      %4353 = vst.msk [vmem:[%s226 + $0xb0] sm:$0xff] %vm4330, %v3908
      %4354 = vst.msk [vmem:[%s226 + $0xb8] sm:$0xff] %vm4330, %v3911
      %4355 = vst.msk [vmem:[%s226 + $0xc0] sm:$0xff] %vm4330, %v3916
      %4356 = vst.msk [vmem:[%s226 + $0xc8] sm:$0xff] %vm4330, %v3919
      %4357 = vst.msk [vmem:[%s226 + $0xd0] sm:$0xff] %vm4330, %v3924
      %4358 = vst.msk [vmem:[%s226 + $0xd8] sm:$0xff] %vm4330, %v3927
      %4359 = vst.msk [vmem:[%s226 + $0xe0] sm:$0xff] %vm4330, %v3932
      %4360 = vst.msk [vmem:[%s226 + $0xe8] sm:$0xff] %vm4330, %v3935
      %4361 = vst.msk [vmem:[%s226 + $0xf0] sm:$0xff] %vm4330, %v3940
      %4362 = vst.msk [vmem:[%s226 + $0xf8] sm:$0xff] %vm4330, %v3943
      %4363 = vst.msk [vmem:[%s226 + $0x100] sm:$0xff] %vm4330, %v3948
      %4364 = vst.msk [vmem:[%s226 + $0x108] sm:$0xff] %vm4330, %v3951
      %4365 = vst.msk [vmem:[%s226 + $0x110] sm:$0xff] %vm4330, %v3956
      %4366 = vst.msk [vmem:[%s226 + $0x118] sm:$0xff] %vm4330, %v3959
      %4367 = vst.msk [vmem:[%s226 + $0x120] sm:$0xff] %vm4330, %v3964
      %4368 = vst.msk [vmem:[%s226 + $0x128] sm:$0xff] %vm4330, %v3967
      %4369 = vst.msk [vmem:[%s226 + $0x130] sm:$0xff] %vm4330, %v3972
      %4370 = vst.msk [vmem:[%s226 + $0x138] sm:$0xff] %vm4330, %v3975
      %4371 = vst.msk [vmem:[%s226 + $0x140] sm:$0xff] %vm4330, %v3980
      %4372 = vst.msk [vmem:[%s226 + $0x148] sm:$0xff] %vm4330, %v3983
      %4373 = vst.msk [vmem:[%s226 + $0x150] sm:$0xff] %vm4330, %v3988
      %4374 = vst.msk [vmem:[%s226 + $0x158] sm:$0xff] %vm4330, %v3991
      %4375 = vst.msk [vmem:[%s226 + $0x160] sm:$0xff] %vm4330, %v3996
      %4376 = vst.msk [vmem:[%s226 + $0x168] sm:$0xff] %vm4330, %v3999
      %4377 = vst.msk [vmem:[%s226 + $0x170] sm:$0xff] %vm4330, %v4004
      %4378 = vst.msk [vmem:[%s226 + $0x178] sm:$0xff] %vm4330, %v4007
      %4379 = vst.msk [vmem:[%s226 + $0x180] sm:$0xff] %vm4330, %v4012
      %4380 = vst.msk [vmem:[%s226 + $0x188] sm:$0xff] %vm4330, %v4015
      %4381 = vst.msk [vmem:[%s226 + $0x190] sm:$0xff] %vm4330, %v4020
      %4382 = vst.msk [vmem:[%s226 + $0x198] sm:$0xff] %vm4330, %v4023
      %4383 = vst.msk [vmem:[%s226 + $0x1a0] sm:$0xff] %vm4330, %v4028
      %4384 = vst.msk [vmem:[%s226 + $0x1a8] sm:$0xff] %vm4330, %v4031
      %4385 = vst.msk [vmem:[%s226 + $0x1b0] sm:$0xff] %vm4330, %v4036
      %4386 = vst.msk [vmem:[%s226 + $0x1b8] sm:$0xff] %vm4330, %v4039
      %4387 = vst.msk [vmem:[%s226 + $0x1c0] sm:$0xff] %vm4330, %v4044
      %4388 = vst.msk [vmem:[%s226 + $0x1c8] sm:$0xff] %vm4330, %v4047
      %4389 = vst.msk [vmem:[%s226 + $0x1d0] sm:$0xff] %vm4330, %v4052
      %4390 = vst.msk [vmem:[%s226 + $0x1d8] sm:$0xff] %vm4330, %v4055
      %4391 = vst.msk [vmem:[%s226 + $0x1e0] sm:$0xff] %vm4330, %v4060
      %4392 = vst.msk [vmem:[%s226 + $0x1e8] sm:$0xff] %vm4330, %v4063
      %4393 = vst.msk [vmem:[%s226 + $0x1f0] sm:$0xff] %vm4330, %v4068
      %4394 = vst.msk [vmem:[%s226 + $0x1f8] sm:$0xff] %vm4330, %v4071
      %4395 = vst.msk [vmem:[%s226 + $0x200] sm:$0xff] %vm4330, %v4076
      %4396 = vst.msk [vmem:[%s226 + $0x208] sm:$0xff] %vm4330, %v4079
      %4397 = vst.msk [vmem:[%s226 + $0x210] sm:$0xff] %vm4330, %v4084
      %4398 = vst.msk [vmem:[%s226 + $0x218] sm:$0xff] %vm4330, %v4087
      %4399 = vst.msk [vmem:[%s226 + $0x220] sm:$0xff] %vm4330, %v4092
      %4400 = vst.msk [vmem:[%s226 + $0x228] sm:$0xff] %vm4330, %v4095
      %4401 = vst.msk [vmem:[%s226 + $0x230] sm:$0xff] %vm4330, %v4100
      %4402 = vst.msk [vmem:[%s226 + $0x238] sm:$0xff] %vm4330, %v4103
      %4403 = vst.msk [vmem:[%s226 + $0x240] sm:$0xff] %vm4330, %v4108
      %4404 = vst.msk [vmem:[%s226 + $0x248] sm:$0xff] %vm4330, %v4111
      %4405 = vst.msk [vmem:[%s226 + $0x250] sm:$0xff] %vm4330, %v4116
      %4406 = vst.msk [vmem:[%s226 + $0x258] sm:$0xff] %vm4330, %v4119
      %4407 = vst.msk [vmem:[%s226 + $0x260] sm:$0xff] %vm4330, %v4124
      %4408 = vst.msk [vmem:[%s226 + $0x268] sm:$0xff] %vm4330, %v4127
      %4409 = vst.msk [vmem:[%s226 + $0x270] sm:$0xff] %vm4330, %v4132
      %4410 = vst.msk [vmem:[%s226 + $0x278] sm:$0xff] %vm4330, %v4135
      %4411 = vst.msk [vmem:[%s226 + $0x280] sm:$0xff] %vm4330, %v4140
      %4412 = vst.msk [vmem:[%s226 + $0x288] sm:$0xff] %vm4330, %v4143
      %4413 = vst.msk [vmem:[%s226 + $0x290] sm:$0xff] %vm4330, %v4148
      %4414 = vst.msk [vmem:[%s226 + $0x298] sm:$0xff] %vm4330, %v4151
      %4415 = vst.msk [vmem:[%s226 + $0x2a0] sm:$0xff] %vm4330, %v4156
      %4416 = vst.msk [vmem:[%s226 + $0x2a8] sm:$0xff] %vm4330, %v4159
      %4417 = vst.msk [vmem:[%s226 + $0x2b0] sm:$0xff] %vm4330, %v4164
      %4418 = vst.msk [vmem:[%s226 + $0x2b8] sm:$0xff] %vm4330, %v4167
      %4419 = vst.msk [vmem:[%s226 + $0x2c0] sm:$0xff] %vm4330, %v4172
      %4420 = vst.msk [vmem:[%s226 + $0x2c8] sm:$0xff] %vm4330, %v4175
      %4421 = vst.msk [vmem:[%s226 + $0x2d0] sm:$0xff] %vm4330, %v4180
      %4422 = vst.msk [vmem:[%s226 + $0x2d8] sm:$0xff] %vm4330, %v4183
      %4423 = vst.msk [vmem:[%s226 + $0x2e0] sm:$0xff] %vm4330, %v4188
      %4424 = vst.msk [vmem:[%s226 + $0x2e8] sm:$0xff] %vm4330, %v4191
      %4425 = vst.msk [vmem:[%s226 + $0x2f0] sm:$0xff] %vm4330, %v4196
      %4426 = vst.msk [vmem:[%s226 + $0x2f8] sm:$0xff] %vm4330, %v4199
      %4427 = vst.msk [vmem:[%s226 + $0x300] sm:$0xff] %vm4330, %v4204
      %4428 = vst.msk [vmem:[%s226 + $0x308] sm:$0xff] %vm4330, %v4207
      %4429 = vst.msk [vmem:[%s226 + $0x310] sm:$0xff] %vm4330, %v4212
      %4430 = vst.msk [vmem:[%s226 + $0x318] sm:$0xff] %vm4330, %v4215
      %4431 = vst.msk [vmem:[%s226 + $0x320] sm:$0xff] %vm4330, %v4220
      %4432 = vst.msk [vmem:[%s226 + $0x328] sm:$0xff] %vm4330, %v4223
      %4433 = vst.msk [vmem:[%s226 + $0x330] sm:$0xff] %vm4330, %v4228
      %4434 = vst.msk [vmem:[%s226 + $0x338] sm:$0xff] %vm4330, %v4231
      %4435 = vst.msk [vmem:[%s226 + $0x340] sm:$0xff] %vm4330, %v4236
      %4436 = vst.msk [vmem:[%s226 + $0x348] sm:$0xff] %vm4330, %v4239
      %4437 = vst.msk [vmem:[%s226 + $0x350] sm:$0xff] %vm4330, %v4244
      %4438 = vst.msk [vmem:[%s226 + $0x358] sm:$0xff] %vm4330, %v4247
      %4439 = vst.msk [vmem:[%s226 + $0x360] sm:$0xff] %vm4330, %v4252
      %4440 = vst.msk [vmem:[%s226 + $0x368] sm:$0xff] %vm4330, %v4255
      %4441 = vst.msk [vmem:[%s226 + $0x370] sm:$0xff] %vm4330, %v4260
      %4442 = vst.msk [vmem:[%s226 + $0x378] sm:$0xff] %vm4330, %v4263
      %4443 = vst.msk [vmem:[%s226 + $0x380] sm:$0xff] %vm4330, %v4268
      %4444 = vst.msk [vmem:[%s226 + $0x388] sm:$0xff] %vm4330, %v4271
      %4445 = vst.msk [vmem:[%s226 + $0x390] sm:$0xff] %vm4330, %v4276
      %4446 = vst.msk [vmem:[%s226 + $0x398] sm:$0xff] %vm4330, %v4279
      %4447 = vst.msk [vmem:[%s226 + $0x3a0] sm:$0xff] %vm4330, %v4284
      %4448 = vst.msk [vmem:[%s226 + $0x3a8] sm:$0xff] %vm4330, %v4287
      %4449 = vst.msk [vmem:[%s226 + $0x3b0] sm:$0xff] %vm4330, %v4292
      %4450 = vst.msk [vmem:[%s226 + $0x3b8] sm:$0xff] %vm4330, %v4295
      %4451 = vst.msk [vmem:[%s226 + $0x3c0] sm:$0xff] %vm4330, %v4300
      %4452 = vst.msk [vmem:[%s226 + $0x3c8] sm:$0xff] %vm4330, %v4303
      %4453 = vst.msk [vmem:[%s226 + $0x3d0] sm:$0xff] %vm4330, %v4308
      %4454 = vst.msk [vmem:[%s226 + $0x3d8] sm:$0xff] %vm4330, %v4311
      %4455 = vst.msk [vmem:[%s226 + $0x3e0] sm:$0xff] %vm4330, %v4316
      %4456 = vst.msk [vmem:[%s226 + $0x3e8] sm:$0xff] %vm4330, %v4319
      %4457 = vst.msk [vmem:[%s226 + $0x3f0] sm:$0xff] %vm4330, %v4324
      %4458 = vst.msk [vmem:[%s226 + $0x3f8] sm:$0xff] %vm4330, %v4327
      %s4459 = smul.u32 128, %s16
      %p4460 = scmp.lt.s32.totalorder %s4459, 511
      %s4461 = scalar_select %p4460, %s4459, 511
      %s4462 = smul.addr %s4461, 8
      %s4463 = scalar_lea.vmem %s5, %s4462
      // Predicated region
      $region41: #{_lambda_.1} parent=39 // pred_check
        %p4464 = pneg %p144
      $region42: #{_lambda_.1} parent=39 // pred_check_branch
        %4466 = sbr.rel (%p4464) target = $region44
      $region43: #{_lambda_.1} parent=39 // pred_region
        %s4467 = smul.u32 128, %s16
      $region44: #{_lambda_.1} parent=39 // pred_fallthru
        _
    $region40: #{_lambda_.1} parent=5 // pred_fallthru
      _
    %p4468 = scmp.le.s32.totalorder 2, %s11
    // Predicated region
    $region45: #{_lambda_.1} parent=5 // pred_check
      %p4469 = pneg %p4468
    $region46: #{_lambda_.1} parent=5 // pred_check_branch
      %4471 = sbr.rel (%p4469) target = $region48
    $region47: #{_lambda_.1} parent=5 // pred_region
      %s4472 = ssub.s32 %s11, 2
      // Predicated region
      $region49: #{_lambda_.1} parent=47 // pred_check
        %p4473 = pneg %p150
      $region50: #{_lambda_.1} parent=47 // pred_check_branch
        %4475 = sbr.rel (%p4473) target = $region52
      $region51: #{_lambda_.1} parent=47 // pred_region
        %s4476 = smul.u32 128, %s17
        %p4477 = scmp.lt.s32.totalorder %s4476, 511
        %s4478 = scalar_select %p4477, %s4476, 511
        %s4479 = smul.addr %s4478, 8
        %s4480 = scalar_lea.vmem %s5, %s4479
      $region52: #{_lambda_.1} parent=47 // pred_fallthru
        _
    $region48: #{_lambda_.1} parent=5 // pred_fallthru
      _
  $region6: #{_lambda_.1} parent=0 // loop_footer
    %s15 = sadd.s32 1, %s11
  $region7: #{_lambda_.1} parent=0 // loop_footer_branch
    %10 = sbr.rel target = $region3
  $region8: #{_lambda_.1} parent=0 // loop_exit
    _

</llo_original>
